<compile_context>
chip_gen: v7x
topology: tpu7x:2x2x1
jax: 0.10.0
libtpu: 0.0.40
codegen_flags: <defaults>
</compile_context>

<pallas_src>
import functools

import jax
import jax.numpy as jnp
from jax.experimental import pallas as pl
from jax.experimental.pallas import tpu as pltpu

_LANE = 128      # TPU lane width  (head output padded to a dense 128-lane store)
_SUBLANE = 8     # TPU sublane group (batch padded so each time step is one aligned group)


# ----------------------------------------------------------------------------
# Fused Pallas kernel: all GRU layers (both directions, interleaved) + out_proj + fc
# ----------------------------------------------------------------------------
def _birnn_kernel(*refs, n_layers, hidden, seq_len, b_pad, full_unroll, loop_unroll):
    H, T, B = hidden, seq_len, b_pad
    H2 = 2 * H

    # ---- unpack refs (inputs..., output, scratch...) -------------------------
    it = iter(refs)
    x_ref = next(it)                                   # (T*B, 3)   bf16
    layers = []
    for _ in range(n_layers):
        dirs = []
        for _ in range(2):                             # (forward, reverse)
            wx = next(it)                              # (d_in, 3H) bf16, columns [r|z|n]
            bx = next(it)                              # (1, 3H)    f32  (b_i* + b_h{r,z}; n: b_in)
            wh = next(it)                              # (H, 3H)    bf16
            bhn = next(it)                             # (1, H)     f32
            dirs.append((wx, bx, wh, bhn))
        layers.append(dirs)
    w1_ref = next(it)                                  # (2H, H)   bf16
    b1_ref = next(it)                                  # (1, H)    f32
    w2_ref = next(it)                                  # (H, 128)  bf16 (zero-padded)
    b2_ref = next(it)                                  # (1, 128)  f32  (zero-padded)
    o_ref = next(it)                                   # (T*B, 128) f32
    gi_f, gi_r, hbuf = next(it), next(it), next(it)    # (T*B,3H), (T*B,3H), (T*B,2H) f32
    gi_refs = (gi_f, gi_r)

    for l in range(n_layers):
        # ---- hoisted, fused input projection: ONE (T*B, K) @ (K, 3H) dot per direction.
        # For l >= 1 the packed fwd|rev layer output feeds a single (T*B, 2H) dot.
        # TODO(synk): layer 0's K=3 dot underfills the MXU — could be a 3-term VPU FMA.
        for d in range(2):
            wx, bx, _, _ = layers[l][d]
            if l == 0:
                src = x_ref[...]                               # (T*B, 3)  bf16
            else:
                src = hbuf[...].astype(jnp.bfloat16)           # read at its single use
            gi_refs[d][...] = (
                jnp.dot(src, wx[...], preferred_element_type=jnp.float32) + bx[...])

        # ---- recurrent weights hoisted out of the serial loop (live across it)
        wh_f = layers[l][0][2][...]
        wh_r = layers[l][1][2][...]
        bhn_f = jnp.broadcast_to(layers[l][0][3][...], (B, H))
        bhn_r = jnp.broadcast_to(layers[l][1][3][...], (B, H))

        def cell(h, gi, wh, bhn):
            # ONE fused recurrent matmul; gates split with static lane slices.
            gh = jnp.dot(h.astype(jnp.bfloat16), wh, preferred_element_type=jnp.float32)
            rz = jax.nn.sigmoid(gi[:, :H2] + gh[:, :H2])
            r, z = rz[:, :H], rz[:, H:]
            n = jnp.tanh(gi[:, H2:] + r * (gh[:, H2:] + bhn))
            return (1.0 - z) * n + z * h

        def step(i, carry, *, _whf=wh_f, _whr=wh_r, _bhf=bhn_f, _bhr=bhn_r):
            # Interleaved fwd / rev recurrences: two independent MXU+EUP chains per iter.
            h_f, h_r = carry
            row_f = i * B
            row_r = (T - 1 - i) * B
            if not isinstance(row_f, int):
                row_f = pl.multiple_of(row_f, B)       # sublane-aligned dynamic slices
                row_r = pl.multiple_of(row_r, B)
            hf_new = cell(h_f, gi_f[pl.ds(row_f, B), :], _whf, _bhf)
            hr_new = cell(h_r, gi_r[pl.ds(row_r, B), :], _whr, _bhr)
            hbuf[pl.ds(row_f, B), pl.ds(0, H)] = hf_new    # packed fwd|rev layer output
            hbuf[pl.ds(row_r, B), pl.ds(H, H)] = hr_new
            return hf_new, hr_new

        h0 = (jnp.zeros((B, H), jnp.float32), jnp.zeros((B, H), jnp.float32))
        if full_unroll:
            carry = h0
            for i in range(T):                         # static indices, LLO-visible
                carry = step(i, carry)
        else:
            _ = jax.lax.fori_loop(0, T, step, h0, unroll=loop_unroll)

    # ---- fused head: out_proj (2H -> H) + fc (H -> 3, padded to 128 lanes) -----
    y = hbuf[...].astype(jnp.bfloat16)                                   # (T*B, 2H)
    h1 = jnp.dot(y, w1_ref[...], preferred_element_type=jnp.float32) + b1_ref[...]
    o_ref[...] = (jnp.dot(h1.astype(jnp.bfloat16), w2_ref[...],
                          preferred_element_type=jnp.float32) + b2_ref[...])
    # TODO(synk): for very large T*B, emit a bf16 output slab to halve HBM writeback,
    # tile over T with pltpu.emit_pipeline (v7x: 64 MiB VMEM), and split the two
    # directions across v7x's 2 TensorCores (core_map / CORE_PARALLEL).


# ----------------------------------------------------------------------------
# Wrapper: weight prep + pallas_call
# ----------------------------------------------------------------------------
def _prep_gru_dir(w_ih, w_hh, b_ih, b_hh, hidden):
    """PyTorch GRU weights -> gate-major-column (K, 3H) matrices, bf16 for the MXU."""
    H = hidden
    w_ih = jnp.asarray(w_ih, jnp.float32)              # (3H, d_in), rows [r|z|n]
    w_hh = jnp.asarray(w_hh, jnp.float32)              # (3H, H)
    b_ih = jnp.asarray(b_ih, jnp.float32)
    b_hh = jnp.asarray(b_hh, jnp.float32)
    wx = w_ih.T.astype(jnp.bfloat16)                   # (d_in, 3H), columns [r|z|n]
    wh = w_hh.T.astype(jnp.bfloat16)                   # (H, 3H)
    # r/z: fold the recurrent bias into the hoisted input-side bias; n keeps b_hn separate.
    bx = (b_ih + jnp.concatenate([b_hh[:2 * H], jnp.zeros((H,), jnp.float32)]))[None, :]
    bhn = b_hh[2 * H:][None, :]
    return [wx, bx, wh, bhn]


def birnn_denoiser_forward(x, params, *, hidden):
    """x: (B, T, 3) batch-first (PyTorch convention). Returns (B, T, 3) float32."""
    B, T, d_in = x.shape
    H = hidden
    n_layers = len(params["gru"])
    B_pad = ((B + _SUBLANE - 1) // _SUBLANE) * _SUBLANE
    R = T * B_pad

    x_tm = jnp.transpose(x.astype(jnp.float32), (1, 0, 2))               # (T, B, 3)
    x_p = jnp.zeros((T, B_pad, d_in), jnp.float32).at[:, :B, :].set(x_tm)
    args = [x_p.reshape(R, d_in).astype(jnp.bfloat16)]

    for layer_params in params["gru"]:
        for (w_ih, w_hh, b_ih, b_hh) in layer_params:                    # (fwd, rev)
            args += _prep_gru_dir(w_ih, w_hh, b_ih, b_hh, H)

    w1, b1 = params["out_proj"]                                          # (H, 2H), (H,)
    w2, b2 = params["fc"]                                                # (3, H), (3,)
    w2p = jnp.zeros((H, _LANE), jnp.float32).at[:, :3].set(jnp.asarray(w2, jnp.float32).T)
    b2p = jnp.zeros((1, _LANE), jnp.float32).at[:, :3].set(jnp.asarray(b2, jnp.float32)[None, :])
    args += [jnp.asarray(w1, jnp.float32).T.astype(jnp.bfloat16),        # (2H, H)
             jnp.asarray(b1, jnp.float32)[None, :],
             w2p.astype(jnp.bfloat16), b2p]

    kernel = functools.partial(
        _birnn_kernel, n_layers=n_layers, hidden=H, seq_len=T, b_pad=B_pad,
        full_unroll=(T <= 16), loop_unroll=4)

    # VMEM footprint (lane tiles pad to 128 wide) + headroom; capped below physical.
    # TODO(synk): beyond ~64 MiB (v7x) tile over T with pltpu.emit_pipeline instead.
    lanes = lambda n: -(-n // _LANE) * _LANE
    scratch_bytes = 4 * R * (2 * lanes(3 * H) + lanes(2 * H))
    io_bytes = 4 * R * _LANE + 2 * R * lanes(d_in)
    vmem_limit = int(min(max(2 * (scratch_bytes + io_bytes) + (8 << 20), 32 << 20), 96 << 20))

    out2d = pl.pallas_call(
        kernel,
        out_shape=jax.ShapeDtypeStruct((R, _LANE), jnp.float32),
        in_specs=[pl.BlockSpec(memory_space=pltpu.MemorySpace.VMEM)] * len(args),
        out_specs=pl.BlockSpec(memory_space=pltpu.MemorySpace.VMEM),
        scratch_shapes=[pltpu.VMEM((R, 3 * H), jnp.float32),   # gi fwd (gate-packed)
                        pltpu.VMEM((R, 3 * H), jnp.float32),   # gi rev (gate-packed)
                        pltpu.VMEM((R, 2 * H), jnp.float32)],  # packed fwd|rev layer output
        compiler_params=pltpu.CompilerParams(vmem_limit_bytes=vmem_limit),
    )(*args)

    out = out2d.reshape(T, B_pad, _LANE)[:, :B, :3]                      # (T, B, 3)
    return jnp.transpose(out, (1, 0, 2))


# ----------------------------------------------------------------------------
# Deterministic parameter initialization (shapes follow nn.GRU / nn.Linear)
# ----------------------------------------------------------------------------
def init_params(key, n_layers, hidden, input_size=3):
    params = {"gru": [], "out_proj": None, "fc": None}
    k = 1.0 / jnp.sqrt(jnp.float32(hidden))

    def u(key, shape):
        return jax.random.uniform(key, shape, jnp.float32, -k, k)

    for layer in range(n_layers):
        d_in = input_size if layer == 0 else 2 * hidden
        dirs = []
        for _ in range(2):  # forward, reverse
            key, k1, k2, k3, k4 = jax.random.split(key, 5)
            dirs.append((u(k1, (3 * hidden, d_in)),    # weight_ih
                         u(k2, (3 * hidden, hidden)),  # weight_hh
                         u(k3, (3 * hidden,)),         # bias_ih
                         u(k4, (3 * hidden,))))        # bias_hh
        params["gru"].append(tuple(dirs))

    key, k1, k2, k3, k4 = jax.random.split(key, 5)
    params["out_proj"] = (u(k1, (hidden, 2 * hidden)), u(k2, (hidden,)))
    params["fc"] = (u(k3, (3, hidden)), u(k4, (3,)))
    return params


# ----------------------------------------------------------------------------
# Pure-JAX f32 reference (explicit HIGHEST precision — no global config mutation)
# ----------------------------------------------------------------------------
_HI = jax.lax.Precision.HIGHEST


def _ref_gru_layer(x_tm, w_ih, w_hh, b_ih, b_hh, hidden, reverse):
    T, B, _ = x_tm.shape
    xs = x_tm[::-1] if reverse else x_tm
    H = hidden

    def step(h, x_t):
        gi = jnp.dot(x_t, w_ih.T, precision=_HI) + b_ih
        gh = jnp.dot(h, w_hh.T, precision=_HI) + b_hh
        r = jax.nn.sigmoid(gi[:, :H] + gh[:, :H])
        z = jax.nn.sigmoid(gi[:, H:2 * H] + gh[:, H:2 * H])
        n = jnp.tanh(gi[:, 2 * H:] + r * gh[:, 2 * H:])
        h_new = (1.0 - z) * n + z * h
        return h_new, h_new

    _, hs = jax.lax.scan(step, jnp.zeros((B, H), jnp.float32), xs)
    return hs[::-1] if reverse else hs


def ref_forward(x, params, *, hidden):
    B, T, _ = x.shape
    y = jnp.transpose(x.astype(jnp.float32), (1, 0, 2))
    for layer_params in params["gru"]:
        outs = [
            _ref_gru_layer(y, w_ih, w_hh, b_ih, b_hh, hidden, reverse=(d == 1))
            for d, (w_ih, w_hh, b_ih, b_hh) in enumerate(layer_params)
        ]
        y = jnp.concatenate(outs, axis=-1)
    w1, b1 = params["out_proj"]
    w2, b2 = params["fc"]
    h1 = jnp.dot(y.reshape(T * B, 2 * hidden), w1.T, precision=_HI) + b1
    o = jnp.dot(h1, w2.T, precision=_HI) + b2
    return jnp.transpose(o.reshape(T, B, 3), (1, 0, 2))


# ----------------------------------------------------------------------------
if __name__ == "__main__":
    # Small config consistent with the module (input/output feature dim fixed at 3).
    B, T = 2, 8
    N_LAYERS, HIDDEN = 2, 32

    key = jax.random.PRNGKey(0)
    key, xkey, pkey = jax.random.split(key, 3)
    x = jax.random.normal(xkey, (B, T, 3), jnp.float32)
    params = init_params(pkey, N_LAYERS, HIDDEN)

    fwd = jax.jit(functools.partial(birnn_denoiser_forward, hidden=HIDDEN))
    out = jax.block_until_ready(fwd(x, params))

    ref = jax.block_until_ready(ref_forward(x, params, hidden=HIDDEN))
    assert out.shape == (B, T, 3), out.shape
    err = float(jnp.max(jnp.abs(out - ref)))
    # Bulk matmuls run bf16-in / f32-accumulate per the perf review; compare against the
    # f32 HIGHEST-precision reference with a correspondingly relaxed tolerance.
    assert err < 2e-2, err

    print("KERNEL_OK")
</pallas_src>

<mosaic_0001>
module attributes {stable_mosaic.version = 11 : i64} {
  func.func @_birnn_kernel(%arg0: memref<64x3xbf16, #tpu.memory_space<vmem>>, %arg1: memref<3x96xbf16, #tpu.memory_space<vmem>>, %arg2: memref<1x96xf32, #tpu.memory_space<vmem>>, %arg3: memref<32x96xbf16, #tpu.memory_space<vmem>>, %arg4: memref<1x32xf32, #tpu.memory_space<vmem>>, %arg5: memref<3x96xbf16, #tpu.memory_space<vmem>>, %arg6: memref<1x96xf32, #tpu.memory_space<vmem>>, %arg7: memref<32x96xbf16, #tpu.memory_space<vmem>>, %arg8: memref<1x32xf32, #tpu.memory_space<vmem>>, %arg9: memref<64x96xbf16, #tpu.memory_space<vmem>>, %arg10: memref<1x96xf32, #tpu.memory_space<vmem>>, %arg11: memref<32x96xbf16, #tpu.memory_space<vmem>>, %arg12: memref<1x32xf32, #tpu.memory_space<vmem>>, %arg13: memref<64x96xbf16, #tpu.memory_space<vmem>>, %arg14: memref<1x96xf32, #tpu.memory_space<vmem>>, %arg15: memref<32x96xbf16, #tpu.memory_space<vmem>>, %arg16: memref<1x32xf32, #tpu.memory_space<vmem>>, %arg17: memref<64x32xbf16, #tpu.memory_space<vmem>>, %arg18: memref<1x32xf32, #tpu.memory_space<vmem>>, %arg19: memref<32x128xbf16, #tpu.memory_space<vmem>>, %arg20: memref<1x128xf32, #tpu.memory_space<vmem>>, %arg21: memref<64x128xf32, #tpu.memory_space<vmem>>, %arg22: memref<64x96xf32, #tpu.memory_space<vmem>>, %arg23: memref<64x96xf32, #tpu.memory_space<vmem>>, %arg24: memref<64x64xf32, #tpu.memory_space<vmem>>) attributes {dimension_semantics = [], scalar_prefetch = 0 : i64, scratch_operands = 3 : i64, tpu.core_type = #tpu.core_type<tc>} {
    %c0 = arith.constant 0 : index
    %c0_0 = arith.constant 0 : index
    %0 = vector.load %arg0[%c0, %c0_0] : memref<64x3xbf16, #tpu.memory_space<vmem>>, vector<64x3xbf16>
    %c0_1 = arith.constant 0 : index
    %c0_2 = arith.constant 0 : index
    %1 = vector.load %arg1[%c0_1, %c0_2] : memref<3x96xbf16, #tpu.memory_space<vmem>>, vector<3x96xbf16>
    %cst = arith.constant dense<0.000000e+00> : vector<64x96xf32>
    %2 = tpu.matmul %0, %1, %cst {dimension_numbers = #tpu.dot_dimension_numbers<[1], [0], [0], [1], [0, 0, 1, 1], [], []>} : vector<64x3xbf16>, vector<3x96xbf16>, vector<64x96xf32> -> vector<64x96xf32>
    %c0_3 = arith.constant 0 : index
    %c0_4 = arith.constant 0 : index
    %3 = vector.load %arg2[%c0_3, %c0_4] : memref<1x96xf32, #tpu.memory_space<vmem>>, vector<1x96xf32>
    %4 = vector.broadcast %3 : vector<1x96xf32> to vector<64x96xf32>
    %5 = arith.addf %2, %4 : vector<64x96xf32>
    %c0_5 = arith.constant 0 : index
    %c0_6 = arith.constant 0 : index
    %6 = vector.load %arg22[%c0_5, %c0_6] : memref<64x96xf32, #tpu.memory_space<vmem>>, vector<64x96xf32>
    tpu.vector_store %arg22[%c0_5, %c0_6], %5 {strides = array<i32>} : memref<64x96xf32, #tpu.memory_space<vmem>>, vector<64x96xf32>,
    %c0_7 = arith.constant 0 : index
    %c0_8 = arith.constant 0 : index
    %7 = vector.load %arg0[%c0_7, %c0_8] : memref<64x3xbf16, #tpu.memory_space<vmem>>, vector<64x3xbf16>
    %c0_9 = arith.constant 0 : index
    %c0_10 = arith.constant 0 : index
    %8 = vector.load %arg5[%c0_9, %c0_10] : memref<3x96xbf16, #tpu.memory_space<vmem>>, vector<3x96xbf16>
    %cst_11 = arith.constant dense<0.000000e+00> : vector<64x96xf32>
    %9 = tpu.matmul %7, %8, %cst_11 {dimension_numbers = #tpu.dot_dimension_numbers<[1], [0], [0], [1], [0, 0, 1, 1], [], []>} : vector<64x3xbf16>, vector<3x96xbf16>, vector<64x96xf32> -> vector<64x96xf32>
    %c0_12 = arith.constant 0 : index
    %c0_13 = arith.constant 0 : index
    %10 = vector.load %arg6[%c0_12, %c0_13] : memref<1x96xf32, #tpu.memory_space<vmem>>, vector<1x96xf32>
    %11 = vector.broadcast %10 : vector<1x96xf32> to vector<64x96xf32>
    %12 = arith.addf %9, %11 : vector<64x96xf32>
    %c0_14 = arith.constant 0 : index
    %c0_15 = arith.constant 0 : index
    %13 = vector.load %arg23[%c0_14, %c0_15] : memref<64x96xf32, #tpu.memory_space<vmem>>, vector<64x96xf32>
    tpu.vector_store %arg23[%c0_14, %c0_15], %12 {strides = array<i32>} : memref<64x96xf32, #tpu.memory_space<vmem>>, vector<64x96xf32>,
    %c0_16 = arith.constant 0 : index
    %c0_17 = arith.constant 0 : index
    %14 = vector.load %arg3[%c0_16, %c0_17] : memref<32x96xbf16, #tpu.memory_space<vmem>>, vector<32x96xbf16>
    %c0_18 = arith.constant 0 : index
    %c0_19 = arith.constant 0 : index
    %15 = vector.load %arg7[%c0_18, %c0_19] : memref<32x96xbf16, #tpu.memory_space<vmem>>, vector<32x96xbf16>
    %c0_20 = arith.constant 0 : index
    %c0_21 = arith.constant 0 : index
    %16 = vector.load %arg4[%c0_20, %c0_21] : memref<1x32xf32, #tpu.memory_space<vmem>>, vector<1x32xf32>
    %17 = vector.shape_cast %16 : vector<1x32xf32> to vector<1x32xf32>
    %18 = vector.broadcast %17 : vector<1x32xf32> to vector<8x32xf32>
    %c0_22 = arith.constant 0 : index
    %c0_23 = arith.constant 0 : index
    %19 = vector.load %arg8[%c0_22, %c0_23] : memref<1x32xf32, #tpu.memory_space<vmem>>, vector<1x32xf32>
    %20 = vector.shape_cast %19 : vector<1x32xf32> to vector<1x32xf32>
    %21 = vector.broadcast %20 : vector<1x32xf32> to vector<8x32xf32>
    %cst_24 = arith.constant 0.000000e+00 : f32
    %22 = vector.broadcast %cst_24 : f32 to vector<8x32xf32>
    %cst_25 = arith.constant 0.000000e+00 : f32
    %23 = vector.broadcast %cst_25 : f32 to vector<8x32xf32>
    %c0_26 = arith.constant 0 : index
    %c0_27 = arith.constant 0 : index
    %24 = vector.load %arg22[%c0_26, %c0_27] : memref<64x96xf32, #tpu.memory_space<vmem>>, vector<8x96xf32>
    %25 = arith.truncf %22 : vector<8x32xf32> to vector<8x32xbf16>
    %cst_28 = arith.constant dense<0.000000e+00> : vector<8x96xf32>
    %26 = tpu.matmul %25, %14, %cst_28 {dimension_numbers = #tpu.dot_dimension_numbers<[1], [0], [0], [1], [0, 0, 1, 1], [], []>} : vector<8x32xbf16>, vector<32x96xbf16>, vector<8x96xf32> -> vector<8x96xf32>
    %27 = vector.extract_strided_slice %24 {offsets = [0, 0], sizes = [8, 64], strides = [1, 1]} : vector<8x96xf32> to vector<8x64xf32>
    %28 = vector.extract_strided_slice %26 {offsets = [0, 0], sizes = [8, 64], strides = [1, 1]} : vector<8x96xf32> to vector<8x64xf32>
    %29 = arith.addf %27, %28 : vector<8x64xf32>
    %30 = arith.negf %29 : vector<8x64xf32>
    %31 = math.exp %30 : vector<8x64xf32>
    %cst_29 = arith.constant 1.000000e+00 : f32
    %32 = vector.broadcast %cst_29 : f32 to vector<8x64xf32>
    %33 = arith.addf %32, %31 : vector<8x64xf32>
    %34 = arith.divf %32, %33 : vector<8x64xf32>
    %35 = vector.extract_strided_slice %34 {offsets = [0, 0], sizes = [8, 32], strides = [1, 1]} : vector<8x64xf32> to vector<8x32xf32>
    %36 = vector.extract_strided_slice %34 {offsets = [0, 32], sizes = [8, 32], strides = [1, 1]} : vector<8x64xf32> to vector<8x32xf32>
    %37 = vector.extract_strided_slice %24 {offsets = [0, 64], sizes = [8, 32], strides = [1, 1]} : vector<8x96xf32> to vector<8x32xf32>
    %38 = vector.extract_strided_slice %26 {offsets = [0, 64], sizes = [8, 32], strides = [1, 1]} : vector<8x96xf32> to vector<8x32xf32>
    %39 = arith.addf %38, %18 : vector<8x32xf32>
    %40 = arith.mulf %35, %39 : vector<8x32xf32>
    %41 = arith.addf %37, %40 : vector<8x32xf32>
    %42 = math.tanh %41 : vector<8x32xf32>
    %cst_30 = arith.constant 1.000000e+00 : f32
    %43 = vector.broadcast %cst_30 : f32 to vector<8x32xf32>
    %44 = arith.subf %43, %36 : vector<8x32xf32>
    %45 = arith.mulf %44, %42 : vector<8x32xf32>
    %46 = arith.mulf %36, %22 : vector<8x32xf32>
    %47 = arith.addf %45, %46 : vector<8x32xf32>
    %c56 = arith.constant 56 : index
    %c0_31 = arith.constant 0 : index
    %48 = vector.load %arg23[%c56, %c0_31] : memref<64x96xf32, #tpu.memory_space<vmem>>, vector<8x96xf32>
    %49 = arith.truncf %23 : vector<8x32xf32> to vector<8x32xbf16>
    %cst_32 = arith.constant dense<0.000000e+00> : vector<8x96xf32>
    %50 = tpu.matmul %49, %15, %cst_32 {dimension_numbers = #tpu.dot_dimension_numbers<[1], [0], [0], [1], [0, 0, 1, 1], [], []>} : vector<8x32xbf16>, vector<32x96xbf16>, vector<8x96xf32> -> vector<8x96xf32>
    %51 = vector.extract_strided_slice %48 {offsets = [0, 0], sizes = [8, 64], strides = [1, 1]} : vector<8x96xf32> to vector<8x64xf32>
    %52 = vector.extract_strided_slice %50 {offsets = [0, 0], sizes = [8, 64], strides = [1, 1]} : vector<8x96xf32> to vector<8x64xf32>
    %53 = arith.addf %51, %52 : vector<8x64xf32>
    %54 = arith.negf %53 : vector<8x64xf32>
    %55 = math.exp %54 : vector<8x64xf32>
    %cst_33 = arith.constant 1.000000e+00 : f32
    %56 = vector.broadcast %cst_33 : f32 to vector<8x64xf32>
    %57 = arith.addf %56, %55 : vector<8x64xf32>
    %58 = arith.divf %56, %57 : vector<8x64xf32>
    %59 = vector.extract_strided_slice %58 {offsets = [0, 0], sizes = [8, 32], strides = [1, 1]} : vector<8x64xf32> to vector<8x32xf32>
    %60 = vector.extract_strided_slice %58 {offsets = [0, 32], sizes = [8, 32], strides = [1, 1]} : vector<8x64xf32> to vector<8x32xf32>
    %61 = vector.extract_strided_slice %48 {offsets = [0, 64], sizes = [8, 32], strides = [1, 1]} : vector<8x96xf32> to vector<8x32xf32>
    %62 = vector.extract_strided_slice %50 {offsets = [0, 64], sizes = [8, 32], strides = [1, 1]} : vector<8x96xf32> to vector<8x32xf32>
    %63 = arith.addf %62, %21 : vector<8x32xf32>
    %64 = arith.mulf %59, %63 : vector<8x32xf32>
    %65 = arith.addf %61, %64 : vector<8x32xf32>
    %66 = math.tanh %65 : vector<8x32xf32>
    %cst_34 = arith.constant 1.000000e+00 : f32
    %67 = vector.broadcast %cst_34 : f32 to vector<8x32xf32>
    %68 = arith.subf %67, %60 : vector<8x32xf32>
    %69 = arith.mulf %68, %66 : vector<8x32xf32>
    %70 = arith.mulf %60, %23 : vector<8x32xf32>
    %71 = arith.addf %69, %70 : vector<8x32xf32>
    %c0_35 = arith.constant 0 : index
    %c0_36 = arith.constant 0 : index
    %72 = vector.load %arg24[%c0_35, %c0_36] : memref<64x64xf32, #tpu.memory_space<vmem>>, vector<8x32xf32>
    tpu.vector_store %arg24[%c0_35, %c0_36], %47 {strides = array<i32>} : memref<64x64xf32, #tpu.memory_space<vmem>>, vector<8x32xf32>,
    %c56_37 = arith.constant 56 : index
    %c32 = arith.constant 32 : index
    %73 = vector.load %arg24[%c56_37, %c32] : memref<64x64xf32, #tpu.memory_space<vmem>>, vector<8x32xf32>
    tpu.vector_store %arg24[%c56_37, %c32], %71 {strides = array<i32>} : memref<64x64xf32, #tpu.memory_space<vmem>>, vector<8x32xf32>,
    %c8 = arith.constant 8 : index
    %c0_38 = arith.constant 0 : index
    %74 = vector.load %arg22[%c8, %c0_38] : memref<64x96xf32, #tpu.memory_space<vmem>>, vector<8x96xf32>
    %75 = arith.truncf %47 : vector<8x32xf32> to vector<8x32xbf16>
    %cst_39 = arith.constant dense<0.000000e+00> : vector<8x96xf32>
    %76 = tpu.matmul %75, %14, %cst_39 {dimension_numbers = #tpu.dot_dimension_numbers<[1], [0], [0], [1], [0, 0, 1, 1], [], []>} : vector<8x32xbf16>, vector<32x96xbf16>, vector<8x96xf32> -> vector<8x96xf32>
    %77 = vector.extract_strided_slice %74 {offsets = [0, 0], sizes = [8, 64], strides = [1, 1]} : vector<8x96xf32> to vector<8x64xf32>
    %78 = vector.extract_strided_slice %76 {offsets = [0, 0], sizes = [8, 64], strides = [1, 1]} : vector<8x96xf32> to vector<8x64xf32>
    %79 = arith.addf %77, %78 : vector<8x64xf32>
    %80 = arith.negf %79 : vector<8x64xf32>
    %81 = math.exp %80 : vector<8x64xf32>
    %cst_40 = arith.constant 1.000000e+00 : f32
    %82 = vector.broadcast %cst_40 : f32 to vector<8x64xf32>
    %83 = arith.addf %82, %81 : vector<8x64xf32>
    %84 = arith.divf %82, %83 : vector<8x64xf32>
    %85 = vector.extract_strided_slice %84 {offsets = [0, 0], sizes = [8, 32], strides = [1, 1]} : vector<8x64xf32> to vector<8x32xf32>
    %86 = vector.extract_strided_slice %84 {offsets = [0, 32], sizes = [8, 32], strides = [1, 1]} : vector<8x64xf32> to vector<8x32xf32>
    %87 = vector.extract_strided_slice %74 {offsets = [0, 64], sizes = [8, 32], strides = [1, 1]} : vector<8x96xf32> to vector<8x32xf32>
    %88 = vector.extract_strided_slice %76 {offsets = [0, 64], sizes = [8, 32], strides = [1, 1]} : vector<8x96xf32> to vector<8x32xf32>
    %89 = arith.addf %88, %18 : vector<8x32xf32>
    %90 = arith.mulf %85, %89 : vector<8x32xf32>
    %91 = arith.addf %87, %90 : vector<8x32xf32>
    %92 = math.tanh %91 : vector<8x32xf32>
    %cst_41 = arith.constant 1.000000e+00 : f32
    %93 = vector.broadcast %cst_41 : f32 to vector<8x32xf32>
    %94 = arith.subf %93, %86 : vector<8x32xf32>
    %95 = arith.mulf %94, %92 : vector<8x32xf32>
    %96 = arith.mulf %86, %47 : vector<8x32xf32>
    %97 = arith.addf %95, %96 : vector<8x32xf32>
    %c48 = arith.constant 48 : index
    %c0_42 = arith.constant 0 : index
    %98 = vector.load %arg23[%c48, %c0_42] : memref<64x96xf32, #tpu.memory_space<vmem>>, vector<8x96xf32>
    %99 = arith.truncf %71 : vector<8x32xf32> to vector<8x32xbf16>
    %cst_43 = arith.constant dense<0.000000e+00> : vector<8x96xf32>
    %100 = tpu.matmul %99, %15, %cst_43 {dimension_numbers = #tpu.dot_dimension_numbers<[1], [0], [0], [1], [0, 0, 1, 1], [], []>} : vector<8x32xbf16>, vector<32x96xbf16>, vector<8x96xf32> -> vector<8x96xf32>
    %101 = vector.extract_strided_slice %98 {offsets = [0, 0], sizes = [8, 64], strides = [1, 1]} : vector<8x96xf32> to vector<8x64xf32>
    %102 = vector.extract_strided_slice %100 {offsets = [0, 0], sizes = [8, 64], strides = [1, 1]} : vector<8x96xf32> to vector<8x64xf32>
    %103 = arith.addf %101, %102 : vector<8x64xf32>
    %104 = arith.negf %103 : vector<8x64xf32>
    %105 = math.exp %104 : vector<8x64xf32>
    %cst_44 = arith.constant 1.000000e+00 : f32
    %106 = vector.broadcast %cst_44 : f32 to vector<8x64xf32>
    %107 = arith.addf %106, %105 : vector<8x64xf32>
    %108 = arith.divf %106, %107 : vector<8x64xf32>
    %109 = vector.extract_strided_slice %108 {offsets = [0, 0], sizes = [8, 32], strides = [1, 1]} : vector<8x64xf32> to vector<8x32xf32>
    %110 = vector.extract_strided_slice %108 {offsets = [0, 32], sizes = [8, 32], strides = [1, 1]} : vector<8x64xf32> to vector<8x32xf32>
    %111 = vector.extract_strided_slice %98 {offsets = [0, 64], sizes = [8, 32], strides = [1, 1]} : vector<8x96xf32> to vector<8x32xf32>
    %112 = vector.extract_strided_slice %100 {offsets = [0, 64], sizes = [8, 32], strides = [1, 1]} : vector<8x96xf32> to vector<8x32xf32>
    %113 = arith.addf %112, %21 : vector<8x32xf32>
    %114 = arith.mulf %109, %113 : vector<8x32xf32>
    %115 = arith.addf %111, %114 : vector<8x32xf32>
    %116 = math.tanh %115 : vector<8x32xf32>
    %cst_45 = arith.constant 1.000000e+00 : f32
    %117 = vector.broadcast %cst_45 : f32 to vector<8x32xf32>
    %118 = arith.subf %117, %110 : vector<8x32xf32>
    %119 = arith.mulf %118, %116 : vector<8x32xf32>
    %120 = arith.mulf %110, %71 : vector<8x32xf32>
    %121 = arith.addf %119, %120 : vector<8x32xf32>
    %c8_46 = arith.constant 8 : index
    %c0_47 = arith.constant 0 : index
    %122 = vector.load %arg24[%c8_46, %c0_47] : memref<64x64xf32, #tpu.memory_space<vmem>>, vector<8x32xf32>
    tpu.vector_store %arg24[%c8_46, %c0_47], %97 {strides = array<i32>} : memref<64x64xf32, #tpu.memory_space<vmem>>, vector<8x32xf32>,
    %c48_48 = arith.constant 48 : index
    %c32_49 = arith.constant 32 : index
    %123 = vector.load %arg24[%c48_48, %c32_49] : memref<64x64xf32, #tpu.memory_space<vmem>>, vector<8x32xf32>
    tpu.vector_store %arg24[%c48_48, %c32_49], %121 {strides = array<i32>} : memref<64x64xf32, #tpu.memory_space<vmem>>, vector<8x32xf32>,
    %c16 = arith.constant 16 : index
    %c0_50 = arith.constant 0 : index
    %124 = vector.load %arg22[%c16, %c0_50] : memref<64x96xf32, #tpu.memory_space<vmem>>, vector<8x96xf32>
    %125 = arith.truncf %97 : vector<8x32xf32> to vector<8x32xbf16>
    %cst_51 = arith.constant dense<0.000000e+00> : vector<8x96xf32>
    %126 = tpu.matmul %125, %14, %cst_51 {dimension_numbers = #tpu.dot_dimension_numbers<[1], [0], [0], [1], [0, 0, 1, 1], [], []>} : vector<8x32xbf16>, vector<32x96xbf16>, vector<8x96xf32> -> vector<8x96xf32>
    %127 = vector.extract_strided_slice %124 {offsets = [0, 0], sizes = [8, 64], strides = [1, 1]} : vector<8x96xf32> to vector<8x64xf32>
    %128 = vector.extract_strided_slice %126 {offsets = [0, 0], sizes = [8, 64], strides = [1, 1]} : vector<8x96xf32> to vector<8x64xf32>
    %129 = arith.addf %127, %128 : vector<8x64xf32>
    %130 = arith.negf %129 : vector<8x64xf32>
    %131 = math.exp %130 : vector<8x64xf32>
    %cst_52 = arith.constant 1.000000e+00 : f32
    %132 = vector.broadcast %cst_52 : f32 to vector<8x64xf32>
    %133 = arith.addf %132, %131 : vector<8x64xf32>
    %134 = arith.divf %132, %133 : vector<8x64xf32>
    %135 = vector.extract_strided_slice %134 {offsets = [0, 0], sizes = [8, 32], strides = [1, 1]} : vector<8x64xf32> to vector<8x32xf32>
    %136 = vector.extract_strided_slice %134 {offsets = [0, 32], sizes = [8, 32], strides = [1, 1]} : vector<8x64xf32> to vector<8x32xf32>
    %137 = vector.extract_strided_slice %124 {offsets = [0, 64], sizes = [8, 32], strides = [1, 1]} : vector<8x96xf32> to vector<8x32xf32>
    %138 = vector.extract_strided_slice %126 {offsets = [0, 64], sizes = [8, 32], strides = [1, 1]} : vector<8x96xf32> to vector<8x32xf32>
    %139 = arith.addf %138, %18 : vector<8x32xf32>
    %140 = arith.mulf %135, %139 : vector<8x32xf32>
    %141 = arith.addf %137, %140 : vector<8x32xf32>
    %142 = math.tanh %141 : vector<8x32xf32>
    %cst_53 = arith.constant 1.000000e+00 : f32
    %143 = vector.broadcast %cst_53 : f32 to vector<8x32xf32>
    %144 = arith.subf %143, %136 : vector<8x32xf32>
    %145 = arith.mulf %144, %142 : vector<8x32xf32>
    %146 = arith.mulf %136, %97 : vector<8x32xf32>
    %147 = arith.addf %145, %146 : vector<8x32xf32>
    %c40 = arith.constant 40 : index
    %c0_54 = arith.constant 0 : index
    %148 = vector.load %arg23[%c40, %c0_54] : memref<64x96xf32, #tpu.memory_space<vmem>>, vector<8x96xf32>
    %149 = arith.truncf %121 : vector<8x32xf32> to vector<8x32xbf16>
    %cst_55 = arith.constant dense<0.000000e+00> : vector<8x96xf32>
    %150 = tpu.matmul %149, %15, %cst_55 {dimension_numbers = #tpu.dot_dimension_numbers<[1], [0], [0], [1], [0, 0, 1, 1], [], []>} : vector<8x32xbf16>, vector<32x96xbf16>, vector<8x96xf32> -> vector<8x96xf32>
    %151 = vector.extract_strided_slice %148 {offsets = [0, 0], sizes = [8, 64], strides = [1, 1]} : vector<8x96xf32> to vector<8x64xf32>
    %152 = vector.extract_strided_slice %150 {offsets = [0, 0], sizes = [8, 64], strides = [1, 1]} : vector<8x96xf32> to vector<8x64xf32>
    %153 = arith.addf %151, %152 : vector<8x64xf32>
    %154 = arith.negf %153 : vector<8x64xf32>
    %155 = math.exp %154 : vector<8x64xf32>
    %cst_56 = arith.constant 1.000000e+00 : f32
    %156 = vector.broadcast %cst_56 : f32 to vector<8x64xf32>
    %157 = arith.addf %156, %155 : vector<8x64xf32>
    %158 = arith.divf %156, %157 : vector<8x64xf32>
    %159 = vector.extract_strided_slice %158 {offsets = [0, 0], sizes = [8, 32], strides = [1, 1]} : vector<8x64xf32> to vector<8x32xf32>
    %160 = vector.extract_strided_slice %158 {offsets = [0, 32], sizes = [8, 32], strides = [1, 1]} : vector<8x64xf32> to vector<8x32xf32>
    %161 = vector.extract_strided_slice %148 {offsets = [0, 64], sizes = [8, 32], strides = [1, 1]} : vector<8x96xf32> to vector<8x32xf32>
    %162 = vector.extract_strided_slice %150 {offsets = [0, 64], sizes = [8, 32], strides = [1, 1]} : vector<8x96xf32> to vector<8x32xf32>
    %163 = arith.addf %162, %21 : vector<8x32xf32>
    %164 = arith.mulf %159, %163 : vector<8x32xf32>
    %165 = arith.addf %161, %164 : vector<8x32xf32>
    %166 = math.tanh %165 : vector<8x32xf32>
    %cst_57 = arith.constant 1.000000e+00 : f32
    %167 = vector.broadcast %cst_57 : f32 to vector<8x32xf32>
    %168 = arith.subf %167, %160 : vector<8x32xf32>
    %169 = arith.mulf %168, %166 : vector<8x32xf32>
    %170 = arith.mulf %160, %121 : vector<8x32xf32>
    %171 = arith.addf %169, %170 : vector<8x32xf32>
    %c16_58 = arith.constant 16 : index
    %c0_59 = arith.constant 0 : index
    %172 = vector.load %arg24[%c16_58, %c0_59] : memref<64x64xf32, #tpu.memory_space<vmem>>, vector<8x32xf32>
    tpu.vector_store %arg24[%c16_58, %c0_59], %147 {strides = array<i32>} : memref<64x64xf32, #tpu.memory_space<vmem>>, vector<8x32xf32>,
    %c40_60 = arith.constant 40 : index
    %c32_61 = arith.constant 32 : index
    %173 = vector.load %arg24[%c40_60, %c32_61] : memref<64x64xf32, #tpu.memory_space<vmem>>, vector<8x32xf32>
    tpu.vector_store %arg24[%c40_60, %c32_61], %171 {strides = array<i32>} : memref<64x64xf32, #tpu.memory_space<vmem>>, vector<8x32xf32>,
    %c24 = arith.constant 24 : index
    %c0_62 = arith.constant 0 : index
    %174 = vector.load %arg22[%c24, %c0_62] : memref<64x96xf32, #tpu.memory_space<vmem>>, vector<8x96xf32>
    %175 = arith.truncf %147 : vector<8x32xf32> to vector<8x32xbf16>
    %cst_63 = arith.constant dense<0.000000e+00> : vector<8x96xf32>
    %176 = tpu.matmul %175, %14, %cst_63 {dimension_numbers = #tpu.dot_dimension_numbers<[1], [0], [0], [1], [0, 0, 1, 1], [], []>} : vector<8x32xbf16>, vector<32x96xbf16>, vector<8x96xf32> -> vector<8x96xf32>
    %177 = vector.extract_strided_slice %174 {offsets = [0, 0], sizes = [8, 64], strides = [1, 1]} : vector<8x96xf32> to vector<8x64xf32>
    %178 = vector.extract_strided_slice %176 {offsets = [0, 0], sizes = [8, 64], strides = [1, 1]} : vector<8x96xf32> to vector<8x64xf32>
    %179 = arith.addf %177, %178 : vector<8x64xf32>
    %180 = arith.negf %179 : vector<8x64xf32>
    %181 = math.exp %180 : vector<8x64xf32>
    %cst_64 = arith.constant 1.000000e+00 : f32
    %182 = vector.broadcast %cst_64 : f32 to vector<8x64xf32>
    %183 = arith.addf %182, %181 : vector<8x64xf32>
    %184 = arith.divf %182, %183 : vector<8x64xf32>
    %185 = vector.extract_strided_slice %184 {offsets = [0, 0], sizes = [8, 32], strides = [1, 1]} : vector<8x64xf32> to vector<8x32xf32>
    %186 = vector.extract_strided_slice %184 {offsets = [0, 32], sizes = [8, 32], strides = [1, 1]} : vector<8x64xf32> to vector<8x32xf32>
    %187 = vector.extract_strided_slice %174 {offsets = [0, 64], sizes = [8, 32], strides = [1, 1]} : vector<8x96xf32> to vector<8x32xf32>
    %188 = vector.extract_strided_slice %176 {offsets = [0, 64], sizes = [8, 32], strides = [1, 1]} : vector<8x96xf32> to vector<8x32xf32>
    %189 = arith.addf %188, %18 : vector<8x32xf32>
    %190 = arith.mulf %185, %189 : vector<8x32xf32>
    %191 = arith.addf %187, %190 : vector<8x32xf32>
    %192 = math.tanh %191 : vector<8x32xf32>
    %cst_65 = arith.constant 1.000000e+00 : f32
    %193 = vector.broadcast %cst_65 : f32 to vector<8x32xf32>
    %194 = arith.subf %193, %186 : vector<8x32xf32>
    %195 = arith.mulf %194, %192 : vector<8x32xf32>
    %196 = arith.mulf %186, %147 : vector<8x32xf32>
    %197 = arith.addf %195, %196 : vector<8x32xf32>
    %c32_66 = arith.constant 32 : index
    %c0_67 = arith.constant 0 : index
    %198 = vector.load %arg23[%c32_66, %c0_67] : memref<64x96xf32, #tpu.memory_space<vmem>>, vector<8x96xf32>
    %199 = arith.truncf %171 : vector<8x32xf32> to vector<8x32xbf16>
    %cst_68 = arith.constant dense<0.000000e+00> : vector<8x96xf32>
    %200 = tpu.matmul %199, %15, %cst_68 {dimension_numbers = #tpu.dot_dimension_numbers<[1], [0], [0], [1], [0, 0, 1, 1], [], []>} : vector<8x32xbf16>, vector<32x96xbf16>, vector<8x96xf32> -> vector<8x96xf32>
    %201 = vector.extract_strided_slice %198 {offsets = [0, 0], sizes = [8, 64], strides = [1, 1]} : vector<8x96xf32> to vector<8x64xf32>
    %202 = vector.extract_strided_slice %200 {offsets = [0, 0], sizes = [8, 64], strides = [1, 1]} : vector<8x96xf32> to vector<8x64xf32>
    %203 = arith.addf %201, %202 : vector<8x64xf32>
    %204 = arith.negf %203 : vector<8x64xf32>
    %205 = math.exp %204 : vector<8x64xf32>
    %cst_69 = arith.constant 1.000000e+00 : f32
    %206 = vector.broadcast %cst_69 : f32 to vector<8x64xf32>
    %207 = arith.addf %206, %205 : vector<8x64xf32>
    %208 = arith.divf %206, %207 : vector<8x64xf32>
    %209 = vector.extract_strided_slice %208 {offsets = [0, 0], sizes = [8, 32], strides = [1, 1]} : vector<8x64xf32> to vector<8x32xf32>
    %210 = vector.extract_strided_slice %208 {offsets = [0, 32], sizes = [8, 32], strides = [1, 1]} : vector<8x64xf32> to vector<8x32xf32>
    %211 = vector.extract_strided_slice %198 {offsets = [0, 64], sizes = [8, 32], strides = [1, 1]} : vector<8x96xf32> to vector<8x32xf32>
    %212 = vector.extract_strided_slice %200 {offsets = [0, 64], sizes = [8, 32], strides = [1, 1]} : vector<8x96xf32> to vector<8x32xf32>
    %213 = arith.addf %212, %21 : vector<8x32xf32>
    %214 = arith.mulf %209, %213 : vector<8x32xf32>
    %215 = arith.addf %211, %214 : vector<8x32xf32>
    %216 = math.tanh %215 : vector<8x32xf32>
    %cst_70 = arith.constant 1.000000e+00 : f32
    %217 = vector.broadcast %cst_70 : f32 to vector<8x32xf32>
    %218 = arith.subf %217, %210 : vector<8x32xf32>
    %219 = arith.mulf %218, %216 : vector<8x32xf32>
    %220 = arith.mulf %210, %171 : vector<8x32xf32>
    %221 = arith.addf %219, %220 : vector<8x32xf32>
    %c24_71 = arith.constant 24 : index
    %c0_72 = arith.constant 0 : index
    %222 = vector.load %arg24[%c24_71, %c0_72] : memref<64x64xf32, #tpu.memory_space<vmem>>, vector<8x32xf32>
    tpu.vector_store %arg24[%c24_71, %c0_72], %197 {strides = array<i32>} : memref<64x64xf32, #tpu.memory_space<vmem>>, vector<8x32xf32>,
    %c32_73 = arith.constant 32 : index
    %c32_74 = arith.constant 32 : index
    %223 = vector.load %arg24[%c32_73, %c32_74] : memref<64x64xf32, #tpu.memory_space<vmem>>, vector<8x32xf32>
    tpu.vector_store %arg24[%c32_73, %c32_74], %221 {strides = array<i32>} : memref<64x64xf32, #tpu.memory_space<vmem>>, vector<8x32xf32>,
    %c32_75 = arith.constant 32 : index
    %c0_76 = arith.constant 0 : index
    %224 = vector.load %arg22[%c32_75, %c0_76] : memref<64x96xf32, #tpu.memory_space<vmem>>, vector<8x96xf32>
    %225 = arith.truncf %197 : vector<8x32xf32> to vector<8x32xbf16>
    %cst_77 = arith.constant dense<0.000000e+00> : vector<8x96xf32>
    %226 = tpu.matmul %225, %14, %cst_77 {dimension_numbers = #tpu.dot_dimension_numbers<[1], [0], [0], [1], [0, 0, 1, 1], [], []>} : vector<8x32xbf16>, vector<32x96xbf16>, vector<8x96xf32> -> vector<8x96xf32>
    %227 = vector.extract_strided_slice %224 {offsets = [0, 0], sizes = [8, 64], strides = [1, 1]} : vector<8x96xf32> to vector<8x64xf32>
    %228 = vector.extract_strided_slice %226 {offsets = [0, 0], sizes = [8, 64], strides = [1, 1]} : vector<8x96xf32> to vector<8x64xf32>
    %229 = arith.addf %227, %228 : vector<8x64xf32>
    %230 = arith.negf %229 : vector<8x64xf32>
    %231 = math.exp %230 : vector<8x64xf32>
    %cst_78 = arith.constant 1.000000e+00 : f32
    %232 = vector.broadcast %cst_78 : f32 to vector<8x64xf32>
    %233 = arith.addf %232, %231 : vector<8x64xf32>
    %234 = arith.divf %232, %233 : vector<8x64xf32>
    %235 = vector.extract_strided_slice %234 {offsets = [0, 0], sizes = [8, 32], strides = [1, 1]} : vector<8x64xf32> to vector<8x32xf32>
    %236 = vector.extract_strided_slice %234 {offsets = [0, 32], sizes = [8, 32], strides = [1, 1]} : vector<8x64xf32> to vector<8x32xf32>
    %237 = vector.extract_strided_slice %224 {offsets = [0, 64], sizes = [8, 32], strides = [1, 1]} : vector<8x96xf32> to vector<8x32xf32>
    %238 = vector.extract_strided_slice %226 {offsets = [0, 64], sizes = [8, 32], strides = [1, 1]} : vector<8x96xf32> to vector<8x32xf32>
    %239 = arith.addf %238, %18 : vector<8x32xf32>
    %240 = arith.mulf %235, %239 : vector<8x32xf32>
    %241 = arith.addf %237, %240 : vector<8x32xf32>
    %242 = math.tanh %241 : vector<8x32xf32>
    %cst_79 = arith.constant 1.000000e+00 : f32
    %243 = vector.broadcast %cst_79 : f32 to vector<8x32xf32>
    %244 = arith.subf %243, %236 : vector<8x32xf32>
    %245 = arith.mulf %244, %242 : vector<8x32xf32>
    %246 = arith.mulf %236, %197 : vector<8x32xf32>
    %247 = arith.addf %245, %246 : vector<8x32xf32>
    %c24_80 = arith.constant 24 : index
    %c0_81 = arith.constant 0 : index
    %248 = vector.load %arg23[%c24_80, %c0_81] : memref<64x96xf32, #tpu.memory_space<vmem>>, vector<8x96xf32>
    %249 = arith.truncf %221 : vector<8x32xf32> to vector<8x32xbf16>
    %cst_82 = arith.constant dense<0.000000e+00> : vector<8x96xf32>
    %250 = tpu.matmul %249, %15, %cst_82 {dimension_numbers = #tpu.dot_dimension_numbers<[1], [0], [0], [1], [0, 0, 1, 1], [], []>} : vector<8x32xbf16>, vector<32x96xbf16>, vector<8x96xf32> -> vector<8x96xf32>
    %251 = vector.extract_strided_slice %248 {offsets = [0, 0], sizes = [8, 64], strides = [1, 1]} : vector<8x96xf32> to vector<8x64xf32>
    %252 = vector.extract_strided_slice %250 {offsets = [0, 0], sizes = [8, 64], strides = [1, 1]} : vector<8x96xf32> to vector<8x64xf32>
    %253 = arith.addf %251, %252 : vector<8x64xf32>
    %254 = arith.negf %253 : vector<8x64xf32>
    %255 = math.exp %254 : vector<8x64xf32>
    %cst_83 = arith.constant 1.000000e+00 : f32
    %256 = vector.broadcast %cst_83 : f32 to vector<8x64xf32>
    %257 = arith.addf %256, %255 : vector<8x64xf32>
    %258 = arith.divf %256, %257 : vector<8x64xf32>
    %259 = vector.extract_strided_slice %258 {offsets = [0, 0], sizes = [8, 32], strides = [1, 1]} : vector<8x64xf32> to vector<8x32xf32>
    %260 = vector.extract_strided_slice %258 {offsets = [0, 32], sizes = [8, 32], strides = [1, 1]} : vector<8x64xf32> to vector<8x32xf32>
    %261 = vector.extract_strided_slice %248 {offsets = [0, 64], sizes = [8, 32], strides = [1, 1]} : vector<8x96xf32> to vector<8x32xf32>
    %262 = vector.extract_strided_slice %250 {offsets = [0, 64], sizes = [8, 32], strides = [1, 1]} : vector<8x96xf32> to vector<8x32xf32>
    %263 = arith.addf %262, %21 : vector<8x32xf32>
    %264 = arith.mulf %259, %263 : vector<8x32xf32>
    %265 = arith.addf %261, %264 : vector<8x32xf32>
    %266 = math.tanh %265 : vector<8x32xf32>
    %cst_84 = arith.constant 1.000000e+00 : f32
    %267 = vector.broadcast %cst_84 : f32 to vector<8x32xf32>
    %268 = arith.subf %267, %260 : vector<8x32xf32>
    %269 = arith.mulf %268, %266 : vector<8x32xf32>
    %270 = arith.mulf %260, %221 : vector<8x32xf32>
    %271 = arith.addf %269, %270 : vector<8x32xf32>
    %c32_85 = arith.constant 32 : index
    %c0_86 = arith.constant 0 : index
    %272 = vector.load %arg24[%c32_85, %c0_86] : memref<64x64xf32, #tpu.memory_space<vmem>>, vector<8x32xf32>
    tpu.vector_store %arg24[%c32_85, %c0_86], %247 {strides = array<i32>} : memref<64x64xf32, #tpu.memory_space<vmem>>, vector<8x32xf32>,
    %c24_87 = arith.constant 24 : index
    %c32_88 = arith.constant 32 : index
    %273 = vector.load %arg24[%c24_87, %c32_88] : memref<64x64xf32, #tpu.memory_space<vmem>>, vector<8x32xf32>
    tpu.vector_store %arg24[%c24_87, %c32_88], %271 {strides = array<i32>} : memref<64x64xf32, #tpu.memory_space<vmem>>, vector<8x32xf32>,
    %c40_89 = arith.constant 40 : index
    %c0_90 = arith.constant 0 : index
    %274 = vector.load %arg22[%c40_89, %c0_90] : memref<64x96xf32, #tpu.memory_space<vmem>>, vector<8x96xf32>
    %275 = arith.truncf %247 : vector<8x32xf32> to vector<8x32xbf16>
    %cst_91 = arith.constant dense<0.000000e+00> : vector<8x96xf32>
    %276 = tpu.matmul %275, %14, %cst_91 {dimension_numbers = #tpu.dot_dimension_numbers<[1], [0], [0], [1], [0, 0, 1, 1], [], []>} : vector<8x32xbf16>, vector<32x96xbf16>, vector<8x96xf32> -> vector<8x96xf32>
    %277 = vector.extract_strided_slice %274 {offsets = [0, 0], sizes = [8, 64], strides = [1, 1]} : vector<8x96xf32> to vector<8x64xf32>
    %278 = vector.extract_strided_slice %276 {offsets = [0, 0], sizes = [8, 64], strides = [1, 1]} : vector<8x96xf32> to vector<8x64xf32>
    %279 = arith.addf %277, %278 : vector<8x64xf32>
    %280 = arith.negf %279 : vector<8x64xf32>
    %281 = math.exp %280 : vector<8x64xf32>
    %cst_92 = arith.constant 1.000000e+00 : f32
    %282 = vector.broadcast %cst_92 : f32 to vector<8x64xf32>
    %283 = arith.addf %282, %281 : vector<8x64xf32>
    %284 = arith.divf %282, %283 : vector<8x64xf32>
    %285 = vector.extract_strided_slice %284 {offsets = [0, 0], sizes = [8, 32], strides = [1, 1]} : vector<8x64xf32> to vector<8x32xf32>
    %286 = vector.extract_strided_slice %284 {offsets = [0, 32], sizes = [8, 32], strides = [1, 1]} : vector<8x64xf32> to vector<8x32xf32>
    %287 = vector.extract_strided_slice %274 {offsets = [0, 64], sizes = [8, 32], strides = [1, 1]} : vector<8x96xf32> to vector<8x32xf32>
    %288 = vector.extract_strided_slice %276 {offsets = [0, 64], sizes = [8, 32], strides = [1, 1]} : vector<8x96xf32> to vector<8x32xf32>
    %289 = arith.addf %288, %18 : vector<8x32xf32>
    %290 = arith.mulf %285, %289 : vector<8x32xf32>
    %291 = arith.addf %287, %290 : vector<8x32xf32>
    %292 = math.tanh %291 : vector<8x32xf32>
    %cst_93 = arith.constant 1.000000e+00 : f32
    %293 = vector.broadcast %cst_93 : f32 to vector<8x32xf32>
    %294 = arith.subf %293, %286 : vector<8x32xf32>
    %295 = arith.mulf %294, %292 : vector<8x32xf32>
    %296 = arith.mulf %286, %247 : vector<8x32xf32>
    %297 = arith.addf %295, %296 : vector<8x32xf32>
    %c16_94 = arith.constant 16 : index
    %c0_95 = arith.constant 0 : index
    %298 = vector.load %arg23[%c16_94, %c0_95] : memref<64x96xf32, #tpu.memory_space<vmem>>, vector<8x96xf32>
    %299 = arith.truncf %271 : vector<8x32xf32> to vector<8x32xbf16>
    %cst_96 = arith.constant dense<0.000000e+00> : vector<8x96xf32>
    %300 = tpu.matmul %299, %15, %cst_96 {dimension_numbers = #tpu.dot_dimension_numbers<[1], [0], [0], [1], [0, 0, 1, 1], [], []>} : vector<8x32xbf16>, vector<32x96xbf16>, vector<8x96xf32> -> vector<8x96xf32>
    %301 = vector.extract_strided_slice %298 {offsets = [0, 0], sizes = [8, 64], strides = [1, 1]} : vector<8x96xf32> to vector<8x64xf32>
    %302 = vector.extract_strided_slice %300 {offsets = [0, 0], sizes = [8, 64], strides = [1, 1]} : vector<8x96xf32> to vector<8x64xf32>
    %303 = arith.addf %301, %302 : vector<8x64xf32>
    %304 = arith.negf %303 : vector<8x64xf32>
    %305 = math.exp %304 : vector<8x64xf32>
    %cst_97 = arith.constant 1.000000e+00 : f32
    %306 = vector.broadcast %cst_97 : f32 to vector<8x64xf32>
    %307 = arith.addf %306, %305 : vector<8x64xf32>
    %308 = arith.divf %306, %307 : vector<8x64xf32>
    %309 = vector.extract_strided_slice %308 {offsets = [0, 0], sizes = [8, 32], strides = [1, 1]} : vector<8x64xf32> to vector<8x32xf32>
    %310 = vector.extract_strided_slice %308 {offsets = [0, 32], sizes = [8, 32], strides = [1, 1]} : vector<8x64xf32> to vector<8x32xf32>
    %311 = vector.extract_strided_slice %298 {offsets = [0, 64], sizes = [8, 32], strides = [1, 1]} : vector<8x96xf32> to vector<8x32xf32>
    %312 = vector.extract_strided_slice %300 {offsets = [0, 64], sizes = [8, 32], strides = [1, 1]} : vector<8x96xf32> to vector<8x32xf32>
    %313 = arith.addf %312, %21 : vector<8x32xf32>
    %314 = arith.mulf %309, %313 : vector<8x32xf32>
    %315 = arith.addf %311, %314 : vector<8x32xf32>
    %316 = math.tanh %315 : vector<8x32xf32>
    %cst_98 = arith.constant 1.000000e+00 : f32
    %317 = vector.broadcast %cst_98 : f32 to vector<8x32xf32>
    %318 = arith.subf %317, %310 : vector<8x32xf32>
    %319 = arith.mulf %318, %316 : vector<8x32xf32>
    %320 = arith.mulf %310, %271 : vector<8x32xf32>
    %321 = arith.addf %319, %320 : vector<8x32xf32>
    %c40_99 = arith.constant 40 : index
    %c0_100 = arith.constant 0 : index
    %322 = vector.load %arg24[%c40_99, %c0_100] : memref<64x64xf32, #tpu.memory_space<vmem>>, vector<8x32xf32>
    tpu.vector_store %arg24[%c40_99, %c0_100], %297 {strides = array<i32>} : memref<64x64xf32, #tpu.memory_space<vmem>>, vector<8x32xf32>,
    %c16_101 = arith.constant 16 : index
    %c32_102 = arith.constant 32 : index
    %323 = vector.load %arg24[%c16_101, %c32_102] : memref<64x64xf32, #tpu.memory_space<vmem>>, vector<8x32xf32>
    tpu.vector_store %arg24[%c16_101, %c32_102], %321 {strides = array<i32>} : memref<64x64xf32, #tpu.memory_space<vmem>>, vector<8x32xf32>,
    %c48_103 = arith.constant 48 : index
    %c0_104 = arith.constant 0 : index
    %324 = vector.load %arg22[%c48_103, %c0_104] : memref<64x96xf32, #tpu.memory_space<vmem>>, vector<8x96xf32>
    %325 = arith.truncf %297 : vector<8x32xf32> to vector<8x32xbf16>
    %cst_105 = arith.constant dense<0.000000e+00> : vector<8x96xf32>
    %326 = tpu.matmul %325, %14, %cst_105 {dimension_numbers = #tpu.dot_dimension_numbers<[1], [0], [0], [1], [0, 0, 1, 1], [], []>} : vector<8x32xbf16>, vector<32x96xbf16>, vector<8x96xf32> -> vector<8x96xf32>
    %327 = vector.extract_strided_slice %324 {offsets = [0, 0], sizes = [8, 64], strides = [1, 1]} : vector<8x96xf32> to vector<8x64xf32>
    %328 = vector.extract_strided_slice %326 {offsets = [0, 0], sizes = [8, 64], strides = [1, 1]} : vector<8x96xf32> to vector<8x64xf32>
    %329 = arith.addf %327, %328 : vector<8x64xf32>
    %330 = arith.negf %329 : vector<8x64xf32>
    %331 = math.exp %330 : vector<8x64xf32>
    %cst_106 = arith.constant 1.000000e+00 : f32
    %332 = vector.broadcast %cst_106 : f32 to vector<8x64xf32>
    %333 = arith.addf %332, %331 : vector<8x64xf32>
    %334 = arith.divf %332, %333 : vector<8x64xf32>
    %335 = vector.extract_strided_slice %334 {offsets = [0, 0], sizes = [8, 32], strides = [1, 1]} : vector<8x64xf32> to vector<8x32xf32>
    %336 = vector.extract_strided_slice %334 {offsets = [0, 32], sizes = [8, 32], strides = [1, 1]} : vector<8x64xf32> to vector<8x32xf32>
    %337 = vector.extract_strided_slice %324 {offsets = [0, 64], sizes = [8, 32], strides = [1, 1]} : vector<8x96xf32> to vector<8x32xf32>
    %338 = vector.extract_strided_slice %326 {offsets = [0, 64], sizes = [8, 32], strides = [1, 1]} : vector<8x96xf32> to vector<8x32xf32>
    %339 = arith.addf %338, %18 : vector<8x32xf32>
    %340 = arith.mulf %335, %339 : vector<8x32xf32>
    %341 = arith.addf %337, %340 : vector<8x32xf32>
    %342 = math.tanh %341 : vector<8x32xf32>
    %cst_107 = arith.constant 1.000000e+00 : f32
    %343 = vector.broadcast %cst_107 : f32 to vector<8x32xf32>
    %344 = arith.subf %343, %336 : vector<8x32xf32>
    %345 = arith.mulf %344, %342 : vector<8x32xf32>
    %346 = arith.mulf %336, %297 : vector<8x32xf32>
    %347 = arith.addf %345, %346 : vector<8x32xf32>
    %c8_108 = arith.constant 8 : index
    %c0_109 = arith.constant 0 : index
    %348 = vector.load %arg23[%c8_108, %c0_109] : memref<64x96xf32, #tpu.memory_space<vmem>>, vector<8x96xf32>
    %349 = arith.truncf %321 : vector<8x32xf32> to vector<8x32xbf16>
    %cst_110 = arith.constant dense<0.000000e+00> : vector<8x96xf32>
    %350 = tpu.matmul %349, %15, %cst_110 {dimension_numbers = #tpu.dot_dimension_numbers<[1], [0], [0], [1], [0, 0, 1, 1], [], []>} : vector<8x32xbf16>, vector<32x96xbf16>, vector<8x96xf32> -> vector<8x96xf32>
    %351 = vector.extract_strided_slice %348 {offsets = [0, 0], sizes = [8, 64], strides = [1, 1]} : vector<8x96xf32> to vector<8x64xf32>
    %352 = vector.extract_strided_slice %350 {offsets = [0, 0], sizes = [8, 64], strides = [1, 1]} : vector<8x96xf32> to vector<8x64xf32>
    %353 = arith.addf %351, %352 : vector<8x64xf32>
    %354 = arith.negf %353 : vector<8x64xf32>
    %355 = math.exp %354 : vector<8x64xf32>
    %cst_111 = arith.constant 1.000000e+00 : f32
    %356 = vector.broadcast %cst_111 : f32 to vector<8x64xf32>
    %357 = arith.addf %356, %355 : vector<8x64xf32>
    %358 = arith.divf %356, %357 : vector<8x64xf32>
    %359 = vector.extract_strided_slice %358 {offsets = [0, 0], sizes = [8, 32], strides = [1, 1]} : vector<8x64xf32> to vector<8x32xf32>
    %360 = vector.extract_strided_slice %358 {offsets = [0, 32], sizes = [8, 32], strides = [1, 1]} : vector<8x64xf32> to vector<8x32xf32>
    %361 = vector.extract_strided_slice %348 {offsets = [0, 64], sizes = [8, 32], strides = [1, 1]} : vector<8x96xf32> to vector<8x32xf32>
    %362 = vector.extract_strided_slice %350 {offsets = [0, 64], sizes = [8, 32], strides = [1, 1]} : vector<8x96xf32> to vector<8x32xf32>
    %363 = arith.addf %362, %21 : vector<8x32xf32>
    %364 = arith.mulf %359, %363 : vector<8x32xf32>
    %365 = arith.addf %361, %364 : vector<8x32xf32>
    %366 = math.tanh %365 : vector<8x32xf32>
    %cst_112 = arith.constant 1.000000e+00 : f32
    %367 = vector.broadcast %cst_112 : f32 to vector<8x32xf32>
    %368 = arith.subf %367, %360 : vector<8x32xf32>
    %369 = arith.mulf %368, %366 : vector<8x32xf32>
    %370 = arith.mulf %360, %321 : vector<8x32xf32>
    %371 = arith.addf %369, %370 : vector<8x32xf32>
    %c48_113 = arith.constant 48 : index
    %c0_114 = arith.constant 0 : index
    %372 = vector.load %arg24[%c48_113, %c0_114] : memref<64x64xf32, #tpu.memory_space<vmem>>, vector<8x32xf32>
    tpu.vector_store %arg24[%c48_113, %c0_114], %347 {strides = array<i32>} : memref<64x64xf32, #tpu.memory_space<vmem>>, vector<8x32xf32>,
    %c8_115 = arith.constant 8 : index
    %c32_116 = arith.constant 32 : index
    %373 = vector.load %arg24[%c8_115, %c32_116] : memref<64x64xf32, #tpu.memory_space<vmem>>, vector<8x32xf32>
    tpu.vector_store %arg24[%c8_115, %c32_116], %371 {strides = array<i32>} : memref<64x64xf32, #tpu.memory_space<vmem>>, vector<8x32xf32>,
    %c56_117 = arith.constant 56 : index
    %c0_118 = arith.constant 0 : index
    %374 = vector.load %arg22[%c56_117, %c0_118] : memref<64x96xf32, #tpu.memory_space<vmem>>, vector<8x96xf32>
    %375 = arith.truncf %347 : vector<8x32xf32> to vector<8x32xbf16>
    %cst_119 = arith.constant dense<0.000000e+00> : vector<8x96xf32>
    %376 = tpu.matmul %375, %14, %cst_119 {dimension_numbers = #tpu.dot_dimension_numbers<[1], [0], [0], [1], [0, 0, 1, 1], [], []>} : vector<8x32xbf16>, vector<32x96xbf16>, vector<8x96xf32> -> vector<8x96xf32>
    %377 = vector.extract_strided_slice %374 {offsets = [0, 0], sizes = [8, 64], strides = [1, 1]} : vector<8x96xf32> to vector<8x64xf32>
    %378 = vector.extract_strided_slice %376 {offsets = [0, 0], sizes = [8, 64], strides = [1, 1]} : vector<8x96xf32> to vector<8x64xf32>
    %379 = arith.addf %377, %378 : vector<8x64xf32>
    %380 = arith.negf %379 : vector<8x64xf32>
    %381 = math.exp %380 : vector<8x64xf32>
    %cst_120 = arith.constant 1.000000e+00 : f32
    %382 = vector.broadcast %cst_120 : f32 to vector<8x64xf32>
    %383 = arith.addf %382, %381 : vector<8x64xf32>
    %384 = arith.divf %382, %383 : vector<8x64xf32>
    %385 = vector.extract_strided_slice %384 {offsets = [0, 0], sizes = [8, 32], strides = [1, 1]} : vector<8x64xf32> to vector<8x32xf32>
    %386 = vector.extract_strided_slice %384 {offsets = [0, 32], sizes = [8, 32], strides = [1, 1]} : vector<8x64xf32> to vector<8x32xf32>
    %387 = vector.extract_strided_slice %374 {offsets = [0, 64], sizes = [8, 32], strides = [1, 1]} : vector<8x96xf32> to vector<8x32xf32>
    %388 = vector.extract_strided_slice %376 {offsets = [0, 64], sizes = [8, 32], strides = [1, 1]} : vector<8x96xf32> to vector<8x32xf32>
    %389 = arith.addf %388, %18 : vector<8x32xf32>
    %390 = arith.mulf %385, %389 : vector<8x32xf32>
    %391 = arith.addf %387, %390 : vector<8x32xf32>
    %392 = math.tanh %391 : vector<8x32xf32>
    %cst_121 = arith.constant 1.000000e+00 : f32
    %393 = vector.broadcast %cst_121 : f32 to vector<8x32xf32>
    %394 = arith.subf %393, %386 : vector<8x32xf32>
    %395 = arith.mulf %394, %392 : vector<8x32xf32>
    %396 = arith.mulf %386, %347 : vector<8x32xf32>
    %397 = arith.addf %395, %396 : vector<8x32xf32>
    %c0_122 = arith.constant 0 : index
    %c0_123 = arith.constant 0 : index
    %398 = vector.load %arg23[%c0_122, %c0_123] : memref<64x96xf32, #tpu.memory_space<vmem>>, vector<8x96xf32>
    %399 = arith.truncf %371 : vector<8x32xf32> to vector<8x32xbf16>
    %cst_124 = arith.constant dense<0.000000e+00> : vector<8x96xf32>
    %400 = tpu.matmul %399, %15, %cst_124 {dimension_numbers = #tpu.dot_dimension_numbers<[1], [0], [0], [1], [0, 0, 1, 1], [], []>} : vector<8x32xbf16>, vector<32x96xbf16>, vector<8x96xf32> -> vector<8x96xf32>
    %401 = vector.extract_strided_slice %398 {offsets = [0, 0], sizes = [8, 64], strides = [1, 1]} : vector<8x96xf32> to vector<8x64xf32>
    %402 = vector.extract_strided_slice %400 {offsets = [0, 0], sizes = [8, 64], strides = [1, 1]} : vector<8x96xf32> to vector<8x64xf32>
    %403 = arith.addf %401, %402 : vector<8x64xf32>
    %404 = arith.negf %403 : vector<8x64xf32>
    %405 = math.exp %404 : vector<8x64xf32>
    %cst_125 = arith.constant 1.000000e+00 : f32
    %406 = vector.broadcast %cst_125 : f32 to vector<8x64xf32>
    %407 = arith.addf %406, %405 : vector<8x64xf32>
    %408 = arith.divf %406, %407 : vector<8x64xf32>
    %409 = vector.extract_strided_slice %408 {offsets = [0, 0], sizes = [8, 32], strides = [1, 1]} : vector<8x64xf32> to vector<8x32xf32>
    %410 = vector.extract_strided_slice %408 {offsets = [0, 32], sizes = [8, 32], strides = [1, 1]} : vector<8x64xf32> to vector<8x32xf32>
    %411 = vector.extract_strided_slice %398 {offsets = [0, 64], sizes = [8, 32], strides = [1, 1]} : vector<8x96xf32> to vector<8x32xf32>
    %412 = vector.extract_strided_slice %400 {offsets = [0, 64], sizes = [8, 32], strides = [1, 1]} : vector<8x96xf32> to vector<8x32xf32>
    %413 = arith.addf %412, %21 : vector<8x32xf32>
    %414 = arith.mulf %409, %413 : vector<8x32xf32>
    %415 = arith.addf %411, %414 : vector<8x32xf32>
    %416 = math.tanh %415 : vector<8x32xf32>
    %cst_126 = arith.constant 1.000000e+00 : f32
    %417 = vector.broadcast %cst_126 : f32 to vector<8x32xf32>
    %418 = arith.subf %417, %410 : vector<8x32xf32>
    %419 = arith.mulf %418, %416 : vector<8x32xf32>
    %420 = arith.mulf %410, %371 : vector<8x32xf32>
    %421 = arith.addf %419, %420 : vector<8x32xf32>
    %c56_127 = arith.constant 56 : index
    %c0_128 = arith.constant 0 : index
    %422 = vector.load %arg24[%c56_127, %c0_128] : memref<64x64xf32, #tpu.memory_space<vmem>>, vector<8x32xf32>
    tpu.vector_store %arg24[%c56_127, %c0_128], %397 {strides = array<i32>} : memref<64x64xf32, #tpu.memory_space<vmem>>, vector<8x32xf32>,
    %c0_129 = arith.constant 0 : index
    %c32_130 = arith.constant 32 : index
    %423 = vector.load %arg24[%c0_129, %c32_130] : memref<64x64xf32, #tpu.memory_space<vmem>>, vector<8x32xf32>
    tpu.vector_store %arg24[%c0_129, %c32_130], %421 {strides = array<i32>} : memref<64x64xf32, #tpu.memory_space<vmem>>, vector<8x32xf32>,
    %c0_131 = arith.constant 0 : index
    %c0_132 = arith.constant 0 : index
    %424 = vector.load %arg24[%c0_131, %c0_132] : memref<64x64xf32, #tpu.memory_space<vmem>>, vector<64x64xf32>
    %425 = arith.truncf %424 : vector<64x64xf32> to vector<64x64xbf16>
    %c0_133 = arith.constant 0 : index
    %c0_134 = arith.constant 0 : index
    %426 = vector.load %arg9[%c0_133, %c0_134] : memref<64x96xbf16, #tpu.memory_space<vmem>>, vector<64x96xbf16>
    %cst_135 = arith.constant dense<0.000000e+00> : vector<64x96xf32>
    %427 = tpu.matmul %425, %426, %cst_135 {dimension_numbers = #tpu.dot_dimension_numbers<[1], [0], [0], [1], [0, 0, 1, 1], [], []>} : vector<64x64xbf16>, vector<64x96xbf16>, vector<64x96xf32> -> vector<64x96xf32>
    %c0_136 = arith.constant 0 : index
    %c0_137 = arith.constant 0 : index
    %428 = vector.load %arg10[%c0_136, %c0_137] : memref<1x96xf32, #tpu.memory_space<vmem>>, vector<1x96xf32>
    %429 = vector.broadcast %428 : vector<1x96xf32> to vector<64x96xf32>
    %430 = arith.addf %427, %429 : vector<64x96xf32>
    %c0_138 = arith.constant 0 : index
    %c0_139 = arith.constant 0 : index
    %431 = vector.load %arg22[%c0_138, %c0_139] : memref<64x96xf32, #tpu.memory_space<vmem>>, vector<64x96xf32>
    tpu.vector_store %arg22[%c0_138, %c0_139], %430 {strides = array<i32>} : memref<64x96xf32, #tpu.memory_space<vmem>>, vector<64x96xf32>,
    %c0_140 = arith.constant 0 : index
    %c0_141 = arith.constant 0 : index
    %432 = vector.load %arg24[%c0_140, %c0_141] : memref<64x64xf32, #tpu.memory_space<vmem>>, vector<64x64xf32>
    %433 = arith.truncf %432 : vector<64x64xf32> to vector<64x64xbf16>
    %c0_142 = arith.constant 0 : index
    %c0_143 = arith.constant 0 : index
    %434 = vector.load %arg13[%c0_142, %c0_143] : memref<64x96xbf16, #tpu.memory_space<vmem>>, vector<64x96xbf16>
    %cst_144 = arith.constant dense<0.000000e+00> : vector<64x96xf32>
    %435 = tpu.matmul %433, %434, %cst_144 {dimension_numbers = #tpu.dot_dimension_numbers<[1], [0], [0], [1], [0, 0, 1, 1], [], []>} : vector<64x64xbf16>, vector<64x96xbf16>, vector<64x96xf32> -> vector<64x96xf32>
    %c0_145 = arith.constant 0 : index
    %c0_146 = arith.constant 0 : index
    %436 = vector.load %arg14[%c0_145, %c0_146] : memref<1x96xf32, #tpu.memory_space<vmem>>, vector<1x96xf32>
    %437 = vector.broadcast %436 : vector<1x96xf32> to vector<64x96xf32>
    %438 = arith.addf %435, %437 : vector<64x96xf32>
    %c0_147 = arith.constant 0 : index
    %c0_148 = arith.constant 0 : index
    %439 = vector.load %arg23[%c0_147, %c0_148] : memref<64x96xf32, #tpu.memory_space<vmem>>, vector<64x96xf32>
    tpu.vector_store %arg23[%c0_147, %c0_148], %438 {strides = array<i32>} : memref<64x96xf32, #tpu.memory_space<vmem>>, vector<64x96xf32>,
    %c0_149 = arith.constant 0 : index
    %c0_150 = arith.constant 0 : index
    %440 = vector.load %arg11[%c0_149, %c0_150] : memref<32x96xbf16, #tpu.memory_space<vmem>>, vector<32x96xbf16>
    %c0_151 = arith.constant 0 : index
    %c0_152 = arith.constant 0 : index
    %441 = vector.load %arg15[%c0_151, %c0_152] : memref<32x96xbf16, #tpu.memory_space<vmem>>, vector<32x96xbf16>
    %c0_153 = arith.constant 0 : index
    %c0_154 = arith.constant 0 : index
    %442 = vector.load %arg12[%c0_153, %c0_154] : memref<1x32xf32, #tpu.memory_space<vmem>>, vector<1x32xf32>
    %443 = vector.shape_cast %442 : vector<1x32xf32> to vector<1x32xf32>
    %444 = vector.broadcast %443 : vector<1x32xf32> to vector<8x32xf32>
    %c0_155 = arith.constant 0 : index
    %c0_156 = arith.constant 0 : index
    %445 = vector.load %arg16[%c0_155, %c0_156] : memref<1x32xf32, #tpu.memory_space<vmem>>, vector<1x32xf32>
    %446 = vector.shape_cast %445 : vector<1x32xf32> to vector<1x32xf32>
    %447 = vector.broadcast %446 : vector<1x32xf32> to vector<8x32xf32>
    %cst_157 = arith.constant 0.000000e+00 : f32
    %448 = vector.broadcast %cst_157 : f32 to vector<8x32xf32>
    %cst_158 = arith.constant 0.000000e+00 : f32
    %449 = vector.broadcast %cst_158 : f32 to vector<8x32xf32>
    %c0_159 = arith.constant 0 : index
    %c0_160 = arith.constant 0 : index
    %450 = vector.load %arg22[%c0_159, %c0_160] : memref<64x96xf32, #tpu.memory_space<vmem>>, vector<8x96xf32>
    %451 = arith.truncf %448 : vector<8x32xf32> to vector<8x32xbf16>
    %cst_161 = arith.constant dense<0.000000e+00> : vector<8x96xf32>
    %452 = tpu.matmul %451, %440, %cst_161 {dimension_numbers = #tpu.dot_dimension_numbers<[1], [0], [0], [1], [0, 0, 1, 1], [], []>} : vector<8x32xbf16>, vector<32x96xbf16>, vector<8x96xf32> -> vector<8x96xf32>
    %453 = vector.extract_strided_slice %450 {offsets = [0, 0], sizes = [8, 64], strides = [1, 1]} : vector<8x96xf32> to vector<8x64xf32>
    %454 = vector.extract_strided_slice %452 {offsets = [0, 0], sizes = [8, 64], strides = [1, 1]} : vector<8x96xf32> to vector<8x64xf32>
    %455 = arith.addf %453, %454 : vector<8x64xf32>
    %456 = arith.negf %455 : vector<8x64xf32>
    %457 = math.exp %456 : vector<8x64xf32>
    %cst_162 = arith.constant 1.000000e+00 : f32
    %458 = vector.broadcast %cst_162 : f32 to vector<8x64xf32>
    %459 = arith.addf %458, %457 : vector<8x64xf32>
    %460 = arith.divf %458, %459 : vector<8x64xf32>
    %461 = vector.extract_strided_slice %460 {offsets = [0, 0], sizes = [8, 32], strides = [1, 1]} : vector<8x64xf32> to vector<8x32xf32>
    %462 = vector.extract_strided_slice %460 {offsets = [0, 32], sizes = [8, 32], strides = [1, 1]} : vector<8x64xf32> to vector<8x32xf32>
    %463 = vector.extract_strided_slice %450 {offsets = [0, 64], sizes = [8, 32], strides = [1, 1]} : vector<8x96xf32> to vector<8x32xf32>
    %464 = vector.extract_strided_slice %452 {offsets = [0, 64], sizes = [8, 32], strides = [1, 1]} : vector<8x96xf32> to vector<8x32xf32>
    %465 = arith.addf %464, %444 : vector<8x32xf32>
    %466 = arith.mulf %461, %465 : vector<8x32xf32>
    %467 = arith.addf %463, %466 : vector<8x32xf32>
    %468 = math.tanh %467 : vector<8x32xf32>
    %cst_163 = arith.constant 1.000000e+00 : f32
    %469 = vector.broadcast %cst_163 : f32 to vector<8x32xf32>
    %470 = arith.subf %469, %462 : vector<8x32xf32>
    %471 = arith.mulf %470, %468 : vector<8x32xf32>
    %472 = arith.mulf %462, %448 : vector<8x32xf32>
    %473 = arith.addf %471, %472 : vector<8x32xf32>
    %c56_164 = arith.constant 56 : index
    %c0_165 = arith.constant 0 : index
    %474 = vector.load %arg23[%c56_164, %c0_165] : memref<64x96xf32, #tpu.memory_space<vmem>>, vector<8x96xf32>
    %475 = arith.truncf %449 : vector<8x32xf32> to vector<8x32xbf16>
    %cst_166 = arith.constant dense<0.000000e+00> : vector<8x96xf32>
    %476 = tpu.matmul %475, %441, %cst_166 {dimension_numbers = #tpu.dot_dimension_numbers<[1], [0], [0], [1], [0, 0, 1, 1], [], []>} : vector<8x32xbf16>, vector<32x96xbf16>, vector<8x96xf32> -> vector<8x96xf32>
    %477 = vector.extract_strided_slice %474 {offsets = [0, 0], sizes = [8, 64], strides = [1, 1]} : vector<8x96xf32> to vector<8x64xf32>
    %478 = vector.extract_strided_slice %476 {offsets = [0, 0], sizes = [8, 64], strides = [1, 1]} : vector<8x96xf32> to vector<8x64xf32>
    %479 = arith.addf %477, %478 : vector<8x64xf32>
    %480 = arith.negf %479 : vector<8x64xf32>
    %481 = math.exp %480 : vector<8x64xf32>
    %cst_167 = arith.constant 1.000000e+00 : f32
    %482 = vector.broadcast %cst_167 : f32 to vector<8x64xf32>
    %483 = arith.addf %482, %481 : vector<8x64xf32>
    %484 = arith.divf %482, %483 : vector<8x64xf32>
    %485 = vector.extract_strided_slice %484 {offsets = [0, 0], sizes = [8, 32], strides = [1, 1]} : vector<8x64xf32> to vector<8x32xf32>
    %486 = vector.extract_strided_slice %484 {offsets = [0, 32], sizes = [8, 32], strides = [1, 1]} : vector<8x64xf32> to vector<8x32xf32>
    %487 = vector.extract_strided_slice %474 {offsets = [0, 64], sizes = [8, 32], strides = [1, 1]} : vector<8x96xf32> to vector<8x32xf32>
    %488 = vector.extract_strided_slice %476 {offsets = [0, 64], sizes = [8, 32], strides = [1, 1]} : vector<8x96xf32> to vector<8x32xf32>
    %489 = arith.addf %488, %447 : vector<8x32xf32>
    %490 = arith.mulf %485, %489 : vector<8x32xf32>
    %491 = arith.addf %487, %490 : vector<8x32xf32>
    %492 = math.tanh %491 : vector<8x32xf32>
    %cst_168 = arith.constant 1.000000e+00 : f32
    %493 = vector.broadcast %cst_168 : f32 to vector<8x32xf32>
    %494 = arith.subf %493, %486 : vector<8x32xf32>
    %495 = arith.mulf %494, %492 : vector<8x32xf32>
    %496 = arith.mulf %486, %449 : vector<8x32xf32>
    %497 = arith.addf %495, %496 : vector<8x32xf32>
    %c0_169 = arith.constant 0 : index
    %c0_170 = arith.constant 0 : index
    %498 = vector.load %arg24[%c0_169, %c0_170] : memref<64x64xf32, #tpu.memory_space<vmem>>, vector<8x32xf32>
    tpu.vector_store %arg24[%c0_169, %c0_170], %473 {strides = array<i32>} : memref<64x64xf32, #tpu.memory_space<vmem>>, vector<8x32xf32>,
    %c56_171 = arith.constant 56 : index
    %c32_172 = arith.constant 32 : index
    %499 = vector.load %arg24[%c56_171, %c32_172] : memref<64x64xf32, #tpu.memory_space<vmem>>, vector<8x32xf32>
    tpu.vector_store %arg24[%c56_171, %c32_172], %497 {strides = array<i32>} : memref<64x64xf32, #tpu.memory_space<vmem>>, vector<8x32xf32>,
    %c8_173 = arith.constant 8 : index
    %c0_174 = arith.constant 0 : index
    %500 = vector.load %arg22[%c8_173, %c0_174] : memref<64x96xf32, #tpu.memory_space<vmem>>, vector<8x96xf32>
    %501 = arith.truncf %473 : vector<8x32xf32> to vector<8x32xbf16>
    %cst_175 = arith.constant dense<0.000000e+00> : vector<8x96xf32>
    %502 = tpu.matmul %501, %440, %cst_175 {dimension_numbers = #tpu.dot_dimension_numbers<[1], [0], [0], [1], [0, 0, 1, 1], [], []>} : vector<8x32xbf16>, vector<32x96xbf16>, vector<8x96xf32> -> vector<8x96xf32>
    %503 = vector.extract_strided_slice %500 {offsets = [0, 0], sizes = [8, 64], strides = [1, 1]} : vector<8x96xf32> to vector<8x64xf32>
    %504 = vector.extract_strided_slice %502 {offsets = [0, 0], sizes = [8, 64], strides = [1, 1]} : vector<8x96xf32> to vector<8x64xf32>
    %505 = arith.addf %503, %504 : vector<8x64xf32>
    %506 = arith.negf %505 : vector<8x64xf32>
    %507 = math.exp %506 : vector<8x64xf32>
    %cst_176 = arith.constant 1.000000e+00 : f32
    %508 = vector.broadcast %cst_176 : f32 to vector<8x64xf32>
    %509 = arith.addf %508, %507 : vector<8x64xf32>
    %510 = arith.divf %508, %509 : vector<8x64xf32>
    %511 = vector.extract_strided_slice %510 {offsets = [0, 0], sizes = [8, 32], strides = [1, 1]} : vector<8x64xf32> to vector<8x32xf32>
    %512 = vector.extract_strided_slice %510 {offsets = [0, 32], sizes = [8, 32], strides = [1, 1]} : vector<8x64xf32> to vector<8x32xf32>
    %513 = vector.extract_strided_slice %500 {offsets = [0, 64], sizes = [8, 32], strides = [1, 1]} : vector<8x96xf32> to vector<8x32xf32>
    %514 = vector.extract_strided_slice %502 {offsets = [0, 64], sizes = [8, 32], strides = [1, 1]} : vector<8x96xf32> to vector<8x32xf32>
    %515 = arith.addf %514, %444 : vector<8x32xf32>
    %516 = arith.mulf %511, %515 : vector<8x32xf32>
    %517 = arith.addf %513, %516 : vector<8x32xf32>
    %518 = math.tanh %517 : vector<8x32xf32>
    %cst_177 = arith.constant 1.000000e+00 : f32
    %519 = vector.broadcast %cst_177 : f32 to vector<8x32xf32>
    %520 = arith.subf %519, %512 : vector<8x32xf32>
    %521 = arith.mulf %520, %518 : vector<8x32xf32>
    %522 = arith.mulf %512, %473 : vector<8x32xf32>
    %523 = arith.addf %521, %522 : vector<8x32xf32>
    %c48_178 = arith.constant 48 : index
    %c0_179 = arith.constant 0 : index
    %524 = vector.load %arg23[%c48_178, %c0_179] : memref<64x96xf32, #tpu.memory_space<vmem>>, vector<8x96xf32>
    %525 = arith.truncf %497 : vector<8x32xf32> to vector<8x32xbf16>
    %cst_180 = arith.constant dense<0.000000e+00> : vector<8x96xf32>
    %526 = tpu.matmul %525, %441, %cst_180 {dimension_numbers = #tpu.dot_dimension_numbers<[1], [0], [0], [1], [0, 0, 1, 1], [], []>} : vector<8x32xbf16>, vector<32x96xbf16>, vector<8x96xf32> -> vector<8x96xf32>
    %527 = vector.extract_strided_slice %524 {offsets = [0, 0], sizes = [8, 64], strides = [1, 1]} : vector<8x96xf32> to vector<8x64xf32>
    %528 = vector.extract_strided_slice %526 {offsets = [0, 0], sizes = [8, 64], strides = [1, 1]} : vector<8x96xf32> to vector<8x64xf32>
    %529 = arith.addf %527, %528 : vector<8x64xf32>
    %530 = arith.negf %529 : vector<8x64xf32>
    %531 = math.exp %530 : vector<8x64xf32>
    %cst_181 = arith.constant 1.000000e+00 : f32
    %532 = vector.broadcast %cst_181 : f32 to vector<8x64xf32>
    %533 = arith.addf %532, %531 : vector<8x64xf32>
    %534 = arith.divf %532, %533 : vector<8x64xf32>
    %535 = vector.extract_strided_slice %534 {offsets = [0, 0], sizes = [8, 32], strides = [1, 1]} : vector<8x64xf32> to vector<8x32xf32>
    %536 = vector.extract_strided_slice %534 {offsets = [0, 32], sizes = [8, 32], strides = [1, 1]} : vector<8x64xf32> to vector<8x32xf32>
    %537 = vector.extract_strided_slice %524 {offsets = [0, 64], sizes = [8, 32], strides = [1, 1]} : vector<8x96xf32> to vector<8x32xf32>
    %538 = vector.extract_strided_slice %526 {offsets = [0, 64], sizes = [8, 32], strides = [1, 1]} : vector<8x96xf32> to vector<8x32xf32>
    %539 = arith.addf %538, %447 : vector<8x32xf32>
    %540 = arith.mulf %535, %539 : vector<8x32xf32>
    %541 = arith.addf %537, %540 : vector<8x32xf32>
    %542 = math.tanh %541 : vector<8x32xf32>
    %cst_182 = arith.constant 1.000000e+00 : f32
    %543 = vector.broadcast %cst_182 : f32 to vector<8x32xf32>
    %544 = arith.subf %543, %536 : vector<8x32xf32>
    %545 = arith.mulf %544, %542 : vector<8x32xf32>
    %546 = arith.mulf %536, %497 : vector<8x32xf32>
    %547 = arith.addf %545, %546 : vector<8x32xf32>
    %c8_183 = arith.constant 8 : index
    %c0_184 = arith.constant 0 : index
    %548 = vector.load %arg24[%c8_183, %c0_184] : memref<64x64xf32, #tpu.memory_space<vmem>>, vector<8x32xf32>
    tpu.vector_store %arg24[%c8_183, %c0_184], %523 {strides = array<i32>} : memref<64x64xf32, #tpu.memory_space<vmem>>, vector<8x32xf32>,
    %c48_185 = arith.constant 48 : index
    %c32_186 = arith.constant 32 : index
    %549 = vector.load %arg24[%c48_185, %c32_186] : memref<64x64xf32, #tpu.memory_space<vmem>>, vector<8x32xf32>
    tpu.vector_store %arg24[%c48_185, %c32_186], %547 {strides = array<i32>} : memref<64x64xf32, #tpu.memory_space<vmem>>, vector<8x32xf32>,
    %c16_187 = arith.constant 16 : index
    %c0_188 = arith.constant 0 : index
    %550 = vector.load %arg22[%c16_187, %c0_188] : memref<64x96xf32, #tpu.memory_space<vmem>>, vector<8x96xf32>
    %551 = arith.truncf %523 : vector<8x32xf32> to vector<8x32xbf16>
    %cst_189 = arith.constant dense<0.000000e+00> : vector<8x96xf32>
    %552 = tpu.matmul %551, %440, %cst_189 {dimension_numbers = #tpu.dot_dimension_numbers<[1], [0], [0], [1], [0, 0, 1, 1], [], []>} : vector<8x32xbf16>, vector<32x96xbf16>, vector<8x96xf32> -> vector<8x96xf32>
    %553 = vector.extract_strided_slice %550 {offsets = [0, 0], sizes = [8, 64], strides = [1, 1]} : vector<8x96xf32> to vector<8x64xf32>
    %554 = vector.extract_strided_slice %552 {offsets = [0, 0], sizes = [8, 64], strides = [1, 1]} : vector<8x96xf32> to vector<8x64xf32>
    %555 = arith.addf %553, %554 : vector<8x64xf32>
    %556 = arith.negf %555 : vector<8x64xf32>
    %557 = math.exp %556 : vector<8x64xf32>
    %cst_190 = arith.constant 1.000000e+00 : f32
    %558 = vector.broadcast %cst_190 : f32 to vector<8x64xf32>
    %559 = arith.addf %558, %557 : vector<8x64xf32>
    %560 = arith.divf %558, %559 : vector<8x64xf32>
    %561 = vector.extract_strided_slice %560 {offsets = [0, 0], sizes = [8, 32], strides = [1, 1]} : vector<8x64xf32> to vector<8x32xf32>
    %562 = vector.extract_strided_slice %560 {offsets = [0, 32], sizes = [8, 32], strides = [1, 1]} : vector<8x64xf32> to vector<8x32xf32>
    %563 = vector.extract_strided_slice %550 {offsets = [0, 64], sizes = [8, 32], strides = [1, 1]} : vector<8x96xf32> to vector<8x32xf32>
    %564 = vector.extract_strided_slice %552 {offsets = [0, 64], sizes = [8, 32], strides = [1, 1]} : vector<8x96xf32> to vector<8x32xf32>
    %565 = arith.addf %564, %444 : vector<8x32xf32>
    %566 = arith.mulf %561, %565 : vector<8x32xf32>
    %567 = arith.addf %563, %566 : vector<8x32xf32>
    %568 = math.tanh %567 : vector<8x32xf32>
    %cst_191 = arith.constant 1.000000e+00 : f32
    %569 = vector.broadcast %cst_191 : f32 to vector<8x32xf32>
    %570 = arith.subf %569, %562 : vector<8x32xf32>
    %571 = arith.mulf %570, %568 : vector<8x32xf32>
    %572 = arith.mulf %562, %523 : vector<8x32xf32>
    %573 = arith.addf %571, %572 : vector<8x32xf32>
    %c40_192 = arith.constant 40 : index
    %c0_193 = arith.constant 0 : index
    %574 = vector.load %arg23[%c40_192, %c0_193] : memref<64x96xf32, #tpu.memory_space<vmem>>, vector<8x96xf32>
    %575 = arith.truncf %547 : vector<8x32xf32> to vector<8x32xbf16>
    %cst_194 = arith.constant dense<0.000000e+00> : vector<8x96xf32>
    %576 = tpu.matmul %575, %441, %cst_194 {dimension_numbers = #tpu.dot_dimension_numbers<[1], [0], [0], [1], [0, 0, 1, 1], [], []>} : vector<8x32xbf16>, vector<32x96xbf16>, vector<8x96xf32> -> vector<8x96xf32>
    %577 = vector.extract_strided_slice %574 {offsets = [0, 0], sizes = [8, 64], strides = [1, 1]} : vector<8x96xf32> to vector<8x64xf32>
    %578 = vector.extract_strided_slice %576 {offsets = [0, 0], sizes = [8, 64], strides = [1, 1]} : vector<8x96xf32> to vector<8x64xf32>
    %579 = arith.addf %577, %578 : vector<8x64xf32>
    %580 = arith.negf %579 : vector<8x64xf32>
    %581 = math.exp %580 : vector<8x64xf32>
    %cst_195 = arith.constant 1.000000e+00 : f32
    %582 = vector.broadcast %cst_195 : f32 to vector<8x64xf32>
    %583 = arith.addf %582, %581 : vector<8x64xf32>
    %584 = arith.divf %582, %583 : vector<8x64xf32>
    %585 = vector.extract_strided_slice %584 {offsets = [0, 0], sizes = [8, 32], strides = [1, 1]} : vector<8x64xf32> to vector<8x32xf32>
    %586 = vector.extract_strided_slice %584 {offsets = [0, 32], sizes = [8, 32], strides = [1, 1]} : vector<8x64xf32> to vector<8x32xf32>
    %587 = vector.extract_strided_slice %574 {offsets = [0, 64], sizes = [8, 32], strides = [1, 1]} : vector<8x96xf32> to vector<8x32xf32>
    %588 = vector.extract_strided_slice %576 {offsets = [0, 64], sizes = [8, 32], strides = [1, 1]} : vector<8x96xf32> to vector<8x32xf32>
    %589 = arith.addf %588, %447 : vector<8x32xf32>
    %590 = arith.mulf %585, %589 : vector<8x32xf32>
    %591 = arith.addf %587, %590 : vector<8x32xf32>
    %592 = math.tanh %591 : vector<8x32xf32>
    %cst_196 = arith.constant 1.000000e+00 : f32
    %593 = vector.broadcast %cst_196 : f32 to vector<8x32xf32>
    %594 = arith.subf %593, %586 : vector<8x32xf32>
    %595 = arith.mulf %594, %592 : vector<8x32xf32>
    %596 = arith.mulf %586, %547 : vector<8x32xf32>
    %597 = arith.addf %595, %596 : vector<8x32xf32>
    %c16_197 = arith.constant 16 : index
    %c0_198 = arith.constant 0 : index
    %598 = vector.load %arg24[%c16_197, %c0_198] : memref<64x64xf32, #tpu.memory_space<vmem>>, vector<8x32xf32>
    tpu.vector_store %arg24[%c16_197, %c0_198], %573 {strides = array<i32>} : memref<64x64xf32, #tpu.memory_space<vmem>>, vector<8x32xf32>,
    %c40_199 = arith.constant 40 : index
    %c32_200 = arith.constant 32 : index
    %599 = vector.load %arg24[%c40_199, %c32_200] : memref<64x64xf32, #tpu.memory_space<vmem>>, vector<8x32xf32>
    tpu.vector_store %arg24[%c40_199, %c32_200], %597 {strides = array<i32>} : memref<64x64xf32, #tpu.memory_space<vmem>>, vector<8x32xf32>,
    %c24_201 = arith.constant 24 : index
    %c0_202 = arith.constant 0 : index
    %600 = vector.load %arg22[%c24_201, %c0_202] : memref<64x96xf32, #tpu.memory_space<vmem>>, vector<8x96xf32>
    %601 = arith.truncf %573 : vector<8x32xf32> to vector<8x32xbf16>
    %cst_203 = arith.constant dense<0.000000e+00> : vector<8x96xf32>
    %602 = tpu.matmul %601, %440, %cst_203 {dimension_numbers = #tpu.dot_dimension_numbers<[1], [0], [0], [1], [0, 0, 1, 1], [], []>} : vector<8x32xbf16>, vector<32x96xbf16>, vector<8x96xf32> -> vector<8x96xf32>
    %603 = vector.extract_strided_slice %600 {offsets = [0, 0], sizes = [8, 64], strides = [1, 1]} : vector<8x96xf32> to vector<8x64xf32>
    %604 = vector.extract_strided_slice %602 {offsets = [0, 0], sizes = [8, 64], strides = [1, 1]} : vector<8x96xf32> to vector<8x64xf32>
    %605 = arith.addf %603, %604 : vector<8x64xf32>
    %606 = arith.negf %605 : vector<8x64xf32>
    %607 = math.exp %606 : vector<8x64xf32>
    %cst_204 = arith.constant 1.000000e+00 : f32
    %608 = vector.broadcast %cst_204 : f32 to vector<8x64xf32>
    %609 = arith.addf %608, %607 : vector<8x64xf32>
    %610 = arith.divf %608, %609 : vector<8x64xf32>
    %611 = vector.extract_strided_slice %610 {offsets = [0, 0], sizes = [8, 32], strides = [1, 1]} : vector<8x64xf32> to vector<8x32xf32>
    %612 = vector.extract_strided_slice %610 {offsets = [0, 32], sizes = [8, 32], strides = [1, 1]} : vector<8x64xf32> to vector<8x32xf32>
    %613 = vector.extract_strided_slice %600 {offsets = [0, 64], sizes = [8, 32], strides = [1, 1]} : vector<8x96xf32> to vector<8x32xf32>
    %614 = vector.extract_strided_slice %602 {offsets = [0, 64], sizes = [8, 32], strides = [1, 1]} : vector<8x96xf32> to vector<8x32xf32>
    %615 = arith.addf %614, %444 : vector<8x32xf32>
    %616 = arith.mulf %611, %615 : vector<8x32xf32>
    %617 = arith.addf %613, %616 : vector<8x32xf32>
    %618 = math.tanh %617 : vector<8x32xf32>
    %cst_205 = arith.constant 1.000000e+00 : f32
    %619 = vector.broadcast %cst_205 : f32 to vector<8x32xf32>
    %620 = arith.subf %619, %612 : vector<8x32xf32>
    %621 = arith.mulf %620, %618 : vector<8x32xf32>
    %622 = arith.mulf %612, %573 : vector<8x32xf32>
    %623 = arith.addf %621, %622 : vector<8x32xf32>
    %c32_206 = arith.constant 32 : index
    %c0_207 = arith.constant 0 : index
    %624 = vector.load %arg23[%c32_206, %c0_207] : memref<64x96xf32, #tpu.memory_space<vmem>>, vector<8x96xf32>
    %625 = arith.truncf %597 : vector<8x32xf32> to vector<8x32xbf16>
    %cst_208 = arith.constant dense<0.000000e+00> : vector<8x96xf32>
    %626 = tpu.matmul %625, %441, %cst_208 {dimension_numbers = #tpu.dot_dimension_numbers<[1], [0], [0], [1], [0, 0, 1, 1], [], []>} : vector<8x32xbf16>, vector<32x96xbf16>, vector<8x96xf32> -> vector<8x96xf32>
    %627 = vector.extract_strided_slice %624 {offsets = [0, 0], sizes = [8, 64], strides = [1, 1]} : vector<8x96xf32> to vector<8x64xf32>
    %628 = vector.extract_strided_slice %626 {offsets = [0, 0], sizes = [8, 64], strides = [1, 1]} : vector<8x96xf32> to vector<8x64xf32>
    %629 = arith.addf %627, %628 : vector<8x64xf32>
    %630 = arith.negf %629 : vector<8x64xf32>
    %631 = math.exp %630 : vector<8x64xf32>
    %cst_209 = arith.constant 1.000000e+00 : f32
    %632 = vector.broadcast %cst_209 : f32 to vector<8x64xf32>
    %633 = arith.addf %632, %631 : vector<8x64xf32>
    %634 = arith.divf %632, %633 : vector<8x64xf32>
    %635 = vector.extract_strided_slice %634 {offsets = [0, 0], sizes = [8, 32], strides = [1, 1]} : vector<8x64xf32> to vector<8x32xf32>
    %636 = vector.extract_strided_slice %634 {offsets = [0, 32], sizes = [8, 32], strides = [1, 1]} : vector<8x64xf32> to vector<8x32xf32>
    %637 = vector.extract_strided_slice %624 {offsets = [0, 64], sizes = [8, 32], strides = [1, 1]} : vector<8x96xf32> to vector<8x32xf32>
    %638 = vector.extract_strided_slice %626 {offsets = [0, 64], sizes = [8, 32], strides = [1, 1]} : vector<8x96xf32> to vector<8x32xf32>
    %639 = arith.addf %638, %447 : vector<8x32xf32>
    %640 = arith.mulf %635, %639 : vector<8x32xf32>
    %641 = arith.addf %637, %640 : vector<8x32xf32>
    %642 = math.tanh %641 : vector<8x32xf32>
    %cst_210 = arith.constant 1.000000e+00 : f32
    %643 = vector.broadcast %cst_210 : f32 to vector<8x32xf32>
    %644 = arith.subf %643, %636 : vector<8x32xf32>
    %645 = arith.mulf %644, %642 : vector<8x32xf32>
    %646 = arith.mulf %636, %597 : vector<8x32xf32>
    %647 = arith.addf %645, %646 : vector<8x32xf32>
    %c24_211 = arith.constant 24 : index
    %c0_212 = arith.constant 0 : index
    %648 = vector.load %arg24[%c24_211, %c0_212] : memref<64x64xf32, #tpu.memory_space<vmem>>, vector<8x32xf32>
    tpu.vector_store %arg24[%c24_211, %c0_212], %623 {strides = array<i32>} : memref<64x64xf32, #tpu.memory_space<vmem>>, vector<8x32xf32>,
    %c32_213 = arith.constant 32 : index
    %c32_214 = arith.constant 32 : index
    %649 = vector.load %arg24[%c32_213, %c32_214] : memref<64x64xf32, #tpu.memory_space<vmem>>, vector<8x32xf32>
    tpu.vector_store %arg24[%c32_213, %c32_214], %647 {strides = array<i32>} : memref<64x64xf32, #tpu.memory_space<vmem>>, vector<8x32xf32>,
    %c32_215 = arith.constant 32 : index
    %c0_216 = arith.constant 0 : index
    %650 = vector.load %arg22[%c32_215, %c0_216] : memref<64x96xf32, #tpu.memory_space<vmem>>, vector<8x96xf32>
    %651 = arith.truncf %623 : vector<8x32xf32> to vector<8x32xbf16>
    %cst_217 = arith.constant dense<0.000000e+00> : vector<8x96xf32>
    %652 = tpu.matmul %651, %440, %cst_217 {dimension_numbers = #tpu.dot_dimension_numbers<[1], [0], [0], [1], [0, 0, 1, 1], [], []>} : vector<8x32xbf16>, vector<32x96xbf16>, vector<8x96xf32> -> vector<8x96xf32>
    %653 = vector.extract_strided_slice %650 {offsets = [0, 0], sizes = [8, 64], strides = [1, 1]} : vector<8x96xf32> to vector<8x64xf32>
    %654 = vector.extract_strided_slice %652 {offsets = [0, 0], sizes = [8, 64], strides = [1, 1]} : vector<8x96xf32> to vector<8x64xf32>
    %655 = arith.addf %653, %654 : vector<8x64xf32>
    %656 = arith.negf %655 : vector<8x64xf32>
    %657 = math.exp %656 : vector<8x64xf32>
    %cst_218 = arith.constant 1.000000e+00 : f32
    %658 = vector.broadcast %cst_218 : f32 to vector<8x64xf32>
    %659 = arith.addf %658, %657 : vector<8x64xf32>
    %660 = arith.divf %658, %659 : vector<8x64xf32>
    %661 = vector.extract_strided_slice %660 {offsets = [0, 0], sizes = [8, 32], strides = [1, 1]} : vector<8x64xf32> to vector<8x32xf32>
    %662 = vector.extract_strided_slice %660 {offsets = [0, 32], sizes = [8, 32], strides = [1, 1]} : vector<8x64xf32> to vector<8x32xf32>
    %663 = vector.extract_strided_slice %650 {offsets = [0, 64], sizes = [8, 32], strides = [1, 1]} : vector<8x96xf32> to vector<8x32xf32>
    %664 = vector.extract_strided_slice %652 {offsets = [0, 64], sizes = [8, 32], strides = [1, 1]} : vector<8x96xf32> to vector<8x32xf32>
    %665 = arith.addf %664, %444 : vector<8x32xf32>
    %666 = arith.mulf %661, %665 : vector<8x32xf32>
    %667 = arith.addf %663, %666 : vector<8x32xf32>
    %668 = math.tanh %667 : vector<8x32xf32>
    %cst_219 = arith.constant 1.000000e+00 : f32
    %669 = vector.broadcast %cst_219 : f32 to vector<8x32xf32>
    %670 = arith.subf %669, %662 : vector<8x32xf32>
    %671 = arith.mulf %670, %668 : vector<8x32xf32>
    %672 = arith.mulf %662, %623 : vector<8x32xf32>
    %673 = arith.addf %671, %672 : vector<8x32xf32>
    %c24_220 = arith.constant 24 : index
    %c0_221 = arith.constant 0 : index
    %674 = vector.load %arg23[%c24_220, %c0_221] : memref<64x96xf32, #tpu.memory_space<vmem>>, vector<8x96xf32>
    %675 = arith.truncf %647 : vector<8x32xf32> to vector<8x32xbf16>
    %cst_222 = arith.constant dense<0.000000e+00> : vector<8x96xf32>
    %676 = tpu.matmul %675, %441, %cst_222 {dimension_numbers = #tpu.dot_dimension_numbers<[1], [0], [0], [1], [0, 0, 1, 1], [], []>} : vector<8x32xbf16>, vector<32x96xbf16>, vector<8x96xf32> -> vector<8x96xf32>
    %677 = vector.extract_strided_slice %674 {offsets = [0, 0], sizes = [8, 64], strides = [1, 1]} : vector<8x96xf32> to vector<8x64xf32>
    %678 = vector.extract_strided_slice %676 {offsets = [0, 0], sizes = [8, 64], strides = [1, 1]} : vector<8x96xf32> to vector<8x64xf32>
    %679 = arith.addf %677, %678 : vector<8x64xf32>
    %680 = arith.negf %679 : vector<8x64xf32>
    %681 = math.exp %680 : vector<8x64xf32>
    %cst_223 = arith.constant 1.000000e+00 : f32
    %682 = vector.broadcast %cst_223 : f32 to vector<8x64xf32>
    %683 = arith.addf %682, %681 : vector<8x64xf32>
    %684 = arith.divf %682, %683 : vector<8x64xf32>
    %685 = vector.extract_strided_slice %684 {offsets = [0, 0], sizes = [8, 32], strides = [1, 1]} : vector<8x64xf32> to vector<8x32xf32>
    %686 = vector.extract_strided_slice %684 {offsets = [0, 32], sizes = [8, 32], strides = [1, 1]} : vector<8x64xf32> to vector<8x32xf32>
    %687 = vector.extract_strided_slice %674 {offsets = [0, 64], sizes = [8, 32], strides = [1, 1]} : vector<8x96xf32> to vector<8x32xf32>
    %688 = vector.extract_strided_slice %676 {offsets = [0, 64], sizes = [8, 32], strides = [1, 1]} : vector<8x96xf32> to vector<8x32xf32>
    %689 = arith.addf %688, %447 : vector<8x32xf32>
    %690 = arith.mulf %685, %689 : vector<8x32xf32>
    %691 = arith.addf %687, %690 : vector<8x32xf32>
    %692 = math.tanh %691 : vector<8x32xf32>
    %cst_224 = arith.constant 1.000000e+00 : f32
    %693 = vector.broadcast %cst_224 : f32 to vector<8x32xf32>
    %694 = arith.subf %693, %686 : vector<8x32xf32>
    %695 = arith.mulf %694, %692 : vector<8x32xf32>
    %696 = arith.mulf %686, %647 : vector<8x32xf32>
    %697 = arith.addf %695, %696 : vector<8x32xf32>
    %c32_225 = arith.constant 32 : index
    %c0_226 = arith.constant 0 : index
    %698 = vector.load %arg24[%c32_225, %c0_226] : memref<64x64xf32, #tpu.memory_space<vmem>>, vector<8x32xf32>
    tpu.vector_store %arg24[%c32_225, %c0_226], %673 {strides = array<i32>} : memref<64x64xf32, #tpu.memory_space<vmem>>, vector<8x32xf32>,
    %c24_227 = arith.constant 24 : index
    %c32_228 = arith.constant 32 : index
    %699 = vector.load %arg24[%c24_227, %c32_228] : memref<64x64xf32, #tpu.memory_space<vmem>>, vector<8x32xf32>
    tpu.vector_store %arg24[%c24_227, %c32_228], %697 {strides = array<i32>} : memref<64x64xf32, #tpu.memory_space<vmem>>, vector<8x32xf32>,
    %c40_229 = arith.constant 40 : index
    %c0_230 = arith.constant 0 : index
    %700 = vector.load %arg22[%c40_229, %c0_230] : memref<64x96xf32, #tpu.memory_space<vmem>>, vector<8x96xf32>
    %701 = arith.truncf %673 : vector<8x32xf32> to vector<8x32xbf16>
    %cst_231 = arith.constant dense<0.000000e+00> : vector<8x96xf32>
    %702 = tpu.matmul %701, %440, %cst_231 {dimension_numbers = #tpu.dot_dimension_numbers<[1], [0], [0], [1], [0, 0, 1, 1], [], []>} : vector<8x32xbf16>, vector<32x96xbf16>, vector<8x96xf32> -> vector<8x96xf32>
    %703 = vector.extract_strided_slice %700 {offsets = [0, 0], sizes = [8, 64], strides = [1, 1]} : vector<8x96xf32> to vector<8x64xf32>
    %704 = vector.extract_strided_slice %702 {offsets = [0, 0], sizes = [8, 64], strides = [1, 1]} : vector<8x96xf32> to vector<8x64xf32>
    %705 = arith.addf %703, %704 : vector<8x64xf32>
    %706 = arith.negf %705 : vector<8x64xf32>
    %707 = math.exp %706 : vector<8x64xf32>
    %cst_232 = arith.constant 1.000000e+00 : f32
    %708 = vector.broadcast %cst_232 : f32 to vector<8x64xf32>
    %709 = arith.addf %708, %707 : vector<8x64xf32>
    %710 = arith.divf %708, %709 : vector<8x64xf32>
    %711 = vector.extract_strided_slice %710 {offsets = [0, 0], sizes = [8, 32], strides = [1, 1]} : vector<8x64xf32> to vector<8x32xf32>
    %712 = vector.extract_strided_slice %710 {offsets = [0, 32], sizes = [8, 32], strides = [1, 1]} : vector<8x64xf32> to vector<8x32xf32>
    %713 = vector.extract_strided_slice %700 {offsets = [0, 64], sizes = [8, 32], strides = [1, 1]} : vector<8x96xf32> to vector<8x32xf32>
    %714 = vector.extract_strided_slice %702 {offsets = [0, 64], sizes = [8, 32], strides = [1, 1]} : vector<8x96xf32> to vector<8x32xf32>
    %715 = arith.addf %714, %444 : vector<8x32xf32>
    %716 = arith.mulf %711, %715 : vector<8x32xf32>
    %717 = arith.addf %713, %716 : vector<8x32xf32>
    %718 = math.tanh %717 : vector<8x32xf32>
    %cst_233 = arith.constant 1.000000e+00 : f32
    %719 = vector.broadcast %cst_233 : f32 to vector<8x32xf32>
    %720 = arith.subf %719, %712 : vector<8x32xf32>
    %721 = arith.mulf %720, %718 : vector<8x32xf32>
    %722 = arith.mulf %712, %673 : vector<8x32xf32>
    %723 = arith.addf %721, %722 : vector<8x32xf32>
    %c16_234 = arith.constant 16 : index
    %c0_235 = arith.constant 0 : index
    %724 = vector.load %arg23[%c16_234, %c0_235] : memref<64x96xf32, #tpu.memory_space<vmem>>, vector<8x96xf32>
    %725 = arith.truncf %697 : vector<8x32xf32> to vector<8x32xbf16>
    %cst_236 = arith.constant dense<0.000000e+00> : vector<8x96xf32>
    %726 = tpu.matmul %725, %441, %cst_236 {dimension_numbers = #tpu.dot_dimension_numbers<[1], [0], [0], [1], [0, 0, 1, 1], [], []>} : vector<8x32xbf16>, vector<32x96xbf16>, vector<8x96xf32> -> vector<8x96xf32>
    %727 = vector.extract_strided_slice %724 {offsets = [0, 0], sizes = [8, 64], strides = [1, 1]} : vector<8x96xf32> to vector<8x64xf32>
    %728 = vector.extract_strided_slice %726 {offsets = [0, 0], sizes = [8, 64], strides = [1, 1]} : vector<8x96xf32> to vector<8x64xf32>
    %729 = arith.addf %727, %728 : vector<8x64xf32>
    %730 = arith.negf %729 : vector<8x64xf32>
    %731 = math.exp %730 : vector<8x64xf32>
    %cst_237 = arith.constant 1.000000e+00 : f32
    %732 = vector.broadcast %cst_237 : f32 to vector<8x64xf32>
    %733 = arith.addf %732, %731 : vector<8x64xf32>
    %734 = arith.divf %732, %733 : vector<8x64xf32>
    %735 = vector.extract_strided_slice %734 {offsets = [0, 0], sizes = [8, 32], strides = [1, 1]} : vector<8x64xf32> to vector<8x32xf32>
    %736 = vector.extract_strided_slice %734 {offsets = [0, 32], sizes = [8, 32], strides = [1, 1]} : vector<8x64xf32> to vector<8x32xf32>
    %737 = vector.extract_strided_slice %724 {offsets = [0, 64], sizes = [8, 32], strides = [1, 1]} : vector<8x96xf32> to vector<8x32xf32>
    %738 = vector.extract_strided_slice %726 {offsets = [0, 64], sizes = [8, 32], strides = [1, 1]} : vector<8x96xf32> to vector<8x32xf32>
    %739 = arith.addf %738, %447 : vector<8x32xf32>
    %740 = arith.mulf %735, %739 : vector<8x32xf32>
    %741 = arith.addf %737, %740 : vector<8x32xf32>
    %742 = math.tanh %741 : vector<8x32xf32>
    %cst_238 = arith.constant 1.000000e+00 : f32
    %743 = vector.broadcast %cst_238 : f32 to vector<8x32xf32>
    %744 = arith.subf %743, %736 : vector<8x32xf32>
    %745 = arith.mulf %744, %742 : vector<8x32xf32>
    %746 = arith.mulf %736, %697 : vector<8x32xf32>
    %747 = arith.addf %745, %746 : vector<8x32xf32>
    %c40_239 = arith.constant 40 : index
    %c0_240 = arith.constant 0 : index
    %748 = vector.load %arg24[%c40_239, %c0_240] : memref<64x64xf32, #tpu.memory_space<vmem>>, vector<8x32xf32>
    tpu.vector_store %arg24[%c40_239, %c0_240], %723 {strides = array<i32>} : memref<64x64xf32, #tpu.memory_space<vmem>>, vector<8x32xf32>,
    %c16_241 = arith.constant 16 : index
    %c32_242 = arith.constant 32 : index
    %749 = vector.load %arg24[%c16_241, %c32_242] : memref<64x64xf32, #tpu.memory_space<vmem>>, vector<8x32xf32>
    tpu.vector_store %arg24[%c16_241, %c32_242], %747 {strides = array<i32>} : memref<64x64xf32, #tpu.memory_space<vmem>>, vector<8x32xf32>,
    %c48_243 = arith.constant 48 : index
    %c0_244 = arith.constant 0 : index
    %750 = vector.load %arg22[%c48_243, %c0_244] : memref<64x96xf32, #tpu.memory_space<vmem>>, vector<8x96xf32>
    %751 = arith.truncf %723 : vector<8x32xf32> to vector<8x32xbf16>
    %cst_245 = arith.constant dense<0.000000e+00> : vector<8x96xf32>
    %752 = tpu.matmul %751, %440, %cst_245 {dimension_numbers = #tpu.dot_dimension_numbers<[1], [0], [0], [1], [0, 0, 1, 1], [], []>} : vector<8x32xbf16>, vector<32x96xbf16>, vector<8x96xf32> -> vector<8x96xf32>
    %753 = vector.extract_strided_slice %750 {offsets = [0, 0], sizes = [8, 64], strides = [1, 1]} : vector<8x96xf32> to vector<8x64xf32>
    %754 = vector.extract_strided_slice %752 {offsets = [0, 0], sizes = [8, 64], strides = [1, 1]} : vector<8x96xf32> to vector<8x64xf32>
    %755 = arith.addf %753, %754 : vector<8x64xf32>
    %756 = arith.negf %755 : vector<8x64xf32>
    %757 = math.exp %756 : vector<8x64xf32>
    %cst_246 = arith.constant 1.000000e+00 : f32
    %758 = vector.broadcast %cst_246 : f32 to vector<8x64xf32>
    %759 = arith.addf %758, %757 : vector<8x64xf32>
    %760 = arith.divf %758, %759 : vector<8x64xf32>
    %761 = vector.extract_strided_slice %760 {offsets = [0, 0], sizes = [8, 32], strides = [1, 1]} : vector<8x64xf32> to vector<8x32xf32>
    %762 = vector.extract_strided_slice %760 {offsets = [0, 32], sizes = [8, 32], strides = [1, 1]} : vector<8x64xf32> to vector<8x32xf32>
    %763 = vector.extract_strided_slice %750 {offsets = [0, 64], sizes = [8, 32], strides = [1, 1]} : vector<8x96xf32> to vector<8x32xf32>
    %764 = vector.extract_strided_slice %752 {offsets = [0, 64], sizes = [8, 32], strides = [1, 1]} : vector<8x96xf32> to vector<8x32xf32>
    %765 = arith.addf %764, %444 : vector<8x32xf32>
    %766 = arith.mulf %761, %765 : vector<8x32xf32>
    %767 = arith.addf %763, %766 : vector<8x32xf32>
    %768 = math.tanh %767 : vector<8x32xf32>
    %cst_247 = arith.constant 1.000000e+00 : f32
    %769 = vector.broadcast %cst_247 : f32 to vector<8x32xf32>
    %770 = arith.subf %769, %762 : vector<8x32xf32>
    %771 = arith.mulf %770, %768 : vector<8x32xf32>
    %772 = arith.mulf %762, %723 : vector<8x32xf32>
    %773 = arith.addf %771, %772 : vector<8x32xf32>
    %c8_248 = arith.constant 8 : index
    %c0_249 = arith.constant 0 : index
    %774 = vector.load %arg23[%c8_248, %c0_249] : memref<64x96xf32, #tpu.memory_space<vmem>>, vector<8x96xf32>
    %775 = arith.truncf %747 : vector<8x32xf32> to vector<8x32xbf16>
    %cst_250 = arith.constant dense<0.000000e+00> : vector<8x96xf32>
    %776 = tpu.matmul %775, %441, %cst_250 {dimension_numbers = #tpu.dot_dimension_numbers<[1], [0], [0], [1], [0, 0, 1, 1], [], []>} : vector<8x32xbf16>, vector<32x96xbf16>, vector<8x96xf32> -> vector<8x96xf32>
    %777 = vector.extract_strided_slice %774 {offsets = [0, 0], sizes = [8, 64], strides = [1, 1]} : vector<8x96xf32> to vector<8x64xf32>
    %778 = vector.extract_strided_slice %776 {offsets = [0, 0], sizes = [8, 64], strides = [1, 1]} : vector<8x96xf32> to vector<8x64xf32>
    %779 = arith.addf %777, %778 : vector<8x64xf32>
    %780 = arith.negf %779 : vector<8x64xf32>
    %781 = math.exp %780 : vector<8x64xf32>
    %cst_251 = arith.constant 1.000000e+00 : f32
    %782 = vector.broadcast %cst_251 : f32 to vector<8x64xf32>
    %783 = arith.addf %782, %781 : vector<8x64xf32>
    %784 = arith.divf %782, %783 : vector<8x64xf32>
    %785 = vector.extract_strided_slice %784 {offsets = [0, 0], sizes = [8, 32], strides = [1, 1]} : vector<8x64xf32> to vector<8x32xf32>
    %786 = vector.extract_strided_slice %784 {offsets = [0, 32], sizes = [8, 32], strides = [1, 1]} : vector<8x64xf32> to vector<8x32xf32>
    %787 = vector.extract_strided_slice %774 {offsets = [0, 64], sizes = [8, 32], strides = [1, 1]} : vector<8x96xf32> to vector<8x32xf32>
    %788 = vector.extract_strided_slice %776 {offsets = [0, 64], sizes = [8, 32], strides = [1, 1]} : vector<8x96xf32> to vector<8x32xf32>
    %789 = arith.addf %788, %447 : vector<8x32xf32>
    %790 = arith.mulf %785, %789 : vector<8x32xf32>
    %791 = arith.addf %787, %790 : vector<8x32xf32>
    %792 = math.tanh %791 : vector<8x32xf32>
    %cst_252 = arith.constant 1.000000e+00 : f32
    %793 = vector.broadcast %cst_252 : f32 to vector<8x32xf32>
    %794 = arith.subf %793, %786 : vector<8x32xf32>
    %795 = arith.mulf %794, %792 : vector<8x32xf32>
    %796 = arith.mulf %786, %747 : vector<8x32xf32>
    %797 = arith.addf %795, %796 : vector<8x32xf32>
    %c48_253 = arith.constant 48 : index
    %c0_254 = arith.constant 0 : index
    %798 = vector.load %arg24[%c48_253, %c0_254] : memref<64x64xf32, #tpu.memory_space<vmem>>, vector<8x32xf32>
    tpu.vector_store %arg24[%c48_253, %c0_254], %773 {strides = array<i32>} : memref<64x64xf32, #tpu.memory_space<vmem>>, vector<8x32xf32>,
    %c8_255 = arith.constant 8 : index
    %c32_256 = arith.constant 32 : index
    %799 = vector.load %arg24[%c8_255, %c32_256] : memref<64x64xf32, #tpu.memory_space<vmem>>, vector<8x32xf32>
    tpu.vector_store %arg24[%c8_255, %c32_256], %797 {strides = array<i32>} : memref<64x64xf32, #tpu.memory_space<vmem>>, vector<8x32xf32>,
    %c56_257 = arith.constant 56 : index
    %c0_258 = arith.constant 0 : index
    %800 = vector.load %arg22[%c56_257, %c0_258] : memref<64x96xf32, #tpu.memory_space<vmem>>, vector<8x96xf32>
    %801 = arith.truncf %773 : vector<8x32xf32> to vector<8x32xbf16>
    %cst_259 = arith.constant dense<0.000000e+00> : vector<8x96xf32>
    %802 = tpu.matmul %801, %440, %cst_259 {dimension_numbers = #tpu.dot_dimension_numbers<[1], [0], [0], [1], [0, 0, 1, 1], [], []>} : vector<8x32xbf16>, vector<32x96xbf16>, vector<8x96xf32> -> vector<8x96xf32>
    %803 = vector.extract_strided_slice %800 {offsets = [0, 0], sizes = [8, 64], strides = [1, 1]} : vector<8x96xf32> to vector<8x64xf32>
    %804 = vector.extract_strided_slice %802 {offsets = [0, 0], sizes = [8, 64], strides = [1, 1]} : vector<8x96xf32> to vector<8x64xf32>
    %805 = arith.addf %803, %804 : vector<8x64xf32>
    %806 = arith.negf %805 : vector<8x64xf32>
    %807 = math.exp %806 : vector<8x64xf32>
    %cst_260 = arith.constant 1.000000e+00 : f32
    %808 = vector.broadcast %cst_260 : f32 to vector<8x64xf32>
    %809 = arith.addf %808, %807 : vector<8x64xf32>
    %810 = arith.divf %808, %809 : vector<8x64xf32>
    %811 = vector.extract_strided_slice %810 {offsets = [0, 0], sizes = [8, 32], strides = [1, 1]} : vector<8x64xf32> to vector<8x32xf32>
    %812 = vector.extract_strided_slice %810 {offsets = [0, 32], sizes = [8, 32], strides = [1, 1]} : vector<8x64xf32> to vector<8x32xf32>
    %813 = vector.extract_strided_slice %800 {offsets = [0, 64], sizes = [8, 32], strides = [1, 1]} : vector<8x96xf32> to vector<8x32xf32>
    %814 = vector.extract_strided_slice %802 {offsets = [0, 64], sizes = [8, 32], strides = [1, 1]} : vector<8x96xf32> to vector<8x32xf32>
    %815 = arith.addf %814, %444 : vector<8x32xf32>
    %816 = arith.mulf %811, %815 : vector<8x32xf32>
    %817 = arith.addf %813, %816 : vector<8x32xf32>
    %818 = math.tanh %817 : vector<8x32xf32>
    %cst_261 = arith.constant 1.000000e+00 : f32
    %819 = vector.broadcast %cst_261 : f32 to vector<8x32xf32>
    %820 = arith.subf %819, %812 : vector<8x32xf32>
    %821 = arith.mulf %820, %818 : vector<8x32xf32>
    %822 = arith.mulf %812, %773 : vector<8x32xf32>
    %823 = arith.addf %821, %822 : vector<8x32xf32>
    %c0_262 = arith.constant 0 : index
    %c0_263 = arith.constant 0 : index
    %824 = vector.load %arg23[%c0_262, %c0_263] : memref<64x96xf32, #tpu.memory_space<vmem>>, vector<8x96xf32>
    %825 = arith.truncf %797 : vector<8x32xf32> to vector<8x32xbf16>
    %cst_264 = arith.constant dense<0.000000e+00> : vector<8x96xf32>
    %826 = tpu.matmul %825, %441, %cst_264 {dimension_numbers = #tpu.dot_dimension_numbers<[1], [0], [0], [1], [0, 0, 1, 1], [], []>} : vector<8x32xbf16>, vector<32x96xbf16>, vector<8x96xf32> -> vector<8x96xf32>
    %827 = vector.extract_strided_slice %824 {offsets = [0, 0], sizes = [8, 64], strides = [1, 1]} : vector<8x96xf32> to vector<8x64xf32>
    %828 = vector.extract_strided_slice %826 {offsets = [0, 0], sizes = [8, 64], strides = [1, 1]} : vector<8x96xf32> to vector<8x64xf32>
    %829 = arith.addf %827, %828 : vector<8x64xf32>
    %830 = arith.negf %829 : vector<8x64xf32>
    %831 = math.exp %830 : vector<8x64xf32>
    %cst_265 = arith.constant 1.000000e+00 : f32
    %832 = vector.broadcast %cst_265 : f32 to vector<8x64xf32>
    %833 = arith.addf %832, %831 : vector<8x64xf32>
    %834 = arith.divf %832, %833 : vector<8x64xf32>
    %835 = vector.extract_strided_slice %834 {offsets = [0, 0], sizes = [8, 32], strides = [1, 1]} : vector<8x64xf32> to vector<8x32xf32>
    %836 = vector.extract_strided_slice %834 {offsets = [0, 32], sizes = [8, 32], strides = [1, 1]} : vector<8x64xf32> to vector<8x32xf32>
    %837 = vector.extract_strided_slice %824 {offsets = [0, 64], sizes = [8, 32], strides = [1, 1]} : vector<8x96xf32> to vector<8x32xf32>
    %838 = vector.extract_strided_slice %826 {offsets = [0, 64], sizes = [8, 32], strides = [1, 1]} : vector<8x96xf32> to vector<8x32xf32>
    %839 = arith.addf %838, %447 : vector<8x32xf32>
    %840 = arith.mulf %835, %839 : vector<8x32xf32>
    %841 = arith.addf %837, %840 : vector<8x32xf32>
    %842 = math.tanh %841 : vector<8x32xf32>
    %cst_266 = arith.constant 1.000000e+00 : f32
    %843 = vector.broadcast %cst_266 : f32 to vector<8x32xf32>
    %844 = arith.subf %843, %836 : vector<8x32xf32>
    %845 = arith.mulf %844, %842 : vector<8x32xf32>
    %846 = arith.mulf %836, %797 : vector<8x32xf32>
    %847 = arith.addf %845, %846 : vector<8x32xf32>
    %c56_267 = arith.constant 56 : index
    %c0_268 = arith.constant 0 : index
    %848 = vector.load %arg24[%c56_267, %c0_268] : memref<64x64xf32, #tpu.memory_space<vmem>>, vector<8x32xf32>
    tpu.vector_store %arg24[%c56_267, %c0_268], %823 {strides = array<i32>} : memref<64x64xf32, #tpu.memory_space<vmem>>, vector<8x32xf32>,
    %c0_269 = arith.constant 0 : index
    %c32_270 = arith.constant 32 : index
    %849 = vector.load %arg24[%c0_269, %c32_270] : memref<64x64xf32, #tpu.memory_space<vmem>>, vector<8x32xf32>
    tpu.vector_store %arg24[%c0_269, %c32_270], %847 {strides = array<i32>} : memref<64x64xf32, #tpu.memory_space<vmem>>, vector<8x32xf32>,
    %c0_271 = arith.constant 0 : index
    %c0_272 = arith.constant 0 : index
    %850 = vector.load %arg24[%c0_271, %c0_272] : memref<64x64xf32, #tpu.memory_space<vmem>>, vector<64x64xf32>
    %851 = arith.truncf %850 : vector<64x64xf32> to vector<64x64xbf16>
    %c0_273 = arith.constant 0 : index
    %c0_274 = arith.constant 0 : index
    %852 = vector.load %arg17[%c0_273, %c0_274] : memref<64x32xbf16, #tpu.memory_space<vmem>>, vector<64x32xbf16>
    %cst_275 = arith.constant dense<0.000000e+00> : vector<64x32xf32>
    %853 = tpu.matmul %851, %852, %cst_275 {dimension_numbers = #tpu.dot_dimension_numbers<[1], [0], [0], [1], [0, 0, 1, 1], [], []>} : vector<64x64xbf16>, vector<64x32xbf16>, vector<64x32xf32> -> vector<64x32xf32>
    %c0_276 = arith.constant 0 : index
    %c0_277 = arith.constant 0 : index
    %854 = vector.load %arg18[%c0_276, %c0_277] : memref<1x32xf32, #tpu.memory_space<vmem>>, vector<1x32xf32>
    %855 = vector.broadcast %854 : vector<1x32xf32> to vector<64x32xf32>
    %856 = arith.addf %853, %855 : vector<64x32xf32>
    %857 = arith.truncf %856 : vector<64x32xf32> to vector<64x32xbf16>
    %c0_278 = arith.constant 0 : index
    %c0_279 = arith.constant 0 : index
    %858 = vector.load %arg19[%c0_278, %c0_279] : memref<32x128xbf16, #tpu.memory_space<vmem>>, vector<32x128xbf16>
    %cst_280 = arith.constant dense<0.000000e+00> : vector<64x128xf32>
    %859 = tpu.matmul %857, %858, %cst_280 {dimension_numbers = #tpu.dot_dimension_numbers<[1], [0], [0], [1], [0, 0, 1, 1], [], []>} : vector<64x32xbf16>, vector<32x128xbf16>, vector<64x128xf32> -> vector<64x128xf32>
    %c0_281 = arith.constant 0 : index
    %c0_282 = arith.constant 0 : index
    %860 = vector.load %arg20[%c0_281, %c0_282] : memref<1x128xf32, #tpu.memory_space<vmem>>, vector<1x128xf32>
    %861 = vector.broadcast %860 : vector<1x128xf32> to vector<64x128xf32>
    %862 = arith.addf %859, %861 : vector<64x128xf32>
    %c0_283 = arith.constant 0 : index
    %c0_284 = arith.constant 0 : index
    %863 = vector.load %arg21[%c0_283, %c0_284] : memref<64x128xf32, #tpu.memory_space<vmem>>, vector<64x128xf32>
    tpu.vector_store %arg21[%c0_283, %c0_284], %862 {strides = array<i32>} : memref<64x128xf32, #tpu.memory_space<vmem>>, vector<64x128xf32>,
    return
  }
}

</mosaic_0001>

<llo_original>
// kernel: birnn_denoiser_forward.1
$region0: #{birnn_denoiser_forward.1}
  #allocation0 [shape = 'u32[]', space=smem, size = 0x4, offset = 0x4, fixed_abs, tag = 'smem constant byte address 0x4 - core index']
  #allocation1 [shape = 'u32[144,128]{1,0:T(1,128)}', space=vmem, size = 0x12000, scoped, tag = 'internal scratch']
  #allocation2 [shape = 'f32[64,96]{1,0:T(8,128)}', space=vmem, size = 0x8000, scoped, tag = 'scratch operand']
  #allocation3 [shape = 'f32[64,96]{1,0:T(8,128)}', space=vmem, size = 0x8000, scoped, tag = 'scratch operand']
  #allocation4 [shape = 'f32[64,64]{1,0:T(8,128)}', space=vmem, size = 0x8000, scoped, tag = 'scratch operand']
  %s0 = inlined_call_operand.vmem [shape: bf16[64,3], index: 0, kind: input, shape index: {}]
  %s1 = inlined_call_operand.vmem [shape: bf16[3,96], index: 1, kind: input, shape index: {}]
  %s2 = inlined_call_operand.vmem [shape: f32[1,96], index: 2, kind: input, shape index: {}]
  %s3 = inlined_call_operand.vmem [shape: bf16[32,96], index: 3, kind: input, shape index: {}]
  %s4 = inlined_call_operand.vmem [shape: f32[1,32], index: 4, kind: input, shape index: {}]
  %s5 = inlined_call_operand.vmem [shape: bf16[3,96], index: 5, kind: input, shape index: {}]
  %s6 = inlined_call_operand.vmem [shape: f32[1,96], index: 6, kind: input, shape index: {}]
  %s7 = inlined_call_operand.vmem [shape: bf16[32,96], index: 7, kind: input, shape index: {}]
  %s8 = inlined_call_operand.vmem [shape: f32[1,32], index: 8, kind: input, shape index: {}]
  %s9 = inlined_call_operand.vmem [shape: bf16[64,96], index: 9, kind: input, shape index: {}]
  %s10 = inlined_call_operand.vmem [shape: f32[1,96], index: 10, kind: input, shape index: {}]
  %s11 = inlined_call_operand.vmem [shape: bf16[32,96], index: 11, kind: input, shape index: {}]
  %s12 = inlined_call_operand.vmem [shape: f32[1,32], index: 12, kind: input, shape index: {}]
  %s13 = inlined_call_operand.vmem [shape: bf16[64,96], index: 13, kind: input, shape index: {}]
  %s14 = inlined_call_operand.vmem [shape: f32[1,96], index: 14, kind: input, shape index: {}]
  %s15 = inlined_call_operand.vmem [shape: bf16[32,96], index: 15, kind: input, shape index: {}]
  %s16 = inlined_call_operand.vmem [shape: f32[1,32], index: 16, kind: input, shape index: {}]
  %s17 = inlined_call_operand.vmem [shape: bf16[64,32], index: 17, kind: input, shape index: {}]
  %s18 = inlined_call_operand.vmem [shape: f32[1,32], index: 18, kind: input, shape index: {}]
  %s19 = inlined_call_operand.vmem [shape: bf16[32,128], index: 19, kind: input, shape index: {}]
  %s20 = inlined_call_operand.vmem [shape: f32[1,128], index: 20, kind: input, shape index: {}]
  %s21 = inlined_call_operand.vmem [shape: f32[64,128], index: 21, kind: output, shape index: {}]
  %s22 = sld [smem:[#allocation0]]
  $region94: #{birnn_denoiser_forward.1} parent=0
    _
  %s24 = ssub.s32 1, %s22
  %s25 = scalar_select 0, %s24, %s22
  // Predicated region
  $region2: #{birnn_denoiser_forward.1} parent=0 // pred_check
    _
  $region3: #{birnn_denoiser_forward.1} parent=0 // pred_check_branch
    %27 = sbr.rel (0) target = $region5
  $region4: #{birnn_denoiser_forward.1} parent=0 // pred_region
    _
  $region5: #{birnn_denoiser_forward.1} parent=0 // pred_fallthru
    _
  // Predicated region
  $region6: #{birnn_denoiser_forward.1} parent=0 // pred_check
    _
  $region7: #{birnn_denoiser_forward.1} parent=0 // pred_check_branch
    %29 = sbr.rel (0) target = $region9
  $region8: #{birnn_denoiser_forward.1} parent=0 // pred_region
    _
  $region9: #{birnn_denoiser_forward.1} parent=0 // pred_fallthru
    _
  // Predicated region
  $region10: #{birnn_denoiser_forward.1} parent=0 // pred_check
    _
  $region11: #{birnn_denoiser_forward.1} parent=0 // pred_check_branch
    %31 = sbr.rel (0) target = $region13
  $region12: #{birnn_denoiser_forward.1} parent=0 // pred_region
    _
  $region13: #{birnn_denoiser_forward.1} parent=0 // pred_fallthru
    _
  // Predicated region
  $region14: #{birnn_denoiser_forward.1} parent=0 // pred_check
    _
  $region15: #{birnn_denoiser_forward.1} parent=0 // pred_check_branch
    %33 = sbr.rel (0) target = $region17
  $region16: #{birnn_denoiser_forward.1} parent=0 // pred_region
    _
  $region17: #{birnn_denoiser_forward.1} parent=0 // pred_fallthru
    _
  // Predicated region
  $region18: #{birnn_denoiser_forward.1} parent=0 // pred_check
    _
  $region19: #{birnn_denoiser_forward.1} parent=0 // pred_check_branch
    %35 = sbr.rel (0) target = $region21
  $region20: #{birnn_denoiser_forward.1} parent=0 // pred_region
    _
  $region21: #{birnn_denoiser_forward.1} parent=0 // pred_fallthru
    _
  // Predicated region
  $region22: #{birnn_denoiser_forward.1} parent=0 // pred_check
    _
  $region23: #{birnn_denoiser_forward.1} parent=0 // pred_check_branch
    %37 = sbr.rel (0) target = $region25
  $region24: #{birnn_denoiser_forward.1} parent=0 // pred_region
    _
  $region25: #{birnn_denoiser_forward.1} parent=0 // pred_fallthru
    _
  // Predicated region
  $region26: #{birnn_denoiser_forward.1} parent=0 // pred_check
    _
  $region27: #{birnn_denoiser_forward.1} parent=0 // pred_check_branch
    %39 = sbr.rel (0) target = $region29
  $region28: #{birnn_denoiser_forward.1} parent=0 // pred_region
    _
  $region29: #{birnn_denoiser_forward.1} parent=0 // pred_fallthru
    _
  // Predicated region
  $region30: #{birnn_denoiser_forward.1} parent=0 // pred_check
    _
  $region31: #{birnn_denoiser_forward.1} parent=0 // pred_check_branch
    %41 = sbr.rel (0) target = $region33
  $region32: #{birnn_denoiser_forward.1} parent=0 // pred_region
    _
  $region33: #{birnn_denoiser_forward.1} parent=0 // pred_fallthru
    _
  // Predicated region
  $region34: #{birnn_denoiser_forward.1} parent=0 // pred_check
    _
  $region35: #{birnn_denoiser_forward.1} parent=0 // pred_check_branch
    %43 = sbr.rel (0) target = $region37
  $region36: #{birnn_denoiser_forward.1} parent=0 // pred_region
    _
  $region37: #{birnn_denoiser_forward.1} parent=0 // pred_fallthru
    _
  // Predicated region
  $region38: #{birnn_denoiser_forward.1} parent=0 // pred_check
    _
  $region39: #{birnn_denoiser_forward.1} parent=0 // pred_check_branch
    %45 = sbr.rel (0) target = $region41
  $region40: #{birnn_denoiser_forward.1} parent=0 // pred_region
    _
  $region41: #{birnn_denoiser_forward.1} parent=0 // pred_fallthru
    _
  // Predicated region
  $region42: #{birnn_denoiser_forward.1} parent=0 // pred_check
    _
  $region43: #{birnn_denoiser_forward.1} parent=0 // pred_check_branch
    %47 = sbr.rel (0) target = $region45
  $region44: #{birnn_denoiser_forward.1} parent=0 // pred_region
    _
  $region45: #{birnn_denoiser_forward.1} parent=0 // pred_fallthru
    _
  // Predicated region
  $region46: #{birnn_denoiser_forward.1} parent=0 // pred_check
    _
  $region47: #{birnn_denoiser_forward.1} parent=0 // pred_check_branch
    %49 = sbr.rel (0) target = $region49
  $region48: #{birnn_denoiser_forward.1} parent=0 // pred_region
    _
  $region49: #{birnn_denoiser_forward.1} parent=0 // pred_fallthru
    _
  // Predicated region
  $region50: #{birnn_denoiser_forward.1} parent=0 // pred_check
    _
  $region51: #{birnn_denoiser_forward.1} parent=0 // pred_check_branch
    %51 = sbr.rel (0) target = $region53
  $region52: #{birnn_denoiser_forward.1} parent=0 // pred_region
    _
  $region53: #{birnn_denoiser_forward.1} parent=0 // pred_fallthru
    _
  // Predicated region
  $region54: #{birnn_denoiser_forward.1} parent=0 // pred_check
    _
  $region55: #{birnn_denoiser_forward.1} parent=0 // pred_check_branch
    %53 = sbr.rel (0) target = $region57
  $region56: #{birnn_denoiser_forward.1} parent=0 // pred_region
    _
  $region57: #{birnn_denoiser_forward.1} parent=0 // pred_fallthru
    _
  // Predicated region
  $region58: #{birnn_denoiser_forward.1} parent=0 // pred_check
    _
  $region59: #{birnn_denoiser_forward.1} parent=0 // pred_check_branch
    %55 = sbr.rel (0) target = $region61
  $region60: #{birnn_denoiser_forward.1} parent=0 // pred_region
    _
  $region61: #{birnn_denoiser_forward.1} parent=0 // pred_fallthru
    _
  // Predicated region
  $region62: #{birnn_denoiser_forward.1} parent=0 // pred_check
    _
  $region63: #{birnn_denoiser_forward.1} parent=0 // pred_check_branch
    %57 = sbr.rel (0) target = $region65
  $region64: #{birnn_denoiser_forward.1} parent=0 // pred_region
    _
  $region65: #{birnn_denoiser_forward.1} parent=0 // pred_fallthru
    _
  // Predicated region
  $region66: #{birnn_denoiser_forward.1} parent=0 // pred_check
    _
  $region67: #{birnn_denoiser_forward.1} parent=0 // pred_check_branch
    %59 = sbr.rel (0) target = $region69
  $region68: #{birnn_denoiser_forward.1} parent=0 // pred_region
    _
  $region69: #{birnn_denoiser_forward.1} parent=0 // pred_fallthru
    _
  // Predicated region
  $region70: #{birnn_denoiser_forward.1} parent=0 // pred_check
    _
  $region71: #{birnn_denoiser_forward.1} parent=0 // pred_check_branch
    %61 = sbr.rel (0) target = $region73
  $region72: #{birnn_denoiser_forward.1} parent=0 // pred_region
    _
  $region73: #{birnn_denoiser_forward.1} parent=0 // pred_fallthru
    _
  // Predicated region
  $region74: #{birnn_denoiser_forward.1} parent=0 // pred_check
    _
  $region75: #{birnn_denoiser_forward.1} parent=0 // pred_check_branch
    %63 = sbr.rel (0) target = $region77
  $region76: #{birnn_denoiser_forward.1} parent=0 // pred_region
    _
  $region77: #{birnn_denoiser_forward.1} parent=0 // pred_fallthru
    _
  // Predicated region
  $region78: #{birnn_denoiser_forward.1} parent=0 // pred_check
    _
  $region79: #{birnn_denoiser_forward.1} parent=0 // pred_check_branch
    %65 = sbr.rel (0) target = $region81
  $region80: #{birnn_denoiser_forward.1} parent=0 // pred_region
    _
  $region81: #{birnn_denoiser_forward.1} parent=0 // pred_fallthru
    _
  // Predicated region
  $region82: #{birnn_denoiser_forward.1} parent=0 // pred_check
    _
  $region83: #{birnn_denoiser_forward.1} parent=0 // pred_check_branch
    %67 = sbr.rel (0) target = $region85
  $region84: #{birnn_denoiser_forward.1} parent=0 // pred_region
    _
  $region85: #{birnn_denoiser_forward.1} parent=0 // pred_fallthru
    _
  %v69 = vld [vmem:[%s0] sm:$0xf]
  %v70 = vld [vmem:[%s0 + $0x4] sm:$0xf]
  %v71 = vld [vmem:[%s0 + $0x8] sm:$0xf]
  %v72 = vld [vmem:[%s0 + $0xc] sm:$0xf]
  %v73 = vld [vmem:[%s0 + $0x10] sm:$0xf]
  %v74 = vld [vmem:[%s0 + $0x14] sm:$0xf]
  %v75 = vld [vmem:[%s0 + $0x18] sm:$0xf]
  %v76 = vld [vmem:[%s0 + $0x1c] sm:$0xf]
  %v77 = vld [vmem:[%s1] sm:$0x3]
  %v78 = vld [vmem:[%s2] sm:$0x1]
  %v80 = vlaneseq
  %v81 = vshrl.u32 %v80, 7
  %v82 = vsub.s32 0, %v81
  %v83 = vrot.slane %v78, %v82
  %v93 = vunpack.c.l.b16 %v69
  %v94 = vunpack.c.l.b16 %v70
  %v95 = vunpack.c.l.b16 %v71
  %v96 = vunpack.c.l.b16 %v72
  %v97 = vunpack.c.l.b16 %v73
  %v98 = vunpack.c.l.b16 %v74
  %v99 = vunpack.c.l.b16 %v75
  %v100 = vunpack.c.l.b16 %v76
  %v101 = vpack.c.b16 %v94, %v93
  %v102 = vpack.c.b16 %v96, %v95
  %v103 = vpack.c.b16 %v98, %v97
  %v104 = vpack.c.b16 %v100, %v99
  %vm105 = vcmask 23552
  %v107 = vsel %vm105, %v101, 0
  %v110 = vsel %vm105, %v102, 0
  %v113 = vsel %vm105, %v103, 0
  %v116 = vsel %vm105, %v104, 0
  %vm118 = vcmask 1040384
  %vm119 = vcmask 1041408
  %v120 = vsel %vm118, 4294967295, 65535
  %v121 = vsel %vm119, %v120, 0
  %v123 = vand.u32 %v77, %v121
  %125 = vmatprep.subr.bf16.mxu0 0
  %126 = vmatpush1.bf16.msra.mxu0 %v123
  %127 = vmatprep.subr.bf16.mxu0 0
  %128 = vmatpush1.bf16.msra.mxu0 0
  %129 = vmatprep.subr.bf16.mxu0 0
  %130 = vmatpush1.bf16.msra.mxu0 0
  %131 = vmatprep.subr.bf16.mxu0 0
  %132 = vmatpush1.bf16.msra.mxu0 0
  %133 = vmatprep.subr.bf16.mxu0 0
  %134 = vmatpush1.bf16.msra.mxu0 0
  %135 = vmatprep.subr.bf16.mxu0 0
  %136 = vmatpush1.bf16.msra.mxu0 0
  %137 = vmatprep.subr.bf16.mxu0 0
  %138 = vmatpush1.bf16.msra.mxu0 0
  %139 = vmatprep.subr.bf16.mxu0 0
  %140 = vmatpush1.bf16.msra.mxu0 0
  %141 = vmatprep.subr.bf16.mxu0 0
  %142 = vmatpush1.bf16.msra.mxu0 0
  %143 = vmatprep.subr.bf16.mxu0 0
  %144 = vmatpush1.bf16.msra.mxu0 0
  %145 = vmatprep.subr.bf16.mxu0 0
  %146 = vmatpush1.bf16.msra.mxu0 0
  %147 = vmatprep.subr.bf16.mxu0 0
  %148 = vmatpush1.bf16.msra.mxu0 0
  %149 = vmatprep.subr.bf16.mxu0 0
  %150 = vmatpush1.bf16.msra.mxu0 0
  %151 = vmatprep.subr.bf16.mxu0 0
  %152 = vmatpush1.bf16.msra.mxu0 0
  %153 = vmatprep.subr.bf16.mxu0 0
  %154 = vmatpush1.bf16.msra.mxu0 0
  %155 = vmatprep.subr.bf16.mxu0 0
  %156 = vmatpush1.bf16.msra.mxu0 0
  %157 = vmatprep.mubr.bf16.mxu0 0
  %158 = vmatmul.mubr.bf16.gmra.mrb[0].mxu0 %v107
  %v159 = vpop.f32.mrb[0].mxu0
  %v160 = vadd.f32 %v83, %v159
  %v161 = vpop.f32.mrb[0].mxu0
  %v162 = vpop.f32.mrb[0].mxu0
  %v163 = vadd.f32 %v83, %v162
  %v164 = vpop.f32.mrb[0].mxu0
  %165 = vmatprep.mubr.bf16.mxu0 0
  %166 = vmatmul.mubr.bf16.gmra.mrb[0].mxu0 %v110
  %v167 = vpop.f32.mrb[0].mxu0
  %v168 = vadd.f32 %v83, %v167
  %v169 = vpop.f32.mrb[0].mxu0
  %v170 = vpop.f32.mrb[0].mxu0
  %v171 = vadd.f32 %v83, %v170
  %v172 = vpop.f32.mrb[0].mxu0
  %173 = vmatprep.mubr.bf16.mxu0 0
  %174 = vmatmul.mubr.bf16.gmra.mrb[0].mxu0 %v113
  %v175 = vpop.f32.mrb[0].mxu0
  %v176 = vadd.f32 %v83, %v175
  %v177 = vpop.f32.mrb[0].mxu0
  %v178 = vpop.f32.mrb[0].mxu0
  %v179 = vadd.f32 %v83, %v178
  %v180 = vpop.f32.mrb[0].mxu0
  %181 = vmatprep.mubr.bf16.mxu0 0
  %182 = vmatmul.mubr.bf16.gmra.mrb[0].mxu0 %v116
  %v183 = vpop.f32.mrb[0].mxu0
  %v184 = vadd.f32 %v83, %v183
  %v185 = vpop.f32.mrb[0].mxu0
  %v186 = vpop.f32.mrb[0].mxu0
  %v187 = vadd.f32 %v83, %v186
  %v188 = vpop.f32.mrb[0].mxu0
  %189 = vdwg.mxu0
  %vm190 = vcmask 785408
  %191 = vst.msk [vmem:[#allocation2] sm:$0xff] %vm190, %v160
  %192 = vst.msk [vmem:[#allocation2 + $0x8] sm:$0xff] %vm190, %v163
  %193 = vst.msk [vmem:[#allocation2 + $0x10] sm:$0xff] %vm190, %v168
  %194 = vst.msk [vmem:[#allocation2 + $0x18] sm:$0xff] %vm190, %v171
  %195 = vst.msk [vmem:[#allocation2 + $0x20] sm:$0xff] %vm190, %v176
  %196 = vst.msk [vmem:[#allocation2 + $0x28] sm:$0xff] %vm190, %v179
  %197 = vst.msk [vmem:[#allocation2 + $0x30] sm:$0xff] %vm190, %v184
  %198 = vst.msk [vmem:[#allocation2 + $0x38] sm:$0xff] %vm190, %v187
  %v199 = vld [vmem:[%s0] sm:$0xf]
  %v200 = vld [vmem:[%s0 + $0x4] sm:$0xf]
  %v201 = vld [vmem:[%s0 + $0x8] sm:$0xf]
  %v202 = vld [vmem:[%s0 + $0xc] sm:$0xf]
  %v203 = vld [vmem:[%s0 + $0x10] sm:$0xf]
  %v204 = vld [vmem:[%s0 + $0x14] sm:$0xf]
  %v205 = vld [vmem:[%s0 + $0x18] sm:$0xf]
  %v206 = vld [vmem:[%s0 + $0x1c] sm:$0xf]
  %v207 = vld [vmem:[%s5] sm:$0x3]
  %v208 = vld [vmem:[%s6] sm:$0x1]
  %v210 = vlaneseq
  %v211 = vshrl.u32 %v210, 7
  %v212 = vsub.s32 0, %v211
  %v213 = vrot.slane %v208, %v212
  %v223 = vunpack.c.l.b16 %v199
  %v224 = vunpack.c.l.b16 %v200
  %v225 = vunpack.c.l.b16 %v201
  %v226 = vunpack.c.l.b16 %v202
  %v227 = vunpack.c.l.b16 %v203
  %v228 = vunpack.c.l.b16 %v204
  %v229 = vunpack.c.l.b16 %v205
  %v230 = vunpack.c.l.b16 %v206
  %v231 = vpack.c.b16 %v224, %v223
  %v232 = vpack.c.b16 %v226, %v225
  %v233 = vpack.c.b16 %v228, %v227
  %v234 = vpack.c.b16 %v230, %v229
  %v236 = vsel %vm105, %v231, 0
  %v239 = vsel %vm105, %v232, 0
  %v242 = vsel %vm105, %v233, 0
  %v245 = vsel %vm105, %v234, 0
  %v248 = vand.u32 %v207, %v121
  %250 = vmatprep.subr.bf16.mxu0 0
  %251 = vmatpush1.bf16.msra.mxu0 %v248
  %252 = vmatprep.subr.bf16.mxu0 0
  %253 = vmatpush1.bf16.msra.mxu0 0
  %254 = vmatprep.subr.bf16.mxu0 0
  %255 = vmatpush1.bf16.msra.mxu0 0
  %256 = vmatprep.subr.bf16.mxu0 0
  %257 = vmatpush1.bf16.msra.mxu0 0
  %258 = vmatprep.subr.bf16.mxu0 0
  %259 = vmatpush1.bf16.msra.mxu0 0
  %260 = vmatprep.subr.bf16.mxu0 0
  %261 = vmatpush1.bf16.msra.mxu0 0
  %262 = vmatprep.subr.bf16.mxu0 0
  %263 = vmatpush1.bf16.msra.mxu0 0
  %264 = vmatprep.subr.bf16.mxu0 0
  %265 = vmatpush1.bf16.msra.mxu0 0
  %266 = vmatprep.subr.bf16.mxu0 0
  %267 = vmatpush1.bf16.msra.mxu0 0
  %268 = vmatprep.subr.bf16.mxu0 0
  %269 = vmatpush1.bf16.msra.mxu0 0
  %270 = vmatprep.subr.bf16.mxu0 0
  %271 = vmatpush1.bf16.msra.mxu0 0
  %272 = vmatprep.subr.bf16.mxu0 0
  %273 = vmatpush1.bf16.msra.mxu0 0
  %274 = vmatprep.subr.bf16.mxu0 0
  %275 = vmatpush1.bf16.msra.mxu0 0
  %276 = vmatprep.subr.bf16.mxu0 0
  %277 = vmatpush1.bf16.msra.mxu0 0
  %278 = vmatprep.subr.bf16.mxu0 0
  %279 = vmatpush1.bf16.msra.mxu0 0
  %280 = vmatprep.subr.bf16.mxu0 0
  %281 = vmatpush1.bf16.msra.mxu0 0
  %282 = vmatprep.mubr.bf16.mxu0 0
  %283 = vmatmul.mubr.bf16.gmra.mrb[0].mxu0 %v236
  %v284 = vpop.f32.mrb[0].mxu0
  %v285 = vadd.f32 %v213, %v284
  %v286 = vpop.f32.mrb[0].mxu0
  %v287 = vpop.f32.mrb[0].mxu0
  %v288 = vadd.f32 %v213, %v287
  %v289 = vpop.f32.mrb[0].mxu0
  %290 = vmatprep.mubr.bf16.mxu0 0
  %291 = vmatmul.mubr.bf16.gmra.mrb[0].mxu0 %v239
  %v292 = vpop.f32.mrb[0].mxu0
  %v293 = vadd.f32 %v213, %v292
  %v294 = vpop.f32.mrb[0].mxu0
  %v295 = vpop.f32.mrb[0].mxu0
  %v296 = vadd.f32 %v213, %v295
  %v297 = vpop.f32.mrb[0].mxu0
  %298 = vmatprep.mubr.bf16.mxu0 0
  %299 = vmatmul.mubr.bf16.gmra.mrb[0].mxu0 %v242
  %v300 = vpop.f32.mrb[0].mxu0
  %v301 = vadd.f32 %v213, %v300
  %v302 = vpop.f32.mrb[0].mxu0
  %v303 = vpop.f32.mrb[0].mxu0
  %v304 = vadd.f32 %v213, %v303
  %v305 = vpop.f32.mrb[0].mxu0
  %306 = vmatprep.mubr.bf16.mxu0 0
  %307 = vmatmul.mubr.bf16.gmra.mrb[0].mxu0 %v245
  %v308 = vpop.f32.mrb[0].mxu0
  %v309 = vadd.f32 %v213, %v308
  %v310 = vpop.f32.mrb[0].mxu0
  %v311 = vpop.f32.mrb[0].mxu0
  %v312 = vadd.f32 %v213, %v311
  %v313 = vpop.f32.mrb[0].mxu0
  %314 = vdwg.mxu0
  %315 = vst.msk [vmem:[#allocation3] sm:$0xff] %vm190, %v285
  %316 = vst.msk [vmem:[#allocation3 + $0x8] sm:$0xff] %vm190, %v288
  %317 = vst.msk [vmem:[#allocation3 + $0x10] sm:$0xff] %vm190, %v293
  %318 = vst.msk [vmem:[#allocation3 + $0x18] sm:$0xff] %vm190, %v296
  %319 = vst.msk [vmem:[#allocation3 + $0x20] sm:$0xff] %vm190, %v301
  %320 = vst.msk [vmem:[#allocation3 + $0x28] sm:$0xff] %vm190, %v304
  %321 = vst.msk [vmem:[#allocation3 + $0x30] sm:$0xff] %vm190, %v309
  %322 = vst.msk [vmem:[#allocation3 + $0x38] sm:$0xff] %vm190, %v312
  %v323 = vld [vmem:[%s3] sm:$0xf]
  %v324 = vld [vmem:[%s3 + $0x4] sm:$0xf]
  %v325 = vld [vmem:[%s3 + $0x8] sm:$0xf]
  %v326 = vld [vmem:[%s3 + $0xc] sm:$0xf]
  %v327 = vld [vmem:[%s7] sm:$0xf]
  %v328 = vld [vmem:[%s7 + $0x4] sm:$0xf]
  %v329 = vld [vmem:[%s7 + $0x8] sm:$0xf]
  %v330 = vld [vmem:[%s7 + $0xc] sm:$0xf]
  %v331 = vld [vmem:[%s4] sm:$0x1]
  %v333 = vlaneseq
  %v334 = vshrl.u32 %v333, 7
  %v335 = vsub.s32 0, %v334
  %v336 = vrot.slane %v331, %v335
  %v337 = vld [vmem:[%s8] sm:$0x1]
  %v339 = vlaneseq
  %v340 = vshrl.u32 %v339, 7
  %v341 = vsub.s32 0, %v340
  %v342 = vrot.slane %v337, %v341
  %v343 = vld [vmem:[#allocation2] sm:$0xff]
  %v348 = vunpack.c.l.b16 %v323
  %v349 = vunpack.c.l.b16 %v324
  %v350 = vunpack.c.l.b16 %v325
  %v351 = vunpack.c.l.b16 %v326
  %v352 = vpack.c.b16 %v349, %v348
  %v353 = vpack.c.b16 %v351, %v350
  %vm356 = vcmask 261120
  %v358 = vsel %vm356, 0, 0
  %360 = vmatprep.subr.bf16.mxu0 0
  %361 = vmatpush1.bf16.msra.mxu0 %v352
  %362 = vmatprep.subr.bf16.mxu0 0
  %363 = vmatpush1.bf16.msra.mxu0 %v353
  %364 = vmatprep.subr.bf16.mxu0 0
  %365 = vmatpush1.bf16.msra.mxu0 0
  %366 = vmatprep.subr.bf16.mxu0 0
  %367 = vmatpush1.bf16.msra.mxu0 0
  %368 = vmatprep.subr.bf16.mxu0 0
  %369 = vmatpush1.bf16.msra.mxu0 0
  %370 = vmatprep.subr.bf16.mxu0 0
  %371 = vmatpush1.bf16.msra.mxu0 0
  %372 = vmatprep.subr.bf16.mxu0 0
  %373 = vmatpush1.bf16.msra.mxu0 0
  %374 = vmatprep.subr.bf16.mxu0 0
  %375 = vmatpush1.bf16.msra.mxu0 0
  %376 = vmatprep.subr.bf16.mxu0 0
  %377 = vmatpush1.bf16.msra.mxu0 0
  %378 = vmatprep.subr.bf16.mxu0 0
  %379 = vmatpush1.bf16.msra.mxu0 0
  %380 = vmatprep.subr.bf16.mxu0 0
  %381 = vmatpush1.bf16.msra.mxu0 0
  %382 = vmatprep.subr.bf16.mxu0 0
  %383 = vmatpush1.bf16.msra.mxu0 0
  %384 = vmatprep.subr.bf16.mxu0 0
  %385 = vmatpush1.bf16.msra.mxu0 0
  %386 = vmatprep.subr.bf16.mxu0 0
  %387 = vmatpush1.bf16.msra.mxu0 0
  %388 = vmatprep.subr.bf16.mxu0 0
  %389 = vmatpush1.bf16.msra.mxu0 0
  %390 = vmatprep.subr.bf16.mxu0 0
  %391 = vmatpush1.bf16.msra.mxu0 0
  %392 = vmatprep.mubr.bf16.mxu0 0
  %393 = vmatmul.mubr.bf16.gmra.mrb[0].mxu0 %v358
  %v394 = vpop.f32.mrb[0].mxu0
  %v395 = vadd.f32 0.0, %v394
  %v396 = vpop.f32.mrb[0].mxu0
  %v397 = vpop.f32.mrb[0].mxu0
  %v398 = vpop.f32.mrb[0].mxu0
  %399 = vdwg.mxu0
  %v400 = vadd.f32 %v343, %v395
  %v401 = vxor.u32 %v400, 2147483648
  %v402 = vmul.f32 %v401, 1.442695
  %v403 = vpow.pop %v402
  %v404 = vadd.f32 %v403, 1.0
  %v405 = vrcp.pop %v404
  %v406 = vmul.f32 1.0, %v405
  %407 = vrot.lane.b32.xlu0 %v336, 64
  %v408 = vpop.permute.xlu0 %407
  %v410 = vadd.f32 %v395, %v408
  %412 = vrot.lane.b32.xlu0 %v410, 64
  %v413 = vpop.permute.xlu0 %412
  %v415 = vmul.f32 %v406, %v413
  %417 = vrot.lane.b32.xlu0 %v415, 64
  %v418 = vpop.permute.xlu0 %417
  %v420 = vadd.f32 %v343, %v418
  %v421 = vtanh.pop %v420
  %v422 = vsub.f32 1.0, %v406
  %424 = vrot.lane.b32.xlu0 %v421, 96
  %v425 = vpop.permute.xlu0 %424
  %v427 = vmul.f32 %v422, %v425
  %v428 = vmul.f32 %v406, 0.0
  %v429 = vadd.f32 %v427, %v428
  %v430 = vld [vmem:[#allocation3 + $0x38] sm:$0xff]
  %v435 = vunpack.c.l.b16 %v327
  %v436 = vunpack.c.l.b16 %v328
  %v437 = vunpack.c.l.b16 %v329
  %v438 = vunpack.c.l.b16 %v330
  %v439 = vpack.c.b16 %v436, %v435
  %v440 = vpack.c.b16 %v438, %v437
  %443 = vmatprep.subr.bf16.mxu0 0
  %444 = vmatpush1.bf16.msra.mxu0 %v439
  %445 = vmatprep.subr.bf16.mxu0 0
  %446 = vmatpush1.bf16.msra.mxu0 %v440
  %447 = vmatprep.subr.bf16.mxu0 0
  %448 = vmatpush1.bf16.msra.mxu0 0
  %449 = vmatprep.subr.bf16.mxu0 0
  %450 = vmatpush1.bf16.msra.mxu0 0
  %451 = vmatprep.subr.bf16.mxu0 0
  %452 = vmatpush1.bf16.msra.mxu0 0
  %453 = vmatprep.subr.bf16.mxu0 0
  %454 = vmatpush1.bf16.msra.mxu0 0
  %455 = vmatprep.subr.bf16.mxu0 0
  %456 = vmatpush1.bf16.msra.mxu0 0
  %457 = vmatprep.subr.bf16.mxu0 0
  %458 = vmatpush1.bf16.msra.mxu0 0
  %459 = vmatprep.subr.bf16.mxu0 0
  %460 = vmatpush1.bf16.msra.mxu0 0
  %461 = vmatprep.subr.bf16.mxu0 0
  %462 = vmatpush1.bf16.msra.mxu0 0
  %463 = vmatprep.subr.bf16.mxu0 0
  %464 = vmatpush1.bf16.msra.mxu0 0
  %465 = vmatprep.subr.bf16.mxu0 0
  %466 = vmatpush1.bf16.msra.mxu0 0
  %467 = vmatprep.subr.bf16.mxu0 0
  %468 = vmatpush1.bf16.msra.mxu0 0
  %469 = vmatprep.subr.bf16.mxu0 0
  %470 = vmatpush1.bf16.msra.mxu0 0
  %471 = vmatprep.subr.bf16.mxu0 0
  %472 = vmatpush1.bf16.msra.mxu0 0
  %473 = vmatprep.subr.bf16.mxu0 0
  %474 = vmatpush1.bf16.msra.mxu0 0
  %475 = vmatprep.mubr.bf16.mxu0 0
  %476 = vmatmul.mubr.bf16.gmra.mrb[0].mxu0 %v358
  %v477 = vpop.f32.mrb[0].mxu0
  %v478 = vadd.f32 0.0, %v477
  %v479 = vpop.f32.mrb[0].mxu0
  %v480 = vpop.f32.mrb[0].mxu0
  %v481 = vpop.f32.mrb[0].mxu0
  %482 = vdwg.mxu0
  %v483 = vadd.f32 %v430, %v478
  %v484 = vxor.u32 %v483, 2147483648
  %v485 = vmul.f32 %v484, 1.442695
  %v486 = vpow.pop %v485
  %v487 = vadd.f32 %v486, 1.0
  %v488 = vrcp.pop %v487
  %v489 = vmul.f32 1.0, %v488
  %490 = vrot.lane.b32.xlu0 %v342, 64
  %v491 = vpop.permute.xlu0 %490
  %v493 = vadd.f32 %v478, %v491
  %495 = vrot.lane.b32.xlu0 %v493, 64
  %v496 = vpop.permute.xlu0 %495
  %v498 = vmul.f32 %v489, %v496
  %500 = vrot.lane.b32.xlu0 %v498, 64
  %v501 = vpop.permute.xlu0 %500
  %v503 = vadd.f32 %v430, %v501
  %v504 = vtanh.pop %v503
  %v505 = vsub.f32 1.0, %v489
  %507 = vrot.lane.b32.xlu0 %v504, 96
  %v508 = vpop.permute.xlu0 %507
  %v510 = vmul.f32 %v505, %v508
  %v511 = vmul.f32 %v489, 0.0
  %v512 = vadd.f32 %v510, %v511
  %514 = vrot.lane.b32.xlu0 %v429, 96
  %v515 = vpop.permute.xlu0 %514
  %517 = vst.msk [vmem:[#allocation4] sm:$0xff] %vm356, %v515
  %vm518 = vcmask 523520
  %519 = vst.msk [vmem:[#allocation4 + $0x38] sm:$0xff] %vm518, %v512
  %v520 = vld [vmem:[#allocation2 + $0x8] sm:$0xff]
  %v521 = vpack.c.bf16 %v429, %v429
  %523 = vrot.lane.b32.xlu0 %v521, 96
  %v524 = vpop.permute.xlu0 %523
  %v526 = vsel %vm356, %v524, 0
  %528 = vmatprep.subr.bf16.mxu0 0
  %529 = vmatpush1.bf16.msra.mxu0 %v352
  %530 = vmatprep.subr.bf16.mxu0 0
  %531 = vmatpush1.bf16.msra.mxu0 %v353
  %532 = vmatprep.subr.bf16.mxu0 0
  %533 = vmatpush1.bf16.msra.mxu0 0
  %534 = vmatprep.subr.bf16.mxu0 0
  %535 = vmatpush1.bf16.msra.mxu0 0
  %536 = vmatprep.subr.bf16.mxu0 0
  %537 = vmatpush1.bf16.msra.mxu0 0
  %538 = vmatprep.subr.bf16.mxu0 0
  %539 = vmatpush1.bf16.msra.mxu0 0
  %540 = vmatprep.subr.bf16.mxu0 0
  %541 = vmatpush1.bf16.msra.mxu0 0
  %542 = vmatprep.subr.bf16.mxu0 0
  %543 = vmatpush1.bf16.msra.mxu0 0
  %544 = vmatprep.subr.bf16.mxu0 0
  %545 = vmatpush1.bf16.msra.mxu0 0
  %546 = vmatprep.subr.bf16.mxu0 0
  %547 = vmatpush1.bf16.msra.mxu0 0
  %548 = vmatprep.subr.bf16.mxu0 0
  %549 = vmatpush1.bf16.msra.mxu0 0
  %550 = vmatprep.subr.bf16.mxu0 0
  %551 = vmatpush1.bf16.msra.mxu0 0
  %552 = vmatprep.subr.bf16.mxu0 0
  %553 = vmatpush1.bf16.msra.mxu0 0
  %554 = vmatprep.subr.bf16.mxu0 0
  %555 = vmatpush1.bf16.msra.mxu0 0
  %556 = vmatprep.subr.bf16.mxu0 0
  %557 = vmatpush1.bf16.msra.mxu0 0
  %558 = vmatprep.subr.bf16.mxu0 0
  %559 = vmatpush1.bf16.msra.mxu0 0
  %560 = vmatprep.mubr.bf16.mxu0 0
  %561 = vmatmul.mubr.bf16.gmra.mrb[0].mxu0 %v526
  %v562 = vpop.f32.mrb[0].mxu0
  %v563 = vadd.f32 0.0, %v562
  %v564 = vpop.f32.mrb[0].mxu0
  %v565 = vpop.f32.mrb[0].mxu0
  %v566 = vpop.f32.mrb[0].mxu0
  %567 = vdwg.mxu0
  %v568 = vadd.f32 %v520, %v563
  %v569 = vxor.u32 %v568, 2147483648
  %v570 = vmul.f32 %v569, 1.442695
  %v571 = vpow.pop %v570
  %v572 = vadd.f32 %v571, 1.0
  %v573 = vrcp.pop %v572
  %v574 = vmul.f32 1.0, %v573
  %v575 = vadd.f32 %v563, %v408
  %577 = vrot.lane.b32.xlu0 %v575, 64
  %v578 = vpop.permute.xlu0 %577
  %v580 = vmul.f32 %v574, %v578
  %582 = vrot.lane.b32.xlu0 %v580, 64
  %v583 = vpop.permute.xlu0 %582
  %v585 = vadd.f32 %v520, %v583
  %v586 = vtanh.pop %v585
  %v587 = vsub.f32 1.0, %v574
  %589 = vrot.lane.b32.xlu0 %v586, 96
  %v590 = vpop.permute.xlu0 %589
  %v592 = vmul.f32 %v587, %v590
  %v593 = vmul.f32 %v574, %v429
  %v594 = vadd.f32 %v592, %v593
  %v595 = vld [vmem:[#allocation3 + $0x30] sm:$0xff]
  %v596 = vpack.c.bf16 %v512, %v512
  %598 = vrot.lane.b32.xlu0 %v596, 96
  %v599 = vpop.permute.xlu0 %598
  %v601 = vsel %vm356, %v599, 0
  %603 = vmatprep.subr.bf16.mxu0 0
  %604 = vmatpush1.bf16.msra.mxu0 %v439
  %605 = vmatprep.subr.bf16.mxu0 0
  %606 = vmatpush1.bf16.msra.mxu0 %v440
  %607 = vmatprep.subr.bf16.mxu0 0
  %608 = vmatpush1.bf16.msra.mxu0 0
  %609 = vmatprep.subr.bf16.mxu0 0
  %610 = vmatpush1.bf16.msra.mxu0 0
  %611 = vmatprep.subr.bf16.mxu0 0
  %612 = vmatpush1.bf16.msra.mxu0 0
  %613 = vmatprep.subr.bf16.mxu0 0
  %614 = vmatpush1.bf16.msra.mxu0 0
  %615 = vmatprep.subr.bf16.mxu0 0
  %616 = vmatpush1.bf16.msra.mxu0 0
  %617 = vmatprep.subr.bf16.mxu0 0
  %618 = vmatpush1.bf16.msra.mxu0 0
  %619 = vmatprep.subr.bf16.mxu0 0
  %620 = vmatpush1.bf16.msra.mxu0 0
  %621 = vmatprep.subr.bf16.mxu0 0
  %622 = vmatpush1.bf16.msra.mxu0 0
  %623 = vmatprep.subr.bf16.mxu0 0
  %624 = vmatpush1.bf16.msra.mxu0 0
  %625 = vmatprep.subr.bf16.mxu0 0
  %626 = vmatpush1.bf16.msra.mxu0 0
  %627 = vmatprep.subr.bf16.mxu0 0
  %628 = vmatpush1.bf16.msra.mxu0 0
  %629 = vmatprep.subr.bf16.mxu0 0
  %630 = vmatpush1.bf16.msra.mxu0 0
  %631 = vmatprep.subr.bf16.mxu0 0
  %632 = vmatpush1.bf16.msra.mxu0 0
  %633 = vmatprep.subr.bf16.mxu0 0
  %634 = vmatpush1.bf16.msra.mxu0 0
  %635 = vmatprep.mubr.bf16.mxu0 0
  %636 = vmatmul.mubr.bf16.gmra.mrb[0].mxu0 %v601
  %v637 = vpop.f32.mrb[0].mxu0
  %v638 = vadd.f32 0.0, %v637
  %v639 = vpop.f32.mrb[0].mxu0
  %v640 = vpop.f32.mrb[0].mxu0
  %v641 = vpop.f32.mrb[0].mxu0
  %642 = vdwg.mxu0
  %v643 = vadd.f32 %v595, %v638
  %v644 = vxor.u32 %v643, 2147483648
  %v645 = vmul.f32 %v644, 1.442695
  %v646 = vpow.pop %v645
  %v647 = vadd.f32 %v646, 1.0
  %v648 = vrcp.pop %v647
  %v649 = vmul.f32 1.0, %v648
  %v650 = vadd.f32 %v638, %v491
  %652 = vrot.lane.b32.xlu0 %v650, 64
  %v653 = vpop.permute.xlu0 %652
  %v655 = vmul.f32 %v649, %v653
  %657 = vrot.lane.b32.xlu0 %v655, 64
  %v658 = vpop.permute.xlu0 %657
  %v660 = vadd.f32 %v595, %v658
  %v661 = vtanh.pop %v660
  %v662 = vsub.f32 1.0, %v649
  %664 = vrot.lane.b32.xlu0 %v661, 96
  %v665 = vpop.permute.xlu0 %664
  %v667 = vmul.f32 %v662, %v665
  %v668 = vmul.f32 %v649, %v512
  %v669 = vadd.f32 %v667, %v668
  %671 = vrot.lane.b32.xlu0 %v594, 96
  %v672 = vpop.permute.xlu0 %671
  %674 = vst.msk [vmem:[#allocation4 + $0x8] sm:$0xff] %vm356, %v672
  %675 = vst.msk [vmem:[#allocation4 + $0x30] sm:$0xff] %vm518, %v669
  %v676 = vld [vmem:[#allocation2 + $0x10] sm:$0xff]
  %v677 = vpack.c.bf16 %v594, %v594
  %679 = vrot.lane.b32.xlu0 %v677, 96
  %v680 = vpop.permute.xlu0 %679
  %v682 = vsel %vm356, %v680, 0
  %684 = vmatprep.subr.bf16.mxu0 0
  %685 = vmatpush1.bf16.msra.mxu0 %v352
  %686 = vmatprep.subr.bf16.mxu0 0
  %687 = vmatpush1.bf16.msra.mxu0 %v353
  %688 = vmatprep.subr.bf16.mxu0 0
  %689 = vmatpush1.bf16.msra.mxu0 0
  %690 = vmatprep.subr.bf16.mxu0 0
  %691 = vmatpush1.bf16.msra.mxu0 0
  %692 = vmatprep.subr.bf16.mxu0 0
  %693 = vmatpush1.bf16.msra.mxu0 0
  %694 = vmatprep.subr.bf16.mxu0 0
  %695 = vmatpush1.bf16.msra.mxu0 0
  %696 = vmatprep.subr.bf16.mxu0 0
  %697 = vmatpush1.bf16.msra.mxu0 0
  %698 = vmatprep.subr.bf16.mxu0 0
  %699 = vmatpush1.bf16.msra.mxu0 0
  %700 = vmatprep.subr.bf16.mxu0 0
  %701 = vmatpush1.bf16.msra.mxu0 0
  %702 = vmatprep.subr.bf16.mxu0 0
  %703 = vmatpush1.bf16.msra.mxu0 0
  %704 = vmatprep.subr.bf16.mxu0 0
  %705 = vmatpush1.bf16.msra.mxu0 0
  %706 = vmatprep.subr.bf16.mxu0 0
  %707 = vmatpush1.bf16.msra.mxu0 0
  %708 = vmatprep.subr.bf16.mxu0 0
  %709 = vmatpush1.bf16.msra.mxu0 0
  %710 = vmatprep.subr.bf16.mxu0 0
  %711 = vmatpush1.bf16.msra.mxu0 0
  %712 = vmatprep.subr.bf16.mxu0 0
  %713 = vmatpush1.bf16.msra.mxu0 0
  %714 = vmatprep.subr.bf16.mxu0 0
  %715 = vmatpush1.bf16.msra.mxu0 0
  %716 = vmatprep.mubr.bf16.mxu0 0
  %717 = vmatmul.mubr.bf16.gmra.mrb[0].mxu0 %v682
  %v718 = vpop.f32.mrb[0].mxu0
  %v719 = vadd.f32 0.0, %v718
  %v720 = vpop.f32.mrb[0].mxu0
  %v721 = vpop.f32.mrb[0].mxu0
  %v722 = vpop.f32.mrb[0].mxu0
  %723 = vdwg.mxu0
  %v724 = vadd.f32 %v676, %v719
  %v725 = vxor.u32 %v724, 2147483648
  %v726 = vmul.f32 %v725, 1.442695
  %v727 = vpow.pop %v726
  %v728 = vadd.f32 %v727, 1.0
  %v729 = vrcp.pop %v728
  %v730 = vmul.f32 1.0, %v729
  %v731 = vadd.f32 %v719, %v408
  %733 = vrot.lane.b32.xlu0 %v731, 64
  %v734 = vpop.permute.xlu0 %733
  %v736 = vmul.f32 %v730, %v734
  %738 = vrot.lane.b32.xlu0 %v736, 64
  %v739 = vpop.permute.xlu0 %738
  %v741 = vadd.f32 %v676, %v739
  %v742 = vtanh.pop %v741
  %v743 = vsub.f32 1.0, %v730
  %745 = vrot.lane.b32.xlu0 %v742, 96
  %v746 = vpop.permute.xlu0 %745
  %v748 = vmul.f32 %v743, %v746
  %v749 = vmul.f32 %v730, %v594
  %v750 = vadd.f32 %v748, %v749
  %v751 = vld [vmem:[#allocation3 + $0x28] sm:$0xff]
  %v752 = vpack.c.bf16 %v669, %v669
  %754 = vrot.lane.b32.xlu0 %v752, 96
  %v755 = vpop.permute.xlu0 %754
  %v757 = vsel %vm356, %v755, 0
  %759 = vmatprep.subr.bf16.mxu0 0
  %760 = vmatpush1.bf16.msra.mxu0 %v439
  %761 = vmatprep.subr.bf16.mxu0 0
  %762 = vmatpush1.bf16.msra.mxu0 %v440
  %763 = vmatprep.subr.bf16.mxu0 0
  %764 = vmatpush1.bf16.msra.mxu0 0
  %765 = vmatprep.subr.bf16.mxu0 0
  %766 = vmatpush1.bf16.msra.mxu0 0
  %767 = vmatprep.subr.bf16.mxu0 0
  %768 = vmatpush1.bf16.msra.mxu0 0
  %769 = vmatprep.subr.bf16.mxu0 0
  %770 = vmatpush1.bf16.msra.mxu0 0
  %771 = vmatprep.subr.bf16.mxu0 0
  %772 = vmatpush1.bf16.msra.mxu0 0
  %773 = vmatprep.subr.bf16.mxu0 0
  %774 = vmatpush1.bf16.msra.mxu0 0
  %775 = vmatprep.subr.bf16.mxu0 0
  %776 = vmatpush1.bf16.msra.mxu0 0
  %777 = vmatprep.subr.bf16.mxu0 0
  %778 = vmatpush1.bf16.msra.mxu0 0
  %779 = vmatprep.subr.bf16.mxu0 0
  %780 = vmatpush1.bf16.msra.mxu0 0
  %781 = vmatprep.subr.bf16.mxu0 0
  %782 = vmatpush1.bf16.msra.mxu0 0
  %783 = vmatprep.subr.bf16.mxu0 0
  %784 = vmatpush1.bf16.msra.mxu0 0
  %785 = vmatprep.subr.bf16.mxu0 0
  %786 = vmatpush1.bf16.msra.mxu0 0
  %787 = vmatprep.subr.bf16.mxu0 0
  %788 = vmatpush1.bf16.msra.mxu0 0
  %789 = vmatprep.subr.bf16.mxu0 0
  %790 = vmatpush1.bf16.msra.mxu0 0
  %791 = vmatprep.mubr.bf16.mxu0 0
  %792 = vmatmul.mubr.bf16.gmra.mrb[0].mxu0 %v757
  %v793 = vpop.f32.mrb[0].mxu0
  %v794 = vadd.f32 0.0, %v793
  %v795 = vpop.f32.mrb[0].mxu0
  %v796 = vpop.f32.mrb[0].mxu0
  %v797 = vpop.f32.mrb[0].mxu0
  %798 = vdwg.mxu0
  %v799 = vadd.f32 %v751, %v794
  %v800 = vxor.u32 %v799, 2147483648
  %v801 = vmul.f32 %v800, 1.442695
  %v802 = vpow.pop %v801
  %v803 = vadd.f32 %v802, 1.0
  %v804 = vrcp.pop %v803
  %v805 = vmul.f32 1.0, %v804
  %v806 = vadd.f32 %v794, %v491
  %808 = vrot.lane.b32.xlu0 %v806, 64
  %v809 = vpop.permute.xlu0 %808
  %v811 = vmul.f32 %v805, %v809
  %813 = vrot.lane.b32.xlu0 %v811, 64
  %v814 = vpop.permute.xlu0 %813
  %v816 = vadd.f32 %v751, %v814
  %v817 = vtanh.pop %v816
  %v818 = vsub.f32 1.0, %v805
  %820 = vrot.lane.b32.xlu0 %v817, 96
  %v821 = vpop.permute.xlu0 %820
  %v823 = vmul.f32 %v818, %v821
  %v824 = vmul.f32 %v805, %v669
  %v825 = vadd.f32 %v823, %v824
  %827 = vrot.lane.b32.xlu0 %v750, 96
  %v828 = vpop.permute.xlu0 %827
  %830 = vst.msk [vmem:[#allocation4 + $0x10] sm:$0xff] %vm356, %v828
  %831 = vst.msk [vmem:[#allocation4 + $0x28] sm:$0xff] %vm518, %v825
  %v832 = vld [vmem:[#allocation2 + $0x18] sm:$0xff]
  %v833 = vpack.c.bf16 %v750, %v750
  %835 = vrot.lane.b32.xlu0 %v833, 96
  %v836 = vpop.permute.xlu0 %835
  %v838 = vsel %vm356, %v836, 0
  %840 = vmatprep.subr.bf16.mxu0 0
  %841 = vmatpush1.bf16.msra.mxu0 %v352
  %842 = vmatprep.subr.bf16.mxu0 0
  %843 = vmatpush1.bf16.msra.mxu0 %v353
  %844 = vmatprep.subr.bf16.mxu0 0
  %845 = vmatpush1.bf16.msra.mxu0 0
  %846 = vmatprep.subr.bf16.mxu0 0
  %847 = vmatpush1.bf16.msra.mxu0 0
  %848 = vmatprep.subr.bf16.mxu0 0
  %849 = vmatpush1.bf16.msra.mxu0 0
  %850 = vmatprep.subr.bf16.mxu0 0
  %851 = vmatpush1.bf16.msra.mxu0 0
  %852 = vmatprep.subr.bf16.mxu0 0
  %853 = vmatpush1.bf16.msra.mxu0 0
  %854 = vmatprep.subr.bf16.mxu0 0
  %855 = vmatpush1.bf16.msra.mxu0 0
  %856 = vmatprep.subr.bf16.mxu0 0
  %857 = vmatpush1.bf16.msra.mxu0 0
  %858 = vmatprep.subr.bf16.mxu0 0
  %859 = vmatpush1.bf16.msra.mxu0 0
  %860 = vmatprep.subr.bf16.mxu0 0
  %861 = vmatpush1.bf16.msra.mxu0 0
  %862 = vmatprep.subr.bf16.mxu0 0
  %863 = vmatpush1.bf16.msra.mxu0 0
  %864 = vmatprep.subr.bf16.mxu0 0
  %865 = vmatpush1.bf16.msra.mxu0 0
  %866 = vmatprep.subr.bf16.mxu0 0
  %867 = vmatpush1.bf16.msra.mxu0 0
  %868 = vmatprep.subr.bf16.mxu0 0
  %869 = vmatpush1.bf16.msra.mxu0 0
  %870 = vmatprep.subr.bf16.mxu0 0
  %871 = vmatpush1.bf16.msra.mxu0 0
  %872 = vmatprep.mubr.bf16.mxu0 0
  %873 = vmatmul.mubr.bf16.gmra.mrb[0].mxu0 %v838
  %v874 = vpop.f32.mrb[0].mxu0
  %v875 = vadd.f32 0.0, %v874
  %v876 = vpop.f32.mrb[0].mxu0
  %v877 = vpop.f32.mrb[0].mxu0
  %v878 = vpop.f32.mrb[0].mxu0
  %879 = vdwg.mxu0
  %v880 = vadd.f32 %v832, %v875
  %v881 = vxor.u32 %v880, 2147483648
  %v882 = vmul.f32 %v881, 1.442695
  %v883 = vpow.pop %v882
  %v884 = vadd.f32 %v883, 1.0
  %v885 = vrcp.pop %v884
  %v886 = vmul.f32 1.0, %v885
  %v887 = vadd.f32 %v875, %v408
  %889 = vrot.lane.b32.xlu0 %v887, 64
  %v890 = vpop.permute.xlu0 %889
  %v892 = vmul.f32 %v886, %v890
  %894 = vrot.lane.b32.xlu0 %v892, 64
  %v895 = vpop.permute.xlu0 %894
  %v897 = vadd.f32 %v832, %v895
  %v898 = vtanh.pop %v897
  %v899 = vsub.f32 1.0, %v886
  %901 = vrot.lane.b32.xlu0 %v898, 96
  %v902 = vpop.permute.xlu0 %901
  %v904 = vmul.f32 %v899, %v902
  %v905 = vmul.f32 %v886, %v750
  %v906 = vadd.f32 %v904, %v905
  %v907 = vld [vmem:[#allocation3 + $0x20] sm:$0xff]
  %v908 = vpack.c.bf16 %v825, %v825
  %910 = vrot.lane.b32.xlu0 %v908, 96
  %v911 = vpop.permute.xlu0 %910
  %v913 = vsel %vm356, %v911, 0
  %915 = vmatprep.subr.bf16.mxu0 0
  %916 = vmatpush1.bf16.msra.mxu0 %v439
  %917 = vmatprep.subr.bf16.mxu0 0
  %918 = vmatpush1.bf16.msra.mxu0 %v440
  %919 = vmatprep.subr.bf16.mxu0 0
  %920 = vmatpush1.bf16.msra.mxu0 0
  %921 = vmatprep.subr.bf16.mxu0 0
  %922 = vmatpush1.bf16.msra.mxu0 0
  %923 = vmatprep.subr.bf16.mxu0 0
  %924 = vmatpush1.bf16.msra.mxu0 0
  %925 = vmatprep.subr.bf16.mxu0 0
  %926 = vmatpush1.bf16.msra.mxu0 0
  %927 = vmatprep.subr.bf16.mxu0 0
  %928 = vmatpush1.bf16.msra.mxu0 0
  %929 = vmatprep.subr.bf16.mxu0 0
  %930 = vmatpush1.bf16.msra.mxu0 0
  %931 = vmatprep.subr.bf16.mxu0 0
  %932 = vmatpush1.bf16.msra.mxu0 0
  %933 = vmatprep.subr.bf16.mxu0 0
  %934 = vmatpush1.bf16.msra.mxu0 0
  %935 = vmatprep.subr.bf16.mxu0 0
  %936 = vmatpush1.bf16.msra.mxu0 0
  %937 = vmatprep.subr.bf16.mxu0 0
  %938 = vmatpush1.bf16.msra.mxu0 0
  %939 = vmatprep.subr.bf16.mxu0 0
  %940 = vmatpush1.bf16.msra.mxu0 0
  %941 = vmatprep.subr.bf16.mxu0 0
  %942 = vmatpush1.bf16.msra.mxu0 0
  %943 = vmatprep.subr.bf16.mxu0 0
  %944 = vmatpush1.bf16.msra.mxu0 0
  %945 = vmatprep.subr.bf16.mxu0 0
  %946 = vmatpush1.bf16.msra.mxu0 0
  %947 = vmatprep.mubr.bf16.mxu0 0
  %948 = vmatmul.mubr.bf16.gmra.mrb[0].mxu0 %v913
  %v949 = vpop.f32.mrb[0].mxu0
  %v950 = vadd.f32 0.0, %v949
  %v951 = vpop.f32.mrb[0].mxu0
  %v952 = vpop.f32.mrb[0].mxu0
  %v953 = vpop.f32.mrb[0].mxu0
  %954 = vdwg.mxu0
  %v955 = vadd.f32 %v907, %v950
  %v956 = vxor.u32 %v955, 2147483648
  %v957 = vmul.f32 %v956, 1.442695
  %v958 = vpow.pop %v957
  %v959 = vadd.f32 %v958, 1.0
  %v960 = vrcp.pop %v959
  %v961 = vmul.f32 1.0, %v960
  %v962 = vadd.f32 %v950, %v491
  %964 = vrot.lane.b32.xlu0 %v962, 64
  %v965 = vpop.permute.xlu0 %964
  %v967 = vmul.f32 %v961, %v965
  %969 = vrot.lane.b32.xlu0 %v967, 64
  %v970 = vpop.permute.xlu0 %969
  %v972 = vadd.f32 %v907, %v970
  %v973 = vtanh.pop %v972
  %v974 = vsub.f32 1.0, %v961
  %976 = vrot.lane.b32.xlu0 %v973, 96
  %v977 = vpop.permute.xlu0 %976
  %v979 = vmul.f32 %v974, %v977
  %v980 = vmul.f32 %v961, %v825
  %v981 = vadd.f32 %v979, %v980
  %983 = vrot.lane.b32.xlu0 %v906, 96
  %v984 = vpop.permute.xlu0 %983
  %986 = vst.msk [vmem:[#allocation4 + $0x18] sm:$0xff] %vm356, %v984
  %987 = vst.msk [vmem:[#allocation4 + $0x20] sm:$0xff] %vm518, %v981
  %v988 = vld [vmem:[#allocation2 + $0x20] sm:$0xff]
  %v989 = vpack.c.bf16 %v906, %v906
  %991 = vrot.lane.b32.xlu0 %v989, 96
  %v992 = vpop.permute.xlu0 %991
  %v994 = vsel %vm356, %v992, 0
  %996 = vmatprep.subr.bf16.mxu0 0
  %997 = vmatpush1.bf16.msra.mxu0 %v352
  %998 = vmatprep.subr.bf16.mxu0 0
  %999 = vmatpush1.bf16.msra.mxu0 %v353
  %1000 = vmatprep.subr.bf16.mxu0 0
  %1001 = vmatpush1.bf16.msra.mxu0 0
  %1002 = vmatprep.subr.bf16.mxu0 0
  %1003 = vmatpush1.bf16.msra.mxu0 0
  %1004 = vmatprep.subr.bf16.mxu0 0
  %1005 = vmatpush1.bf16.msra.mxu0 0
  %1006 = vmatprep.subr.bf16.mxu0 0
  %1007 = vmatpush1.bf16.msra.mxu0 0
  %1008 = vmatprep.subr.bf16.mxu0 0
  %1009 = vmatpush1.bf16.msra.mxu0 0
  %1010 = vmatprep.subr.bf16.mxu0 0
  %1011 = vmatpush1.bf16.msra.mxu0 0
  %1012 = vmatprep.subr.bf16.mxu0 0
  %1013 = vmatpush1.bf16.msra.mxu0 0
  %1014 = vmatprep.subr.bf16.mxu0 0
  %1015 = vmatpush1.bf16.msra.mxu0 0
  %1016 = vmatprep.subr.bf16.mxu0 0
  %1017 = vmatpush1.bf16.msra.mxu0 0
  %1018 = vmatprep.subr.bf16.mxu0 0
  %1019 = vmatpush1.bf16.msra.mxu0 0
  %1020 = vmatprep.subr.bf16.mxu0 0
  %1021 = vmatpush1.bf16.msra.mxu0 0
  %1022 = vmatprep.subr.bf16.mxu0 0
  %1023 = vmatpush1.bf16.msra.mxu0 0
  %1024 = vmatprep.subr.bf16.mxu0 0
  %1025 = vmatpush1.bf16.msra.mxu0 0
  %1026 = vmatprep.subr.bf16.mxu0 0
  %1027 = vmatpush1.bf16.msra.mxu0 0
  %1028 = vmatprep.mubr.bf16.mxu0 0
  %1029 = vmatmul.mubr.bf16.gmra.mrb[0].mxu0 %v994
  %v1030 = vpop.f32.mrb[0].mxu0
  %v1031 = vadd.f32 0.0, %v1030
  %v1032 = vpop.f32.mrb[0].mxu0
  %v1033 = vpop.f32.mrb[0].mxu0
  %v1034 = vpop.f32.mrb[0].mxu0
  %1035 = vdwg.mxu0
  %v1036 = vadd.f32 %v988, %v1031
  %v1037 = vxor.u32 %v1036, 2147483648
  %v1038 = vmul.f32 %v1037, 1.442695
  %v1039 = vpow.pop %v1038
  %v1040 = vadd.f32 %v1039, 1.0
  %v1041 = vrcp.pop %v1040
  %v1042 = vmul.f32 1.0, %v1041
  %v1043 = vadd.f32 %v1031, %v408
  %1045 = vrot.lane.b32.xlu0 %v1043, 64
  %v1046 = vpop.permute.xlu0 %1045
  %v1048 = vmul.f32 %v1042, %v1046
  %1050 = vrot.lane.b32.xlu0 %v1048, 64
  %v1051 = vpop.permute.xlu0 %1050
  %v1053 = vadd.f32 %v988, %v1051
  %v1054 = vtanh.pop %v1053
  %v1055 = vsub.f32 1.0, %v1042
  %1057 = vrot.lane.b32.xlu0 %v1054, 96
  %v1058 = vpop.permute.xlu0 %1057
  %v1060 = vmul.f32 %v1055, %v1058
  %v1061 = vmul.f32 %v1042, %v906
  %v1062 = vadd.f32 %v1060, %v1061
  %v1063 = vld [vmem:[#allocation3 + $0x18] sm:$0xff]
  %v1064 = vpack.c.bf16 %v981, %v981
  %1066 = vrot.lane.b32.xlu0 %v1064, 96
  %v1067 = vpop.permute.xlu0 %1066
  %v1069 = vsel %vm356, %v1067, 0
  %1071 = vmatprep.subr.bf16.mxu0 0
  %1072 = vmatpush1.bf16.msra.mxu0 %v439
  %1073 = vmatprep.subr.bf16.mxu0 0
  %1074 = vmatpush1.bf16.msra.mxu0 %v440
  %1075 = vmatprep.subr.bf16.mxu0 0
  %1076 = vmatpush1.bf16.msra.mxu0 0
  %1077 = vmatprep.subr.bf16.mxu0 0
  %1078 = vmatpush1.bf16.msra.mxu0 0
  %1079 = vmatprep.subr.bf16.mxu0 0
  %1080 = vmatpush1.bf16.msra.mxu0 0
  %1081 = vmatprep.subr.bf16.mxu0 0
  %1082 = vmatpush1.bf16.msra.mxu0 0
  %1083 = vmatprep.subr.bf16.mxu0 0
  %1084 = vmatpush1.bf16.msra.mxu0 0
  %1085 = vmatprep.subr.bf16.mxu0 0
  %1086 = vmatpush1.bf16.msra.mxu0 0
  %1087 = vmatprep.subr.bf16.mxu0 0
  %1088 = vmatpush1.bf16.msra.mxu0 0
  %1089 = vmatprep.subr.bf16.mxu0 0
  %1090 = vmatpush1.bf16.msra.mxu0 0
  %1091 = vmatprep.subr.bf16.mxu0 0
  %1092 = vmatpush1.bf16.msra.mxu0 0
  %1093 = vmatprep.subr.bf16.mxu0 0
  %1094 = vmatpush1.bf16.msra.mxu0 0
  %1095 = vmatprep.subr.bf16.mxu0 0
  %1096 = vmatpush1.bf16.msra.mxu0 0
  %1097 = vmatprep.subr.bf16.mxu0 0
  %1098 = vmatpush1.bf16.msra.mxu0 0
  %1099 = vmatprep.subr.bf16.mxu0 0
  %1100 = vmatpush1.bf16.msra.mxu0 0
  %1101 = vmatprep.subr.bf16.mxu0 0
  %1102 = vmatpush1.bf16.msra.mxu0 0
  %1103 = vmatprep.mubr.bf16.mxu0 0
  %1104 = vmatmul.mubr.bf16.gmra.mrb[0].mxu0 %v1069
  %v1105 = vpop.f32.mrb[0].mxu0
  %v1106 = vadd.f32 0.0, %v1105
  %v1107 = vpop.f32.mrb[0].mxu0
  %v1108 = vpop.f32.mrb[0].mxu0
  %v1109 = vpop.f32.mrb[0].mxu0
  %1110 = vdwg.mxu0
  %v1111 = vadd.f32 %v1063, %v1106
  %v1112 = vxor.u32 %v1111, 2147483648
  %v1113 = vmul.f32 %v1112, 1.442695
  %v1114 = vpow.pop %v1113
  %v1115 = vadd.f32 %v1114, 1.0
  %v1116 = vrcp.pop %v1115
  %v1117 = vmul.f32 1.0, %v1116
  %v1118 = vadd.f32 %v1106, %v491
  %1120 = vrot.lane.b32.xlu0 %v1118, 64
  %v1121 = vpop.permute.xlu0 %1120
  %v1123 = vmul.f32 %v1117, %v1121
  %1125 = vrot.lane.b32.xlu0 %v1123, 64
  %v1126 = vpop.permute.xlu0 %1125
  %v1128 = vadd.f32 %v1063, %v1126
  %v1129 = vtanh.pop %v1128
  %v1130 = vsub.f32 1.0, %v1117
  %1132 = vrot.lane.b32.xlu0 %v1129, 96
  %v1133 = vpop.permute.xlu0 %1132
  %v1135 = vmul.f32 %v1130, %v1133
  %v1136 = vmul.f32 %v1117, %v981
  %v1137 = vadd.f32 %v1135, %v1136
  %1139 = vrot.lane.b32.xlu0 %v1062, 96
  %v1140 = vpop.permute.xlu0 %1139
  %1142 = vst.msk [vmem:[#allocation4 + $0x20] sm:$0xff] %vm356, %v1140
  %1143 = vst.msk [vmem:[#allocation4 + $0x18] sm:$0xff] %vm518, %v1137
  %v1144 = vld [vmem:[#allocation2 + $0x28] sm:$0xff]
  %v1145 = vpack.c.bf16 %v1062, %v1062
  %1147 = vrot.lane.b32.xlu0 %v1145, 96
  %v1148 = vpop.permute.xlu0 %1147
  %v1150 = vsel %vm356, %v1148, 0
  %1152 = vmatprep.subr.bf16.mxu0 0
  %1153 = vmatpush1.bf16.msra.mxu0 %v352
  %1154 = vmatprep.subr.bf16.mxu0 0
  %1155 = vmatpush1.bf16.msra.mxu0 %v353
  %1156 = vmatprep.subr.bf16.mxu0 0
  %1157 = vmatpush1.bf16.msra.mxu0 0
  %1158 = vmatprep.subr.bf16.mxu0 0
  %1159 = vmatpush1.bf16.msra.mxu0 0
  %1160 = vmatprep.subr.bf16.mxu0 0
  %1161 = vmatpush1.bf16.msra.mxu0 0
  %1162 = vmatprep.subr.bf16.mxu0 0
  %1163 = vmatpush1.bf16.msra.mxu0 0
  %1164 = vmatprep.subr.bf16.mxu0 0
  %1165 = vmatpush1.bf16.msra.mxu0 0
  %1166 = vmatprep.subr.bf16.mxu0 0
  %1167 = vmatpush1.bf16.msra.mxu0 0
  %1168 = vmatprep.subr.bf16.mxu0 0
  %1169 = vmatpush1.bf16.msra.mxu0 0
  %1170 = vmatprep.subr.bf16.mxu0 0
  %1171 = vmatpush1.bf16.msra.mxu0 0
  %1172 = vmatprep.subr.bf16.mxu0 0
  %1173 = vmatpush1.bf16.msra.mxu0 0
  %1174 = vmatprep.subr.bf16.mxu0 0
  %1175 = vmatpush1.bf16.msra.mxu0 0
  %1176 = vmatprep.subr.bf16.mxu0 0
  %1177 = vmatpush1.bf16.msra.mxu0 0
  %1178 = vmatprep.subr.bf16.mxu0 0
  %1179 = vmatpush1.bf16.msra.mxu0 0
  %1180 = vmatprep.subr.bf16.mxu0 0
  %1181 = vmatpush1.bf16.msra.mxu0 0
  %1182 = vmatprep.subr.bf16.mxu0 0
  %1183 = vmatpush1.bf16.msra.mxu0 0
  %1184 = vmatprep.mubr.bf16.mxu0 0
  %1185 = vmatmul.mubr.bf16.gmra.mrb[0].mxu0 %v1150
  %v1186 = vpop.f32.mrb[0].mxu0
  %v1187 = vadd.f32 0.0, %v1186
  %v1188 = vpop.f32.mrb[0].mxu0
  %v1189 = vpop.f32.mrb[0].mxu0
  %v1190 = vpop.f32.mrb[0].mxu0
  %1191 = vdwg.mxu0
  %v1192 = vadd.f32 %v1144, %v1187
  %v1193 = vxor.u32 %v1192, 2147483648
  %v1194 = vmul.f32 %v1193, 1.442695
  %v1195 = vpow.pop %v1194
  %v1196 = vadd.f32 %v1195, 1.0
  %v1197 = vrcp.pop %v1196
  %v1198 = vmul.f32 1.0, %v1197
  %v1199 = vadd.f32 %v1187, %v408
  %1201 = vrot.lane.b32.xlu0 %v1199, 64
  %v1202 = vpop.permute.xlu0 %1201
  %v1204 = vmul.f32 %v1198, %v1202
  %1206 = vrot.lane.b32.xlu0 %v1204, 64
  %v1207 = vpop.permute.xlu0 %1206
  %v1209 = vadd.f32 %v1144, %v1207
  %v1210 = vtanh.pop %v1209
  %v1211 = vsub.f32 1.0, %v1198
  %1213 = vrot.lane.b32.xlu0 %v1210, 96
  %v1214 = vpop.permute.xlu0 %1213
  %v1216 = vmul.f32 %v1211, %v1214
  %v1217 = vmul.f32 %v1198, %v1062
  %v1218 = vadd.f32 %v1216, %v1217
  %v1219 = vld [vmem:[#allocation3 + $0x10] sm:$0xff]
  %v1220 = vpack.c.bf16 %v1137, %v1137
  %1222 = vrot.lane.b32.xlu0 %v1220, 96
  %v1223 = vpop.permute.xlu0 %1222
  %v1225 = vsel %vm356, %v1223, 0
  %1227 = vmatprep.subr.bf16.mxu0 0
  %1228 = vmatpush1.bf16.msra.mxu0 %v439
  %1229 = vmatprep.subr.bf16.mxu0 0
  %1230 = vmatpush1.bf16.msra.mxu0 %v440
  %1231 = vmatprep.subr.bf16.mxu0 0
  %1232 = vmatpush1.bf16.msra.mxu0 0
  %1233 = vmatprep.subr.bf16.mxu0 0
  %1234 = vmatpush1.bf16.msra.mxu0 0
  %1235 = vmatprep.subr.bf16.mxu0 0
  %1236 = vmatpush1.bf16.msra.mxu0 0
  %1237 = vmatprep.subr.bf16.mxu0 0
  %1238 = vmatpush1.bf16.msra.mxu0 0
  %1239 = vmatprep.subr.bf16.mxu0 0
  %1240 = vmatpush1.bf16.msra.mxu0 0
  %1241 = vmatprep.subr.bf16.mxu0 0
  %1242 = vmatpush1.bf16.msra.mxu0 0
  %1243 = vmatprep.subr.bf16.mxu0 0
  %1244 = vmatpush1.bf16.msra.mxu0 0
  %1245 = vmatprep.subr.bf16.mxu0 0
  %1246 = vmatpush1.bf16.msra.mxu0 0
  %1247 = vmatprep.subr.bf16.mxu0 0
  %1248 = vmatpush1.bf16.msra.mxu0 0
  %1249 = vmatprep.subr.bf16.mxu0 0
  %1250 = vmatpush1.bf16.msra.mxu0 0
  %1251 = vmatprep.subr.bf16.mxu0 0
  %1252 = vmatpush1.bf16.msra.mxu0 0
  %1253 = vmatprep.subr.bf16.mxu0 0
  %1254 = vmatpush1.bf16.msra.mxu0 0
  %1255 = vmatprep.subr.bf16.mxu0 0
  %1256 = vmatpush1.bf16.msra.mxu0 0
  %1257 = vmatprep.subr.bf16.mxu0 0
  %1258 = vmatpush1.bf16.msra.mxu0 0
  %1259 = vmatprep.mubr.bf16.mxu0 0
  %1260 = vmatmul.mubr.bf16.gmra.mrb[0].mxu0 %v1225
  %v1261 = vpop.f32.mrb[0].mxu0
  %v1262 = vadd.f32 0.0, %v1261
  %v1263 = vpop.f32.mrb[0].mxu0
  %v1264 = vpop.f32.mrb[0].mxu0
  %v1265 = vpop.f32.mrb[0].mxu0
  %1266 = vdwg.mxu0
  %v1267 = vadd.f32 %v1219, %v1262
  %v1268 = vxor.u32 %v1267, 2147483648
  %v1269 = vmul.f32 %v1268, 1.442695
  %v1270 = vpow.pop %v1269
  %v1271 = vadd.f32 %v1270, 1.0
  %v1272 = vrcp.pop %v1271
  %v1273 = vmul.f32 1.0, %v1272
  %v1274 = vadd.f32 %v1262, %v491
  %1276 = vrot.lane.b32.xlu0 %v1274, 64
  %v1277 = vpop.permute.xlu0 %1276
  %v1279 = vmul.f32 %v1273, %v1277
  %1281 = vrot.lane.b32.xlu0 %v1279, 64
  %v1282 = vpop.permute.xlu0 %1281
  %v1284 = vadd.f32 %v1219, %v1282
  %v1285 = vtanh.pop %v1284
  %v1286 = vsub.f32 1.0, %v1273
  %1288 = vrot.lane.b32.xlu0 %v1285, 96
  %v1289 = vpop.permute.xlu0 %1288
  %v1291 = vmul.f32 %v1286, %v1289
  %v1292 = vmul.f32 %v1273, %v1137
  %v1293 = vadd.f32 %v1291, %v1292
  %1295 = vrot.lane.b32.xlu0 %v1218, 96
  %v1296 = vpop.permute.xlu0 %1295
  %1298 = vst.msk [vmem:[#allocation4 + $0x28] sm:$0xff] %vm356, %v1296
  %1299 = vst.msk [vmem:[#allocation4 + $0x10] sm:$0xff] %vm518, %v1293
  %v1300 = vld [vmem:[#allocation2 + $0x30] sm:$0xff]
  %v1301 = vpack.c.bf16 %v1218, %v1218
  %1303 = vrot.lane.b32.xlu0 %v1301, 96
  %v1304 = vpop.permute.xlu0 %1303
  %v1306 = vsel %vm356, %v1304, 0
  %1308 = vmatprep.subr.bf16.mxu0 0
  %1309 = vmatpush1.bf16.msra.mxu0 %v352
  %1310 = vmatprep.subr.bf16.mxu0 0
  %1311 = vmatpush1.bf16.msra.mxu0 %v353
  %1312 = vmatprep.subr.bf16.mxu0 0
  %1313 = vmatpush1.bf16.msra.mxu0 0
  %1314 = vmatprep.subr.bf16.mxu0 0
  %1315 = vmatpush1.bf16.msra.mxu0 0
  %1316 = vmatprep.subr.bf16.mxu0 0
  %1317 = vmatpush1.bf16.msra.mxu0 0
  %1318 = vmatprep.subr.bf16.mxu0 0
  %1319 = vmatpush1.bf16.msra.mxu0 0
  %1320 = vmatprep.subr.bf16.mxu0 0
  %1321 = vmatpush1.bf16.msra.mxu0 0
  %1322 = vmatprep.subr.bf16.mxu0 0
  %1323 = vmatpush1.bf16.msra.mxu0 0
  %1324 = vmatprep.subr.bf16.mxu0 0
  %1325 = vmatpush1.bf16.msra.mxu0 0
  %1326 = vmatprep.subr.bf16.mxu0 0
  %1327 = vmatpush1.bf16.msra.mxu0 0
  %1328 = vmatprep.subr.bf16.mxu0 0
  %1329 = vmatpush1.bf16.msra.mxu0 0
  %1330 = vmatprep.subr.bf16.mxu0 0
  %1331 = vmatpush1.bf16.msra.mxu0 0
  %1332 = vmatprep.subr.bf16.mxu0 0
  %1333 = vmatpush1.bf16.msra.mxu0 0
  %1334 = vmatprep.subr.bf16.mxu0 0
  %1335 = vmatpush1.bf16.msra.mxu0 0
  %1336 = vmatprep.subr.bf16.mxu0 0
  %1337 = vmatpush1.bf16.msra.mxu0 0
  %1338 = vmatprep.subr.bf16.mxu0 0
  %1339 = vmatpush1.bf16.msra.mxu0 0
  %1340 = vmatprep.mubr.bf16.mxu0 0
  %1341 = vmatmul.mubr.bf16.gmra.mrb[0].mxu0 %v1306
  %v1342 = vpop.f32.mrb[0].mxu0
  %v1343 = vadd.f32 0.0, %v1342
  %v1344 = vpop.f32.mrb[0].mxu0
  %v1345 = vpop.f32.mrb[0].mxu0
  %v1346 = vpop.f32.mrb[0].mxu0
  %1347 = vdwg.mxu0
  %v1348 = vadd.f32 %v1300, %v1343
  %v1349 = vxor.u32 %v1348, 2147483648
  %v1350 = vmul.f32 %v1349, 1.442695
  %v1351 = vpow.pop %v1350
  %v1352 = vadd.f32 %v1351, 1.0
  %v1353 = vrcp.pop %v1352
  %v1354 = vmul.f32 1.0, %v1353
  %v1355 = vadd.f32 %v1343, %v408
  %1357 = vrot.lane.b32.xlu0 %v1355, 64
  %v1358 = vpop.permute.xlu0 %1357
  %v1360 = vmul.f32 %v1354, %v1358
  %1362 = vrot.lane.b32.xlu0 %v1360, 64
  %v1363 = vpop.permute.xlu0 %1362
  %v1365 = vadd.f32 %v1300, %v1363
  %v1366 = vtanh.pop %v1365
  %v1367 = vsub.f32 1.0, %v1354
  %1369 = vrot.lane.b32.xlu0 %v1366, 96
  %v1370 = vpop.permute.xlu0 %1369
  %v1372 = vmul.f32 %v1367, %v1370
  %v1373 = vmul.f32 %v1354, %v1218
  %v1374 = vadd.f32 %v1372, %v1373
  %v1375 = vld [vmem:[#allocation3 + $0x8] sm:$0xff]
  %v1376 = vpack.c.bf16 %v1293, %v1293
  %1378 = vrot.lane.b32.xlu0 %v1376, 96
  %v1379 = vpop.permute.xlu0 %1378
  %v1381 = vsel %vm356, %v1379, 0
  %1383 = vmatprep.subr.bf16.mxu0 0
  %1384 = vmatpush1.bf16.msra.mxu0 %v439
  %1385 = vmatprep.subr.bf16.mxu0 0
  %1386 = vmatpush1.bf16.msra.mxu0 %v440
  %1387 = vmatprep.subr.bf16.mxu0 0
  %1388 = vmatpush1.bf16.msra.mxu0 0
  %1389 = vmatprep.subr.bf16.mxu0 0
  %1390 = vmatpush1.bf16.msra.mxu0 0
  %1391 = vmatprep.subr.bf16.mxu0 0
  %1392 = vmatpush1.bf16.msra.mxu0 0
  %1393 = vmatprep.subr.bf16.mxu0 0
  %1394 = vmatpush1.bf16.msra.mxu0 0
  %1395 = vmatprep.subr.bf16.mxu0 0
  %1396 = vmatpush1.bf16.msra.mxu0 0
  %1397 = vmatprep.subr.bf16.mxu0 0
  %1398 = vmatpush1.bf16.msra.mxu0 0
  %1399 = vmatprep.subr.bf16.mxu0 0
  %1400 = vmatpush1.bf16.msra.mxu0 0
  %1401 = vmatprep.subr.bf16.mxu0 0
  %1402 = vmatpush1.bf16.msra.mxu0 0
  %1403 = vmatprep.subr.bf16.mxu0 0
  %1404 = vmatpush1.bf16.msra.mxu0 0
  %1405 = vmatprep.subr.bf16.mxu0 0
  %1406 = vmatpush1.bf16.msra.mxu0 0
  %1407 = vmatprep.subr.bf16.mxu0 0
  %1408 = vmatpush1.bf16.msra.mxu0 0
  %1409 = vmatprep.subr.bf16.mxu0 0
  %1410 = vmatpush1.bf16.msra.mxu0 0
  %1411 = vmatprep.subr.bf16.mxu0 0
  %1412 = vmatpush1.bf16.msra.mxu0 0
  %1413 = vmatprep.subr.bf16.mxu0 0
  %1414 = vmatpush1.bf16.msra.mxu0 0
  %1415 = vmatprep.mubr.bf16.mxu0 0
  %1416 = vmatmul.mubr.bf16.gmra.mrb[0].mxu0 %v1381
  %v1417 = vpop.f32.mrb[0].mxu0
  %v1418 = vadd.f32 0.0, %v1417
  %v1419 = vpop.f32.mrb[0].mxu0
  %v1420 = vpop.f32.mrb[0].mxu0
  %v1421 = vpop.f32.mrb[0].mxu0
  %1422 = vdwg.mxu0
  %v1423 = vadd.f32 %v1375, %v1418
  %v1424 = vxor.u32 %v1423, 2147483648
  %v1425 = vmul.f32 %v1424, 1.442695
  %v1426 = vpow.pop %v1425
  %v1427 = vadd.f32 %v1426, 1.0
  %v1428 = vrcp.pop %v1427
  %v1429 = vmul.f32 1.0, %v1428
  %v1430 = vadd.f32 %v1418, %v491
  %1432 = vrot.lane.b32.xlu0 %v1430, 64
  %v1433 = vpop.permute.xlu0 %1432
  %v1435 = vmul.f32 %v1429, %v1433
  %1437 = vrot.lane.b32.xlu0 %v1435, 64
  %v1438 = vpop.permute.xlu0 %1437
  %v1440 = vadd.f32 %v1375, %v1438
  %v1441 = vtanh.pop %v1440
  %v1442 = vsub.f32 1.0, %v1429
  %1444 = vrot.lane.b32.xlu0 %v1441, 96
  %v1445 = vpop.permute.xlu0 %1444
  %v1447 = vmul.f32 %v1442, %v1445
  %v1448 = vmul.f32 %v1429, %v1293
  %v1449 = vadd.f32 %v1447, %v1448
  %1451 = vrot.lane.b32.xlu0 %v1374, 96
  %v1452 = vpop.permute.xlu0 %1451
  %1454 = vst.msk [vmem:[#allocation4 + $0x30] sm:$0xff] %vm356, %v1452
  %1455 = vst.msk [vmem:[#allocation4 + $0x8] sm:$0xff] %vm518, %v1449
  %v1456 = vld [vmem:[#allocation2 + $0x38] sm:$0xff]
  %v1457 = vpack.c.bf16 %v1374, %v1374
  %1459 = vrot.lane.b32.xlu0 %v1457, 96
  %v1460 = vpop.permute.xlu0 %1459
  %v1462 = vsel %vm356, %v1460, 0
  %1464 = vmatprep.subr.bf16.mxu0 0
  %1465 = vmatpush1.bf16.msra.mxu0 %v352
  %1466 = vmatprep.subr.bf16.mxu0 0
  %1467 = vmatpush1.bf16.msra.mxu0 %v353
  %1468 = vmatprep.subr.bf16.mxu0 0
  %1469 = vmatpush1.bf16.msra.mxu0 0
  %1470 = vmatprep.subr.bf16.mxu0 0
  %1471 = vmatpush1.bf16.msra.mxu0 0
  %1472 = vmatprep.subr.bf16.mxu0 0
  %1473 = vmatpush1.bf16.msra.mxu0 0
  %1474 = vmatprep.subr.bf16.mxu0 0
  %1475 = vmatpush1.bf16.msra.mxu0 0
  %1476 = vmatprep.subr.bf16.mxu0 0
  %1477 = vmatpush1.bf16.msra.mxu0 0
  %1478 = vmatprep.subr.bf16.mxu0 0
  %1479 = vmatpush1.bf16.msra.mxu0 0
  %1480 = vmatprep.subr.bf16.mxu0 0
  %1481 = vmatpush1.bf16.msra.mxu0 0
  %1482 = vmatprep.subr.bf16.mxu0 0
  %1483 = vmatpush1.bf16.msra.mxu0 0
  %1484 = vmatprep.subr.bf16.mxu0 0
  %1485 = vmatpush1.bf16.msra.mxu0 0
  %1486 = vmatprep.subr.bf16.mxu0 0
  %1487 = vmatpush1.bf16.msra.mxu0 0
  %1488 = vmatprep.subr.bf16.mxu0 0
  %1489 = vmatpush1.bf16.msra.mxu0 0
  %1490 = vmatprep.subr.bf16.mxu0 0
  %1491 = vmatpush1.bf16.msra.mxu0 0
  %1492 = vmatprep.subr.bf16.mxu0 0
  %1493 = vmatpush1.bf16.msra.mxu0 0
  %1494 = vmatprep.subr.bf16.mxu0 0
  %1495 = vmatpush1.bf16.msra.mxu0 0
  %1496 = vmatprep.mubr.bf16.mxu0 0
  %1497 = vmatmul.mubr.bf16.gmra.mrb[0].mxu0 %v1462
  %v1498 = vpop.f32.mrb[0].mxu0
  %v1499 = vadd.f32 0.0, %v1498
  %v1500 = vpop.f32.mrb[0].mxu0
  %v1501 = vpop.f32.mrb[0].mxu0
  %v1502 = vpop.f32.mrb[0].mxu0
  %1503 = vdwg.mxu0
  %v1504 = vadd.f32 %v1456, %v1499
  %v1505 = vxor.u32 %v1504, 2147483648
  %v1506 = vmul.f32 %v1505, 1.442695
  %v1507 = vpow.pop %v1506
  %v1508 = vadd.f32 %v1507, 1.0
  %v1509 = vrcp.pop %v1508
  %v1510 = vmul.f32 1.0, %v1509
  %v1511 = vadd.f32 %v1499, %v408
  %1513 = vrot.lane.b32.xlu0 %v1511, 64
  %v1514 = vpop.permute.xlu0 %1513
  %v1516 = vmul.f32 %v1510, %v1514
  %1518 = vrot.lane.b32.xlu0 %v1516, 64
  %v1519 = vpop.permute.xlu0 %1518
  %v1521 = vadd.f32 %v1456, %v1519
  %v1522 = vtanh.pop %v1521
  %v1523 = vsub.f32 1.0, %v1510
  %1525 = vrot.lane.b32.xlu0 %v1522, 96
  %v1526 = vpop.permute.xlu0 %1525
  %v1528 = vmul.f32 %v1523, %v1526
  %v1529 = vmul.f32 %v1510, %v1374
  %v1530 = vadd.f32 %v1528, %v1529
  %v1531 = vld [vmem:[#allocation3] sm:$0xff]
  %v1532 = vpack.c.bf16 %v1449, %v1449
  %1534 = vrot.lane.b32.xlu0 %v1532, 96
  %v1535 = vpop.permute.xlu0 %1534
  %v1537 = vsel %vm356, %v1535, 0
  %1539 = vmatprep.subr.bf16.mxu0 0
  %1540 = vmatpush1.bf16.msra.mxu0 %v439
  %1541 = vmatprep.subr.bf16.mxu0 0
  %1542 = vmatpush1.bf16.msra.mxu0 %v440
  %1543 = vmatprep.subr.bf16.mxu0 0
  %1544 = vmatpush1.bf16.msra.mxu0 0
  %1545 = vmatprep.subr.bf16.mxu0 0
  %1546 = vmatpush1.bf16.msra.mxu0 0
  %1547 = vmatprep.subr.bf16.mxu0 0
  %1548 = vmatpush1.bf16.msra.mxu0 0
  %1549 = vmatprep.subr.bf16.mxu0 0
  %1550 = vmatpush1.bf16.msra.mxu0 0
  %1551 = vmatprep.subr.bf16.mxu0 0
  %1552 = vmatpush1.bf16.msra.mxu0 0
  %1553 = vmatprep.subr.bf16.mxu0 0
  %1554 = vmatpush1.bf16.msra.mxu0 0
  %1555 = vmatprep.subr.bf16.mxu0 0
  %1556 = vmatpush1.bf16.msra.mxu0 0
  %1557 = vmatprep.subr.bf16.mxu0 0
  %1558 = vmatpush1.bf16.msra.mxu0 0
  %1559 = vmatprep.subr.bf16.mxu0 0
  %1560 = vmatpush1.bf16.msra.mxu0 0
  %1561 = vmatprep.subr.bf16.mxu0 0
  %1562 = vmatpush1.bf16.msra.mxu0 0
  %1563 = vmatprep.subr.bf16.mxu0 0
  %1564 = vmatpush1.bf16.msra.mxu0 0
  %1565 = vmatprep.subr.bf16.mxu0 0
  %1566 = vmatpush1.bf16.msra.mxu0 0
  %1567 = vmatprep.subr.bf16.mxu0 0
  %1568 = vmatpush1.bf16.msra.mxu0 0
  %1569 = vmatprep.subr.bf16.mxu0 0
  %1570 = vmatpush1.bf16.msra.mxu0 0
  %1571 = vmatprep.mubr.bf16.mxu0 0
  %1572 = vmatmul.mubr.bf16.gmra.mrb[0].mxu0 %v1537
  %v1573 = vpop.f32.mrb[0].mxu0
  %v1574 = vadd.f32 0.0, %v1573
  %v1575 = vpop.f32.mrb[0].mxu0
  %v1576 = vpop.f32.mrb[0].mxu0
  %v1577 = vpop.f32.mrb[0].mxu0
  %1578 = vdwg.mxu0
  %v1579 = vadd.f32 %v1531, %v1574
  %v1580 = vxor.u32 %v1579, 2147483648
  %v1581 = vmul.f32 %v1580, 1.442695
  %v1582 = vpow.pop %v1581
  %v1583 = vadd.f32 %v1582, 1.0
  %v1584 = vrcp.pop %v1583
  %v1585 = vmul.f32 1.0, %v1584
  %v1586 = vadd.f32 %v1574, %v491
  %1588 = vrot.lane.b32.xlu0 %v1586, 64
  %v1589 = vpop.permute.xlu0 %1588
  %v1591 = vmul.f32 %v1585, %v1589
  %1593 = vrot.lane.b32.xlu0 %v1591, 64
  %v1594 = vpop.permute.xlu0 %1593
  %v1596 = vadd.f32 %v1531, %v1594
  %v1597 = vtanh.pop %v1596
  %v1598 = vsub.f32 1.0, %v1585
  %1600 = vrot.lane.b32.xlu0 %v1597, 96
  %v1601 = vpop.permute.xlu0 %1600
  %v1603 = vmul.f32 %v1598, %v1601
  %v1604 = vmul.f32 %v1585, %v1449
  %v1605 = vadd.f32 %v1603, %v1604
  %1607 = vrot.lane.b32.xlu0 %v1530, 96
  %v1608 = vpop.permute.xlu0 %1607
  %1610 = vst.msk [vmem:[#allocation4 + $0x38] sm:$0xff] %vm356, %v1608
  %1611 = vst.msk [vmem:[#allocation4] sm:$0xff] %vm518, %v1605
  %v1612 = vld [vmem:[#allocation4] sm:$0xff]
  %v1613 = vld [vmem:[#allocation4 + $0x8] sm:$0xff]
  %v1614 = vld [vmem:[#allocation4 + $0x10] sm:$0xff]
  %v1615 = vld [vmem:[#allocation4 + $0x18] sm:$0xff]
  %v1616 = vld [vmem:[#allocation4 + $0x20] sm:$0xff]
  %v1617 = vld [vmem:[#allocation4 + $0x28] sm:$0xff]
  %v1618 = vld [vmem:[#allocation4 + $0x30] sm:$0xff]
  %v1619 = vld [vmem:[#allocation4 + $0x38] sm:$0xff]
  %v1620 = vpack.c.bf16 %v1613, %v1612
  %v1621 = vpack.c.bf16 %v1615, %v1614
  %v1622 = vpack.c.bf16 %v1617, %v1616
  %v1623 = vpack.c.bf16 %v1619, %v1618
  %v1624 = vld [vmem:[%s9] sm:$0xf]
  %v1625 = vld [vmem:[%s9 + $0x4] sm:$0xf]
  %v1626 = vld [vmem:[%s9 + $0x8] sm:$0xf]
  %v1627 = vld [vmem:[%s9 + $0xc] sm:$0xf]
  %v1628 = vld [vmem:[%s9 + $0x10] sm:$0xf]
  %v1629 = vld [vmem:[%s9 + $0x14] sm:$0xf]
  %v1630 = vld [vmem:[%s9 + $0x18] sm:$0xf]
  %v1631 = vld [vmem:[%s9 + $0x1c] sm:$0xf]
  %v1632 = vld [vmem:[%s10] sm:$0x1]
  %v1634 = vlaneseq
  %v1635 = vshrl.u32 %v1634, 7
  %v1636 = vsub.s32 0, %v1635
  %v1637 = vrot.slane %v1632, %v1636
  %v1647 = vunpack.c.l.b16 %v1624
  %v1648 = vunpack.c.l.b16 %v1625
  %v1649 = vunpack.c.l.b16 %v1626
  %v1650 = vunpack.c.l.b16 %v1627
  %v1651 = vunpack.c.l.b16 %v1628
  %v1652 = vunpack.c.l.b16 %v1629
  %v1653 = vunpack.c.l.b16 %v1630
  %v1654 = vunpack.c.l.b16 %v1631
  %v1655 = vpack.c.b16 %v1648, %v1647
  %v1656 = vpack.c.b16 %v1650, %v1649
  %v1657 = vpack.c.b16 %v1652, %v1651
  %v1658 = vpack.c.b16 %v1654, %v1653
  %vm1663 = vcmask 523264
  %v1665 = vsel %vm1663, %v1620, 0
  %v1668 = vsel %vm1663, %v1621, 0
  %v1671 = vsel %vm1663, %v1622, 0
  %v1674 = vsel %vm1663, %v1623, 0
  %1676 = vmatprep.subr.bf16.mxu0 0
  %1677 = vmatpush1.bf16.msra.mxu0 %v1655
  %1678 = vmatprep.subr.bf16.mxu0 0
  %1679 = vmatpush1.bf16.msra.mxu0 %v1656
  %1680 = vmatprep.subr.bf16.mxu0 0
  %1681 = vmatpush1.bf16.msra.mxu0 %v1657
  %1682 = vmatprep.subr.bf16.mxu0 0
  %1683 = vmatpush1.bf16.msra.mxu0 %v1658
  %1684 = vmatprep.subr.bf16.mxu0 0
  %1685 = vmatpush1.bf16.msra.mxu0 0
  %1686 = vmatprep.subr.bf16.mxu0 0
  %1687 = vmatpush1.bf16.msra.mxu0 0
  %1688 = vmatprep.subr.bf16.mxu0 0
  %1689 = vmatpush1.bf16.msra.mxu0 0
  %1690 = vmatprep.subr.bf16.mxu0 0
  %1691 = vmatpush1.bf16.msra.mxu0 0
  %1692 = vmatprep.subr.bf16.mxu0 0
  %1693 = vmatpush1.bf16.msra.mxu0 0
  %1694 = vmatprep.subr.bf16.mxu0 0
  %1695 = vmatpush1.bf16.msra.mxu0 0
  %1696 = vmatprep.subr.bf16.mxu0 0
  %1697 = vmatpush1.bf16.msra.mxu0 0
  %1698 = vmatprep.subr.bf16.mxu0 0
  %1699 = vmatpush1.bf16.msra.mxu0 0
  %1700 = vmatprep.subr.bf16.mxu0 0
  %1701 = vmatpush1.bf16.msra.mxu0 0
  %1702 = vmatprep.subr.bf16.mxu0 0
  %1703 = vmatpush1.bf16.msra.mxu0 0
  %1704 = vmatprep.subr.bf16.mxu0 0
  %1705 = vmatpush1.bf16.msra.mxu0 0
  %1706 = vmatprep.subr.bf16.mxu0 0
  %1707 = vmatpush1.bf16.msra.mxu0 0
  %1708 = vmatprep.mubr.bf16.mxu0 0
  %1709 = vmatmul.mubr.bf16.gmra.mrb[0].mxu0 %v1665
  %v1710 = vpop.f32.mrb[0].mxu0
  %v1711 = vadd.f32 %v1637, %v1710
  %v1712 = vpop.f32.mrb[0].mxu0
  %v1713 = vpop.f32.mrb[0].mxu0
  %v1714 = vadd.f32 %v1637, %v1713
  %v1715 = vpop.f32.mrb[0].mxu0
  %1716 = vmatprep.mubr.bf16.mxu0 0
  %1717 = vmatmul.mubr.bf16.gmra.mrb[0].mxu0 %v1668
  %v1718 = vpop.f32.mrb[0].mxu0
  %v1719 = vadd.f32 %v1637, %v1718
  %v1720 = vpop.f32.mrb[0].mxu0
  %v1721 = vpop.f32.mrb[0].mxu0
  %v1722 = vadd.f32 %v1637, %v1721
  %v1723 = vpop.f32.mrb[0].mxu0
  %1724 = vmatprep.mubr.bf16.mxu0 0
  %1725 = vmatmul.mubr.bf16.gmra.mrb[0].mxu0 %v1671
  %v1726 = vpop.f32.mrb[0].mxu0
  %v1727 = vadd.f32 %v1637, %v1726
  %v1728 = vpop.f32.mrb[0].mxu0
  %v1729 = vpop.f32.mrb[0].mxu0
  %v1730 = vadd.f32 %v1637, %v1729
  %v1731 = vpop.f32.mrb[0].mxu0
  %1732 = vmatprep.mubr.bf16.mxu0 0
  %1733 = vmatmul.mubr.bf16.gmra.mrb[0].mxu0 %v1674
  %v1734 = vpop.f32.mrb[0].mxu0
  %v1735 = vadd.f32 %v1637, %v1734
  %v1736 = vpop.f32.mrb[0].mxu0
  %v1737 = vpop.f32.mrb[0].mxu0
  %v1738 = vadd.f32 %v1637, %v1737
  %v1739 = vpop.f32.mrb[0].mxu0
  %1740 = vdwg.mxu0
  %1741 = vst.msk [vmem:[#allocation2] sm:$0xff] %vm190, %v1711
  %1742 = vst.msk [vmem:[#allocation2 + $0x8] sm:$0xff] %vm190, %v1714
  %1743 = vst.msk [vmem:[#allocation2 + $0x10] sm:$0xff] %vm190, %v1719
  %1744 = vst.msk [vmem:[#allocation2 + $0x18] sm:$0xff] %vm190, %v1722
  %1745 = vst.msk [vmem:[#allocation2 + $0x20] sm:$0xff] %vm190, %v1727
  %1746 = vst.msk [vmem:[#allocation2 + $0x28] sm:$0xff] %vm190, %v1730
  %1747 = vst.msk [vmem:[#allocation2 + $0x30] sm:$0xff] %vm190, %v1735
  %1748 = vst.msk [vmem:[#allocation2 + $0x38] sm:$0xff] %vm190, %v1738
  %v1749 = vld [vmem:[#allocation4] sm:$0xff]
  %v1750 = vld [vmem:[#allocation4 + $0x8] sm:$0xff]
  %v1751 = vld [vmem:[#allocation4 + $0x10] sm:$0xff]
  %v1752 = vld [vmem:[#allocation4 + $0x18] sm:$0xff]
  %v1753 = vld [vmem:[#allocation4 + $0x20] sm:$0xff]
  %v1754 = vld [vmem:[#allocation4 + $0x28] sm:$0xff]
  %v1755 = vld [vmem:[#allocation4 + $0x30] sm:$0xff]
  %v1756 = vld [vmem:[#allocation4 + $0x38] sm:$0xff]
  %v1757 = vpack.c.bf16 %v1750, %v1749
  %v1758 = vpack.c.bf16 %v1752, %v1751
  %v1759 = vpack.c.bf16 %v1754, %v1753
  %v1760 = vpack.c.bf16 %v1756, %v1755
  %v1761 = vld [vmem:[%s13] sm:$0xf]
  %v1762 = vld [vmem:[%s13 + $0x4] sm:$0xf]
  %v1763 = vld [vmem:[%s13 + $0x8] sm:$0xf]
  %v1764 = vld [vmem:[%s13 + $0xc] sm:$0xf]
  %v1765 = vld [vmem:[%s13 + $0x10] sm:$0xf]
  %v1766 = vld [vmem:[%s13 + $0x14] sm:$0xf]
  %v1767 = vld [vmem:[%s13 + $0x18] sm:$0xf]
  %v1768 = vld [vmem:[%s13 + $0x1c] sm:$0xf]
  %v1769 = vld [vmem:[%s14] sm:$0x1]
  %v1771 = vlaneseq
  %v1772 = vshrl.u32 %v1771, 7
  %v1773 = vsub.s32 0, %v1772
  %v1774 = vrot.slane %v1769, %v1773
  %v1784 = vunpack.c.l.b16 %v1761
  %v1785 = vunpack.c.l.b16 %v1762
  %v1786 = vunpack.c.l.b16 %v1763
  %v1787 = vunpack.c.l.b16 %v1764
  %v1788 = vunpack.c.l.b16 %v1765
  %v1789 = vunpack.c.l.b16 %v1766
  %v1790 = vunpack.c.l.b16 %v1767
  %v1791 = vunpack.c.l.b16 %v1768
  %v1792 = vpack.c.b16 %v1785, %v1784
  %v1793 = vpack.c.b16 %v1787, %v1786
  %v1794 = vpack.c.b16 %v1789, %v1788
  %v1795 = vpack.c.b16 %v1791, %v1790
  %v1801 = vsel %vm1663, %v1757, 0
  %v1804 = vsel %vm1663, %v1758, 0
  %v1807 = vsel %vm1663, %v1759, 0
  %v1810 = vsel %vm1663, %v1760, 0
  %1812 = vmatprep.subr.bf16.mxu0 0
  %1813 = vmatpush1.bf16.msra.mxu0 %v1792
  %1814 = vmatprep.subr.bf16.mxu0 0
  %1815 = vmatpush1.bf16.msra.mxu0 %v1793
  %1816 = vmatprep.subr.bf16.mxu0 0
  %1817 = vmatpush1.bf16.msra.mxu0 %v1794
  %1818 = vmatprep.subr.bf16.mxu0 0
  %1819 = vmatpush1.bf16.msra.mxu0 %v1795
  %1820 = vmatprep.subr.bf16.mxu0 0
  %1821 = vmatpush1.bf16.msra.mxu0 0
  %1822 = vmatprep.subr.bf16.mxu0 0
  %1823 = vmatpush1.bf16.msra.mxu0 0
  %1824 = vmatprep.subr.bf16.mxu0 0
  %1825 = vmatpush1.bf16.msra.mxu0 0
  %1826 = vmatprep.subr.bf16.mxu0 0
  %1827 = vmatpush1.bf16.msra.mxu0 0
  %1828 = vmatprep.subr.bf16.mxu0 0
  %1829 = vmatpush1.bf16.msra.mxu0 0
  %1830 = vmatprep.subr.bf16.mxu0 0
  %1831 = vmatpush1.bf16.msra.mxu0 0
  %1832 = vmatprep.subr.bf16.mxu0 0
  %1833 = vmatpush1.bf16.msra.mxu0 0
  %1834 = vmatprep.subr.bf16.mxu0 0
  %1835 = vmatpush1.bf16.msra.mxu0 0
  %1836 = vmatprep.subr.bf16.mxu0 0
  %1837 = vmatpush1.bf16.msra.mxu0 0
  %1838 = vmatprep.subr.bf16.mxu0 0
  %1839 = vmatpush1.bf16.msra.mxu0 0
  %1840 = vmatprep.subr.bf16.mxu0 0
  %1841 = vmatpush1.bf16.msra.mxu0 0
  %1842 = vmatprep.subr.bf16.mxu0 0
  %1843 = vmatpush1.bf16.msra.mxu0 0
  %1844 = vmatprep.mubr.bf16.mxu0 0
  %1845 = vmatmul.mubr.bf16.gmra.mrb[0].mxu0 %v1801
  %v1846 = vpop.f32.mrb[0].mxu0
  %v1847 = vadd.f32 %v1774, %v1846
  %v1848 = vpop.f32.mrb[0].mxu0
  %v1849 = vpop.f32.mrb[0].mxu0
  %v1850 = vadd.f32 %v1774, %v1849
  %v1851 = vpop.f32.mrb[0].mxu0
  %1852 = vmatprep.mubr.bf16.mxu0 0
  %1853 = vmatmul.mubr.bf16.gmra.mrb[0].mxu0 %v1804
  %v1854 = vpop.f32.mrb[0].mxu0
  %v1855 = vadd.f32 %v1774, %v1854
  %v1856 = vpop.f32.mrb[0].mxu0
  %v1857 = vpop.f32.mrb[0].mxu0
  %v1858 = vadd.f32 %v1774, %v1857
  %v1859 = vpop.f32.mrb[0].mxu0
  %1860 = vmatprep.mubr.bf16.mxu0 0
  %1861 = vmatmul.mubr.bf16.gmra.mrb[0].mxu0 %v1807
  %v1862 = vpop.f32.mrb[0].mxu0
  %v1863 = vadd.f32 %v1774, %v1862
  %v1864 = vpop.f32.mrb[0].mxu0
  %v1865 = vpop.f32.mrb[0].mxu0
  %v1866 = vadd.f32 %v1774, %v1865
  %v1867 = vpop.f32.mrb[0].mxu0
  %1868 = vmatprep.mubr.bf16.mxu0 0
  %1869 = vmatmul.mubr.bf16.gmra.mrb[0].mxu0 %v1810
  %v1870 = vpop.f32.mrb[0].mxu0
  %v1871 = vadd.f32 %v1774, %v1870
  %v1872 = vpop.f32.mrb[0].mxu0
  %v1873 = vpop.f32.mrb[0].mxu0
  %v1874 = vadd.f32 %v1774, %v1873
  %v1875 = vpop.f32.mrb[0].mxu0
  %1876 = vdwg.mxu0
  %1877 = vst.msk [vmem:[#allocation3] sm:$0xff] %vm190, %v1847
  %1878 = vst.msk [vmem:[#allocation3 + $0x8] sm:$0xff] %vm190, %v1850
  %1879 = vst.msk [vmem:[#allocation3 + $0x10] sm:$0xff] %vm190, %v1855
  %1880 = vst.msk [vmem:[#allocation3 + $0x18] sm:$0xff] %vm190, %v1858
  %1881 = vst.msk [vmem:[#allocation3 + $0x20] sm:$0xff] %vm190, %v1863
  %1882 = vst.msk [vmem:[#allocation3 + $0x28] sm:$0xff] %vm190, %v1866
  %1883 = vst.msk [vmem:[#allocation3 + $0x30] sm:$0xff] %vm190, %v1871
  %1884 = vst.msk [vmem:[#allocation3 + $0x38] sm:$0xff] %vm190, %v1874
  %v1885 = vld [vmem:[%s11] sm:$0xf]
  %v1886 = vld [vmem:[%s11 + $0x4] sm:$0xf]
  %v1887 = vld [vmem:[%s11 + $0x8] sm:$0xf]
  %v1888 = vld [vmem:[%s11 + $0xc] sm:$0xf]
  %v1889 = vld [vmem:[%s15] sm:$0xf]
  %v1890 = vld [vmem:[%s15 + $0x4] sm:$0xf]
  %v1891 = vld [vmem:[%s15 + $0x8] sm:$0xf]
  %v1892 = vld [vmem:[%s15 + $0xc] sm:$0xf]
  %v1893 = vld [vmem:[%s12] sm:$0x1]
  %v1895 = vlaneseq
  %v1896 = vshrl.u32 %v1895, 7
  %v1897 = vsub.s32 0, %v1896
  %v1898 = vrot.slane %v1893, %v1897
  %v1899 = vld [vmem:[%s16] sm:$0x1]
  %v1901 = vlaneseq
  %v1902 = vshrl.u32 %v1901, 7
  %v1903 = vsub.s32 0, %v1902
  %v1904 = vrot.slane %v1899, %v1903
  %v1905 = vld [vmem:[#allocation2] sm:$0xff]
  %v1910 = vunpack.c.l.b16 %v1885
  %v1911 = vunpack.c.l.b16 %v1886
  %v1912 = vunpack.c.l.b16 %v1887
  %v1913 = vunpack.c.l.b16 %v1888
  %v1914 = vpack.c.b16 %v1911, %v1910
  %v1915 = vpack.c.b16 %v1913, %v1912
  %1918 = vmatprep.subr.bf16.mxu0 0
  %1919 = vmatpush1.bf16.msra.mxu0 %v1914
  %1920 = vmatprep.subr.bf16.mxu0 0
  %1921 = vmatpush1.bf16.msra.mxu0 %v1915
  %1922 = vmatprep.subr.bf16.mxu0 0
  %1923 = vmatpush1.bf16.msra.mxu0 0
  %1924 = vmatprep.subr.bf16.mxu0 0
  %1925 = vmatpush1.bf16.msra.mxu0 0
  %1926 = vmatprep.subr.bf16.mxu0 0
  %1927 = vmatpush1.bf16.msra.mxu0 0
  %1928 = vmatprep.subr.bf16.mxu0 0
  %1929 = vmatpush1.bf16.msra.mxu0 0
  %1930 = vmatprep.subr.bf16.mxu0 0
  %1931 = vmatpush1.bf16.msra.mxu0 0
  %1932 = vmatprep.subr.bf16.mxu0 0
  %1933 = vmatpush1.bf16.msra.mxu0 0
  %1934 = vmatprep.subr.bf16.mxu0 0
  %1935 = vmatpush1.bf16.msra.mxu0 0
  %1936 = vmatprep.subr.bf16.mxu0 0
  %1937 = vmatpush1.bf16.msra.mxu0 0
  %1938 = vmatprep.subr.bf16.mxu0 0
  %1939 = vmatpush1.bf16.msra.mxu0 0
  %1940 = vmatprep.subr.bf16.mxu0 0
  %1941 = vmatpush1.bf16.msra.mxu0 0
  %1942 = vmatprep.subr.bf16.mxu0 0
  %1943 = vmatpush1.bf16.msra.mxu0 0
  %1944 = vmatprep.subr.bf16.mxu0 0
  %1945 = vmatpush1.bf16.msra.mxu0 0
  %1946 = vmatprep.subr.bf16.mxu0 0
  %1947 = vmatpush1.bf16.msra.mxu0 0
  %1948 = vmatprep.subr.bf16.mxu0 0
  %1949 = vmatpush1.bf16.msra.mxu0 0
  %1950 = vmatprep.mubr.bf16.mxu0 0
  %1951 = vmatmul.mubr.bf16.gmra.mrb[0].mxu0 %v358
  %v1952 = vpop.f32.mrb[0].mxu0
  %v1953 = vadd.f32 0.0, %v1952
  %v1954 = vpop.f32.mrb[0].mxu0
  %v1955 = vpop.f32.mrb[0].mxu0
  %v1956 = vpop.f32.mrb[0].mxu0
  %1957 = vdwg.mxu0
  %v1958 = vadd.f32 %v1905, %v1953
  %v1959 = vxor.u32 %v1958, 2147483648
  %v1960 = vmul.f32 %v1959, 1.442695
  %v1961 = vpow.pop %v1960
  %v1962 = vadd.f32 %v1961, 1.0
  %v1963 = vrcp.pop %v1962
  %v1964 = vmul.f32 1.0, %v1963
  %1965 = vrot.lane.b32.xlu0 %v1898, 64
  %v1966 = vpop.permute.xlu0 %1965
  %v1968 = vadd.f32 %v1953, %v1966
  %1970 = vrot.lane.b32.xlu0 %v1968, 64
  %v1971 = vpop.permute.xlu0 %1970
  %v1973 = vmul.f32 %v1964, %v1971
  %1975 = vrot.lane.b32.xlu0 %v1973, 64
  %v1976 = vpop.permute.xlu0 %1975
  %v1978 = vadd.f32 %v1905, %v1976
  %v1979 = vtanh.pop %v1978
  %v1980 = vsub.f32 1.0, %v1964
  %1982 = vrot.lane.b32.xlu0 %v1979, 96
  %v1983 = vpop.permute.xlu0 %1982
  %v1985 = vmul.f32 %v1980, %v1983
  %v1986 = vmul.f32 %v1964, 0.0
  %v1987 = vadd.f32 %v1985, %v1986
  %v1988 = vld [vmem:[#allocation3 + $0x38] sm:$0xff]
  %v1993 = vunpack.c.l.b16 %v1889
  %v1994 = vunpack.c.l.b16 %v1890
  %v1995 = vunpack.c.l.b16 %v1891
  %v1996 = vunpack.c.l.b16 %v1892
  %v1997 = vpack.c.b16 %v1994, %v1993
  %v1998 = vpack.c.b16 %v1996, %v1995
  %2001 = vmatprep.subr.bf16.mxu0 0
  %2002 = vmatpush1.bf16.msra.mxu0 %v1997
  %2003 = vmatprep.subr.bf16.mxu0 0
  %2004 = vmatpush1.bf16.msra.mxu0 %v1998
  %2005 = vmatprep.subr.bf16.mxu0 0
  %2006 = vmatpush1.bf16.msra.mxu0 0
  %2007 = vmatprep.subr.bf16.mxu0 0
  %2008 = vmatpush1.bf16.msra.mxu0 0
  %2009 = vmatprep.subr.bf16.mxu0 0
  %2010 = vmatpush1.bf16.msra.mxu0 0
  %2011 = vmatprep.subr.bf16.mxu0 0
  %2012 = vmatpush1.bf16.msra.mxu0 0
  %2013 = vmatprep.subr.bf16.mxu0 0
  %2014 = vmatpush1.bf16.msra.mxu0 0
  %2015 = vmatprep.subr.bf16.mxu0 0
  %2016 = vmatpush1.bf16.msra.mxu0 0
  %2017 = vmatprep.subr.bf16.mxu0 0
  %2018 = vmatpush1.bf16.msra.mxu0 0
  %2019 = vmatprep.subr.bf16.mxu0 0
  %2020 = vmatpush1.bf16.msra.mxu0 0
  %2021 = vmatprep.subr.bf16.mxu0 0
  %2022 = vmatpush1.bf16.msra.mxu0 0
  %2023 = vmatprep.subr.bf16.mxu0 0
  %2024 = vmatpush1.bf16.msra.mxu0 0
  %2025 = vmatprep.subr.bf16.mxu0 0
  %2026 = vmatpush1.bf16.msra.mxu0 0
  %2027 = vmatprep.subr.bf16.mxu0 0
  %2028 = vmatpush1.bf16.msra.mxu0 0
  %2029 = vmatprep.subr.bf16.mxu0 0
  %2030 = vmatpush1.bf16.msra.mxu0 0
  %2031 = vmatprep.subr.bf16.mxu0 0
  %2032 = vmatpush1.bf16.msra.mxu0 0
  %2033 = vmatprep.mubr.bf16.mxu0 0
  %2034 = vmatmul.mubr.bf16.gmra.mrb[0].mxu0 %v358
  %v2035 = vpop.f32.mrb[0].mxu0
  %v2036 = vadd.f32 0.0, %v2035
  %v2037 = vpop.f32.mrb[0].mxu0
  %v2038 = vpop.f32.mrb[0].mxu0
  %v2039 = vpop.f32.mrb[0].mxu0
  %2040 = vdwg.mxu0
  %v2041 = vadd.f32 %v1988, %v2036
  %v2042 = vxor.u32 %v2041, 2147483648
  %v2043 = vmul.f32 %v2042, 1.442695
  %v2044 = vpow.pop %v2043
  %v2045 = vadd.f32 %v2044, 1.0
  %v2046 = vrcp.pop %v2045
  %v2047 = vmul.f32 1.0, %v2046
  %2048 = vrot.lane.b32.xlu0 %v1904, 64
  %v2049 = vpop.permute.xlu0 %2048
  %v2051 = vadd.f32 %v2036, %v2049
  %2053 = vrot.lane.b32.xlu0 %v2051, 64
  %v2054 = vpop.permute.xlu0 %2053
  %v2056 = vmul.f32 %v2047, %v2054
  %2058 = vrot.lane.b32.xlu0 %v2056, 64
  %v2059 = vpop.permute.xlu0 %2058
  %v2061 = vadd.f32 %v1988, %v2059
  %v2062 = vtanh.pop %v2061
  %v2063 = vsub.f32 1.0, %v2047
  %2065 = vrot.lane.b32.xlu0 %v2062, 96
  %v2066 = vpop.permute.xlu0 %2065
  %v2068 = vmul.f32 %v2063, %v2066
  %v2069 = vmul.f32 %v2047, 0.0
  %v2070 = vadd.f32 %v2068, %v2069
  %2072 = vrot.lane.b32.xlu0 %v1987, 96
  %v2073 = vpop.permute.xlu0 %2072
  %2075 = vst.msk [vmem:[#allocation4] sm:$0xff] %vm356, %v2073
  %2076 = vst.msk [vmem:[#allocation4 + $0x38] sm:$0xff] %vm518, %v2070
  %v2077 = vld [vmem:[#allocation2 + $0x8] sm:$0xff]
  %v2078 = vpack.c.bf16 %v1987, %v1987
  %2080 = vrot.lane.b32.xlu0 %v2078, 96
  %v2081 = vpop.permute.xlu0 %2080
  %v2083 = vsel %vm356, %v2081, 0
  %2085 = vmatprep.subr.bf16.mxu0 0
  %2086 = vmatpush1.bf16.msra.mxu0 %v1914
  %2087 = vmatprep.subr.bf16.mxu0 0
  %2088 = vmatpush1.bf16.msra.mxu0 %v1915
  %2089 = vmatprep.subr.bf16.mxu0 0
  %2090 = vmatpush1.bf16.msra.mxu0 0
  %2091 = vmatprep.subr.bf16.mxu0 0
  %2092 = vmatpush1.bf16.msra.mxu0 0
  %2093 = vmatprep.subr.bf16.mxu0 0
  %2094 = vmatpush1.bf16.msra.mxu0 0
  %2095 = vmatprep.subr.bf16.mxu0 0
  %2096 = vmatpush1.bf16.msra.mxu0 0
  %2097 = vmatprep.subr.bf16.mxu0 0
  %2098 = vmatpush1.bf16.msra.mxu0 0
  %2099 = vmatprep.subr.bf16.mxu0 0
  %2100 = vmatpush1.bf16.msra.mxu0 0
  %2101 = vmatprep.subr.bf16.mxu0 0
  %2102 = vmatpush1.bf16.msra.mxu0 0
  %2103 = vmatprep.subr.bf16.mxu0 0
  %2104 = vmatpush1.bf16.msra.mxu0 0
  %2105 = vmatprep.subr.bf16.mxu0 0
  %2106 = vmatpush1.bf16.msra.mxu0 0
  %2107 = vmatprep.subr.bf16.mxu0 0
  %2108 = vmatpush1.bf16.msra.mxu0 0
  %2109 = vmatprep.subr.bf16.mxu0 0
  %2110 = vmatpush1.bf16.msra.mxu0 0
  %2111 = vmatprep.subr.bf16.mxu0 0
  %2112 = vmatpush1.bf16.msra.mxu0 0
  %2113 = vmatprep.subr.bf16.mxu0 0
  %2114 = vmatpush1.bf16.msra.mxu0 0
  %2115 = vmatprep.subr.bf16.mxu0 0
  %2116 = vmatpush1.bf16.msra.mxu0 0
  %2117 = vmatprep.mubr.bf16.mxu0 0
  %2118 = vmatmul.mubr.bf16.gmra.mrb[0].mxu0 %v2083
  %v2119 = vpop.f32.mrb[0].mxu0
  %v2120 = vadd.f32 0.0, %v2119
  %v2121 = vpop.f32.mrb[0].mxu0
  %v2122 = vpop.f32.mrb[0].mxu0
  %v2123 = vpop.f32.mrb[0].mxu0
  %2124 = vdwg.mxu0
  %v2125 = vadd.f32 %v2077, %v2120
  %v2126 = vxor.u32 %v2125, 2147483648
  %v2127 = vmul.f32 %v2126, 1.442695
  %v2128 = vpow.pop %v2127
  %v2129 = vadd.f32 %v2128, 1.0
  %v2130 = vrcp.pop %v2129
  %v2131 = vmul.f32 1.0, %v2130
  %v2132 = vadd.f32 %v2120, %v1966
  %2134 = vrot.lane.b32.xlu0 %v2132, 64
  %v2135 = vpop.permute.xlu0 %2134
  %v2137 = vmul.f32 %v2131, %v2135
  %2139 = vrot.lane.b32.xlu0 %v2137, 64
  %v2140 = vpop.permute.xlu0 %2139
  %v2142 = vadd.f32 %v2077, %v2140
  %v2143 = vtanh.pop %v2142
  %v2144 = vsub.f32 1.0, %v2131
  %2146 = vrot.lane.b32.xlu0 %v2143, 96
  %v2147 = vpop.permute.xlu0 %2146
  %v2149 = vmul.f32 %v2144, %v2147
  %v2150 = vmul.f32 %v2131, %v1987
  %v2151 = vadd.f32 %v2149, %v2150
  %v2152 = vld [vmem:[#allocation3 + $0x30] sm:$0xff]
  %v2153 = vpack.c.bf16 %v2070, %v2070
  %2155 = vrot.lane.b32.xlu0 %v2153, 96
  %v2156 = vpop.permute.xlu0 %2155
  %v2158 = vsel %vm356, %v2156, 0
  %2160 = vmatprep.subr.bf16.mxu0 0
  %2161 = vmatpush1.bf16.msra.mxu0 %v1997
  %2162 = vmatprep.subr.bf16.mxu0 0
  %2163 = vmatpush1.bf16.msra.mxu0 %v1998
  %2164 = vmatprep.subr.bf16.mxu0 0
  %2165 = vmatpush1.bf16.msra.mxu0 0
  %2166 = vmatprep.subr.bf16.mxu0 0
  %2167 = vmatpush1.bf16.msra.mxu0 0
  %2168 = vmatprep.subr.bf16.mxu0 0
  %2169 = vmatpush1.bf16.msra.mxu0 0
  %2170 = vmatprep.subr.bf16.mxu0 0
  %2171 = vmatpush1.bf16.msra.mxu0 0
  %2172 = vmatprep.subr.bf16.mxu0 0
  %2173 = vmatpush1.bf16.msra.mxu0 0
  %2174 = vmatprep.subr.bf16.mxu0 0
  %2175 = vmatpush1.bf16.msra.mxu0 0
  %2176 = vmatprep.subr.bf16.mxu0 0
  %2177 = vmatpush1.bf16.msra.mxu0 0
  %2178 = vmatprep.subr.bf16.mxu0 0
  %2179 = vmatpush1.bf16.msra.mxu0 0
  %2180 = vmatprep.subr.bf16.mxu0 0
  %2181 = vmatpush1.bf16.msra.mxu0 0
  %2182 = vmatprep.subr.bf16.mxu0 0
  %2183 = vmatpush1.bf16.msra.mxu0 0
  %2184 = vmatprep.subr.bf16.mxu0 0
  %2185 = vmatpush1.bf16.msra.mxu0 0
  %2186 = vmatprep.subr.bf16.mxu0 0
  %2187 = vmatpush1.bf16.msra.mxu0 0
  %2188 = vmatprep.subr.bf16.mxu0 0
  %2189 = vmatpush1.bf16.msra.mxu0 0
  %2190 = vmatprep.subr.bf16.mxu0 0
  %2191 = vmatpush1.bf16.msra.mxu0 0
  %2192 = vmatprep.mubr.bf16.mxu0 0
  %2193 = vmatmul.mubr.bf16.gmra.mrb[0].mxu0 %v2158
  %v2194 = vpop.f32.mrb[0].mxu0
  %v2195 = vadd.f32 0.0, %v2194
  %v2196 = vpop.f32.mrb[0].mxu0
  %v2197 = vpop.f32.mrb[0].mxu0
  %v2198 = vpop.f32.mrb[0].mxu0
  %2199 = vdwg.mxu0
  %v2200 = vadd.f32 %v2152, %v2195
  %v2201 = vxor.u32 %v2200, 2147483648
  %v2202 = vmul.f32 %v2201, 1.442695
  %v2203 = vpow.pop %v2202
  %v2204 = vadd.f32 %v2203, 1.0
  %v2205 = vrcp.pop %v2204
  %v2206 = vmul.f32 1.0, %v2205
  %v2207 = vadd.f32 %v2195, %v2049
  %2209 = vrot.lane.b32.xlu0 %v2207, 64
  %v2210 = vpop.permute.xlu0 %2209
  %v2212 = vmul.f32 %v2206, %v2210
  %2214 = vrot.lane.b32.xlu0 %v2212, 64
  %v2215 = vpop.permute.xlu0 %2214
  %v2217 = vadd.f32 %v2152, %v2215
  %v2218 = vtanh.pop %v2217
  %v2219 = vsub.f32 1.0, %v2206
  %2221 = vrot.lane.b32.xlu0 %v2218, 96
  %v2222 = vpop.permute.xlu0 %2221
  %v2224 = vmul.f32 %v2219, %v2222
  %v2225 = vmul.f32 %v2206, %v2070
  %v2226 = vadd.f32 %v2224, %v2225
  %2228 = vrot.lane.b32.xlu0 %v2151, 96
  %v2229 = vpop.permute.xlu0 %2228
  %2231 = vst.msk [vmem:[#allocation4 + $0x8] sm:$0xff] %vm356, %v2229
  %2232 = vst.msk [vmem:[#allocation4 + $0x30] sm:$0xff] %vm518, %v2226
  %v2233 = vld [vmem:[#allocation2 + $0x10] sm:$0xff]
  %v2234 = vpack.c.bf16 %v2151, %v2151
  %2236 = vrot.lane.b32.xlu0 %v2234, 96
  %v2237 = vpop.permute.xlu0 %2236
  %v2239 = vsel %vm356, %v2237, 0
  %2241 = vmatprep.subr.bf16.mxu0 0
  %2242 = vmatpush1.bf16.msra.mxu0 %v1914
  %2243 = vmatprep.subr.bf16.mxu0 0
  %2244 = vmatpush1.bf16.msra.mxu0 %v1915
  %2245 = vmatprep.subr.bf16.mxu0 0
  %2246 = vmatpush1.bf16.msra.mxu0 0
  %2247 = vmatprep.subr.bf16.mxu0 0
  %2248 = vmatpush1.bf16.msra.mxu0 0
  %2249 = vmatprep.subr.bf16.mxu0 0
  %2250 = vmatpush1.bf16.msra.mxu0 0
  %2251 = vmatprep.subr.bf16.mxu0 0
  %2252 = vmatpush1.bf16.msra.mxu0 0
  %2253 = vmatprep.subr.bf16.mxu0 0
  %2254 = vmatpush1.bf16.msra.mxu0 0
  %2255 = vmatprep.subr.bf16.mxu0 0
  %2256 = vmatpush1.bf16.msra.mxu0 0
  %2257 = vmatprep.subr.bf16.mxu0 0
  %2258 = vmatpush1.bf16.msra.mxu0 0
  %2259 = vmatprep.subr.bf16.mxu0 0
  %2260 = vmatpush1.bf16.msra.mxu0 0
  %2261 = vmatprep.subr.bf16.mxu0 0
  %2262 = vmatpush1.bf16.msra.mxu0 0
  %2263 = vmatprep.subr.bf16.mxu0 0
  %2264 = vmatpush1.bf16.msra.mxu0 0
  %2265 = vmatprep.subr.bf16.mxu0 0
  %2266 = vmatpush1.bf16.msra.mxu0 0
  %2267 = vmatprep.subr.bf16.mxu0 0
  %2268 = vmatpush1.bf16.msra.mxu0 0
  %2269 = vmatprep.subr.bf16.mxu0 0
  %2270 = vmatpush1.bf16.msra.mxu0 0
  %2271 = vmatprep.subr.bf16.mxu0 0
  %2272 = vmatpush1.bf16.msra.mxu0 0
  %2273 = vmatprep.mubr.bf16.mxu0 0
  %2274 = vmatmul.mubr.bf16.gmra.mrb[0].mxu0 %v2239
  %v2275 = vpop.f32.mrb[0].mxu0
  %v2276 = vadd.f32 0.0, %v2275
  %v2277 = vpop.f32.mrb[0].mxu0
  %v2278 = vpop.f32.mrb[0].mxu0
  %v2279 = vpop.f32.mrb[0].mxu0
  %2280 = vdwg.mxu0
  %v2281 = vadd.f32 %v2233, %v2276
  %v2282 = vxor.u32 %v2281, 2147483648
  %v2283 = vmul.f32 %v2282, 1.442695
  %v2284 = vpow.pop %v2283
  %v2285 = vadd.f32 %v2284, 1.0
  %v2286 = vrcp.pop %v2285
  %v2287 = vmul.f32 1.0, %v2286
  %v2288 = vadd.f32 %v2276, %v1966
  %2290 = vrot.lane.b32.xlu0 %v2288, 64
  %v2291 = vpop.permute.xlu0 %2290
  %v2293 = vmul.f32 %v2287, %v2291
  %2295 = vrot.lane.b32.xlu0 %v2293, 64
  %v2296 = vpop.permute.xlu0 %2295
  %v2298 = vadd.f32 %v2233, %v2296
  %v2299 = vtanh.pop %v2298
  %v2300 = vsub.f32 1.0, %v2287
  %2302 = vrot.lane.b32.xlu0 %v2299, 96
  %v2303 = vpop.permute.xlu0 %2302
  %v2305 = vmul.f32 %v2300, %v2303
  %v2306 = vmul.f32 %v2287, %v2151
  %v2307 = vadd.f32 %v2305, %v2306
  %v2308 = vld [vmem:[#allocation3 + $0x28] sm:$0xff]
  %v2309 = vpack.c.bf16 %v2226, %v2226
  %2311 = vrot.lane.b32.xlu0 %v2309, 96
  %v2312 = vpop.permute.xlu0 %2311
  %v2314 = vsel %vm356, %v2312, 0
  %2316 = vmatprep.subr.bf16.mxu0 0
  %2317 = vmatpush1.bf16.msra.mxu0 %v1997
  %2318 = vmatprep.subr.bf16.mxu0 0
  %2319 = vmatpush1.bf16.msra.mxu0 %v1998
  %2320 = vmatprep.subr.bf16.mxu0 0
  %2321 = vmatpush1.bf16.msra.mxu0 0
  %2322 = vmatprep.subr.bf16.mxu0 0
  %2323 = vmatpush1.bf16.msra.mxu0 0
  %2324 = vmatprep.subr.bf16.mxu0 0
  %2325 = vmatpush1.bf16.msra.mxu0 0
  %2326 = vmatprep.subr.bf16.mxu0 0
  %2327 = vmatpush1.bf16.msra.mxu0 0
  %2328 = vmatprep.subr.bf16.mxu0 0
  %2329 = vmatpush1.bf16.msra.mxu0 0
  %2330 = vmatprep.subr.bf16.mxu0 0
  %2331 = vmatpush1.bf16.msra.mxu0 0
  %2332 = vmatprep.subr.bf16.mxu0 0
  %2333 = vmatpush1.bf16.msra.mxu0 0
  %2334 = vmatprep.subr.bf16.mxu0 0
  %2335 = vmatpush1.bf16.msra.mxu0 0
  %2336 = vmatprep.subr.bf16.mxu0 0
  %2337 = vmatpush1.bf16.msra.mxu0 0
  %2338 = vmatprep.subr.bf16.mxu0 0
  %2339 = vmatpush1.bf16.msra.mxu0 0
  %2340 = vmatprep.subr.bf16.mxu0 0
  %2341 = vmatpush1.bf16.msra.mxu0 0
  %2342 = vmatprep.subr.bf16.mxu0 0
  %2343 = vmatpush1.bf16.msra.mxu0 0
  %2344 = vmatprep.subr.bf16.mxu0 0
  %2345 = vmatpush1.bf16.msra.mxu0 0
  %2346 = vmatprep.subr.bf16.mxu0 0
  %2347 = vmatpush1.bf16.msra.mxu0 0
  %2348 = vmatprep.mubr.bf16.mxu0 0
  %2349 = vmatmul.mubr.bf16.gmra.mrb[0].mxu0 %v2314
  %v2350 = vpop.f32.mrb[0].mxu0
  %v2351 = vadd.f32 0.0, %v2350
  %v2352 = vpop.f32.mrb[0].mxu0
  %v2353 = vpop.f32.mrb[0].mxu0
  %v2354 = vpop.f32.mrb[0].mxu0
  %2355 = vdwg.mxu0
  %v2356 = vadd.f32 %v2308, %v2351
  %v2357 = vxor.u32 %v2356, 2147483648
  %v2358 = vmul.f32 %v2357, 1.442695
  %v2359 = vpow.pop %v2358
  %v2360 = vadd.f32 %v2359, 1.0
  %v2361 = vrcp.pop %v2360
  %v2362 = vmul.f32 1.0, %v2361
  %v2363 = vadd.f32 %v2351, %v2049
  %2365 = vrot.lane.b32.xlu0 %v2363, 64
  %v2366 = vpop.permute.xlu0 %2365
  %v2368 = vmul.f32 %v2362, %v2366
  %2370 = vrot.lane.b32.xlu0 %v2368, 64
  %v2371 = vpop.permute.xlu0 %2370
  %v2373 = vadd.f32 %v2308, %v2371
  %v2374 = vtanh.pop %v2373
  %v2375 = vsub.f32 1.0, %v2362
  %2377 = vrot.lane.b32.xlu0 %v2374, 96
  %v2378 = vpop.permute.xlu0 %2377
  %v2380 = vmul.f32 %v2375, %v2378
  %v2381 = vmul.f32 %v2362, %v2226
  %v2382 = vadd.f32 %v2380, %v2381
  %2384 = vrot.lane.b32.xlu0 %v2307, 96
  %v2385 = vpop.permute.xlu0 %2384
  %2387 = vst.msk [vmem:[#allocation4 + $0x10] sm:$0xff] %vm356, %v2385
  %2388 = vst.msk [vmem:[#allocation4 + $0x28] sm:$0xff] %vm518, %v2382
  %v2389 = vld [vmem:[#allocation2 + $0x18] sm:$0xff]
  %v2390 = vpack.c.bf16 %v2307, %v2307
  %2392 = vrot.lane.b32.xlu0 %v2390, 96
  %v2393 = vpop.permute.xlu0 %2392
  %v2395 = vsel %vm356, %v2393, 0
  %2397 = vmatprep.subr.bf16.mxu0 0
  %2398 = vmatpush1.bf16.msra.mxu0 %v1914
  %2399 = vmatprep.subr.bf16.mxu0 0
  %2400 = vmatpush1.bf16.msra.mxu0 %v1915
  %2401 = vmatprep.subr.bf16.mxu0 0
  %2402 = vmatpush1.bf16.msra.mxu0 0
  %2403 = vmatprep.subr.bf16.mxu0 0
  %2404 = vmatpush1.bf16.msra.mxu0 0
  %2405 = vmatprep.subr.bf16.mxu0 0
  %2406 = vmatpush1.bf16.msra.mxu0 0
  %2407 = vmatprep.subr.bf16.mxu0 0
  %2408 = vmatpush1.bf16.msra.mxu0 0
  %2409 = vmatprep.subr.bf16.mxu0 0
  %2410 = vmatpush1.bf16.msra.mxu0 0
  %2411 = vmatprep.subr.bf16.mxu0 0
  %2412 = vmatpush1.bf16.msra.mxu0 0
  %2413 = vmatprep.subr.bf16.mxu0 0
  %2414 = vmatpush1.bf16.msra.mxu0 0
  %2415 = vmatprep.subr.bf16.mxu0 0
  %2416 = vmatpush1.bf16.msra.mxu0 0
  %2417 = vmatprep.subr.bf16.mxu0 0
  %2418 = vmatpush1.bf16.msra.mxu0 0
  %2419 = vmatprep.subr.bf16.mxu0 0
  %2420 = vmatpush1.bf16.msra.mxu0 0
  %2421 = vmatprep.subr.bf16.mxu0 0
  %2422 = vmatpush1.bf16.msra.mxu0 0
  %2423 = vmatprep.subr.bf16.mxu0 0
  %2424 = vmatpush1.bf16.msra.mxu0 0
  %2425 = vmatprep.subr.bf16.mxu0 0
  %2426 = vmatpush1.bf16.msra.mxu0 0
  %2427 = vmatprep.subr.bf16.mxu0 0
  %2428 = vmatpush1.bf16.msra.mxu0 0
  %2429 = vmatprep.mubr.bf16.mxu0 0
  %2430 = vmatmul.mubr.bf16.gmra.mrb[0].mxu0 %v2395
  %v2431 = vpop.f32.mrb[0].mxu0
  %v2432 = vadd.f32 0.0, %v2431
  %v2433 = vpop.f32.mrb[0].mxu0
  %v2434 = vpop.f32.mrb[0].mxu0
  %v2435 = vpop.f32.mrb[0].mxu0
  %2436 = vdwg.mxu0
  %v2437 = vadd.f32 %v2389, %v2432
  %v2438 = vxor.u32 %v2437, 2147483648
  %v2439 = vmul.f32 %v2438, 1.442695
  %v2440 = vpow.pop %v2439
  %v2441 = vadd.f32 %v2440, 1.0
  %v2442 = vrcp.pop %v2441
  %v2443 = vmul.f32 1.0, %v2442
  %v2444 = vadd.f32 %v2432, %v1966
  %2446 = vrot.lane.b32.xlu0 %v2444, 64
  %v2447 = vpop.permute.xlu0 %2446
  %v2449 = vmul.f32 %v2443, %v2447
  %2451 = vrot.lane.b32.xlu0 %v2449, 64
  %v2452 = vpop.permute.xlu0 %2451
  %v2454 = vadd.f32 %v2389, %v2452
  %v2455 = vtanh.pop %v2454
  %v2456 = vsub.f32 1.0, %v2443
  %2458 = vrot.lane.b32.xlu0 %v2455, 96
  %v2459 = vpop.permute.xlu0 %2458
  %v2461 = vmul.f32 %v2456, %v2459
  %v2462 = vmul.f32 %v2443, %v2307
  %v2463 = vadd.f32 %v2461, %v2462
  %v2464 = vld [vmem:[#allocation3 + $0x20] sm:$0xff]
  %v2465 = vpack.c.bf16 %v2382, %v2382
  %2467 = vrot.lane.b32.xlu0 %v2465, 96
  %v2468 = vpop.permute.xlu0 %2467
  %v2470 = vsel %vm356, %v2468, 0
  %2472 = vmatprep.subr.bf16.mxu0 0
  %2473 = vmatpush1.bf16.msra.mxu0 %v1997
  %2474 = vmatprep.subr.bf16.mxu0 0
  %2475 = vmatpush1.bf16.msra.mxu0 %v1998
  %2476 = vmatprep.subr.bf16.mxu0 0
  %2477 = vmatpush1.bf16.msra.mxu0 0
  %2478 = vmatprep.subr.bf16.mxu0 0
  %2479 = vmatpush1.bf16.msra.mxu0 0
  %2480 = vmatprep.subr.bf16.mxu0 0
  %2481 = vmatpush1.bf16.msra.mxu0 0
  %2482 = vmatprep.subr.bf16.mxu0 0
  %2483 = vmatpush1.bf16.msra.mxu0 0
  %2484 = vmatprep.subr.bf16.mxu0 0
  %2485 = vmatpush1.bf16.msra.mxu0 0
  %2486 = vmatprep.subr.bf16.mxu0 0
  %2487 = vmatpush1.bf16.msra.mxu0 0
  %2488 = vmatprep.subr.bf16.mxu0 0
  %2489 = vmatpush1.bf16.msra.mxu0 0
  %2490 = vmatprep.subr.bf16.mxu0 0
  %2491 = vmatpush1.bf16.msra.mxu0 0
  %2492 = vmatprep.subr.bf16.mxu0 0
  %2493 = vmatpush1.bf16.msra.mxu0 0
  %2494 = vmatprep.subr.bf16.mxu0 0
  %2495 = vmatpush1.bf16.msra.mxu0 0
  %2496 = vmatprep.subr.bf16.mxu0 0
  %2497 = vmatpush1.bf16.msra.mxu0 0
  %2498 = vmatprep.subr.bf16.mxu0 0
  %2499 = vmatpush1.bf16.msra.mxu0 0
  %2500 = vmatprep.subr.bf16.mxu0 0
  %2501 = vmatpush1.bf16.msra.mxu0 0
  %2502 = vmatprep.subr.bf16.mxu0 0
  %2503 = vmatpush1.bf16.msra.mxu0 0
  %2504 = vmatprep.mubr.bf16.mxu0 0
  %2505 = vmatmul.mubr.bf16.gmra.mrb[0].mxu0 %v2470
  %v2506 = vpop.f32.mrb[0].mxu0
  %v2507 = vadd.f32 0.0, %v2506
  %v2508 = vpop.f32.mrb[0].mxu0
  %v2509 = vpop.f32.mrb[0].mxu0
  %v2510 = vpop.f32.mrb[0].mxu0
  %2511 = vdwg.mxu0
  %v2512 = vadd.f32 %v2464, %v2507
  %v2513 = vxor.u32 %v2512, 2147483648
  %v2514 = vmul.f32 %v2513, 1.442695
  %v2515 = vpow.pop %v2514
  %v2516 = vadd.f32 %v2515, 1.0
  %v2517 = vrcp.pop %v2516
  %v2518 = vmul.f32 1.0, %v2517
  %v2519 = vadd.f32 %v2507, %v2049
  %2521 = vrot.lane.b32.xlu0 %v2519, 64
  %v2522 = vpop.permute.xlu0 %2521
  %v2524 = vmul.f32 %v2518, %v2522
  %2526 = vrot.lane.b32.xlu0 %v2524, 64
  %v2527 = vpop.permute.xlu0 %2526
  %v2529 = vadd.f32 %v2464, %v2527
  %v2530 = vtanh.pop %v2529
  %v2531 = vsub.f32 1.0, %v2518
  %2533 = vrot.lane.b32.xlu0 %v2530, 96
  %v2534 = vpop.permute.xlu0 %2533
  %v2536 = vmul.f32 %v2531, %v2534
  %v2537 = vmul.f32 %v2518, %v2382
  %v2538 = vadd.f32 %v2536, %v2537
  %2540 = vrot.lane.b32.xlu0 %v2463, 96
  %v2541 = vpop.permute.xlu0 %2540
  %2543 = vst.msk [vmem:[#allocation4 + $0x18] sm:$0xff] %vm356, %v2541
  %2544 = vst.msk [vmem:[#allocation4 + $0x20] sm:$0xff] %vm518, %v2538
  %v2545 = vld [vmem:[#allocation2 + $0x20] sm:$0xff]
  %v2546 = vpack.c.bf16 %v2463, %v2463
  %2548 = vrot.lane.b32.xlu0 %v2546, 96
  %v2549 = vpop.permute.xlu0 %2548
  %v2551 = vsel %vm356, %v2549, 0
  %2553 = vmatprep.subr.bf16.mxu0 0
  %2554 = vmatpush1.bf16.msra.mxu0 %v1914
  %2555 = vmatprep.subr.bf16.mxu0 0
  %2556 = vmatpush1.bf16.msra.mxu0 %v1915
  %2557 = vmatprep.subr.bf16.mxu0 0
  %2558 = vmatpush1.bf16.msra.mxu0 0
  %2559 = vmatprep.subr.bf16.mxu0 0
  %2560 = vmatpush1.bf16.msra.mxu0 0
  %2561 = vmatprep.subr.bf16.mxu0 0
  %2562 = vmatpush1.bf16.msra.mxu0 0
  %2563 = vmatprep.subr.bf16.mxu0 0
  %2564 = vmatpush1.bf16.msra.mxu0 0
  %2565 = vmatprep.subr.bf16.mxu0 0
  %2566 = vmatpush1.bf16.msra.mxu0 0
  %2567 = vmatprep.subr.bf16.mxu0 0
  %2568 = vmatpush1.bf16.msra.mxu0 0
  %2569 = vmatprep.subr.bf16.mxu0 0
  %2570 = vmatpush1.bf16.msra.mxu0 0
  %2571 = vmatprep.subr.bf16.mxu0 0
  %2572 = vmatpush1.bf16.msra.mxu0 0
  %2573 = vmatprep.subr.bf16.mxu0 0
  %2574 = vmatpush1.bf16.msra.mxu0 0
  %2575 = vmatprep.subr.bf16.mxu0 0
  %2576 = vmatpush1.bf16.msra.mxu0 0
  %2577 = vmatprep.subr.bf16.mxu0 0
  %2578 = vmatpush1.bf16.msra.mxu0 0
  %2579 = vmatprep.subr.bf16.mxu0 0
  %2580 = vmatpush1.bf16.msra.mxu0 0
  %2581 = vmatprep.subr.bf16.mxu0 0
  %2582 = vmatpush1.bf16.msra.mxu0 0
  %2583 = vmatprep.subr.bf16.mxu0 0
  %2584 = vmatpush1.bf16.msra.mxu0 0
  %2585 = vmatprep.mubr.bf16.mxu0 0
  %2586 = vmatmul.mubr.bf16.gmra.mrb[0].mxu0 %v2551
  %v2587 = vpop.f32.mrb[0].mxu0
  %v2588 = vadd.f32 0.0, %v2587
  %v2589 = vpop.f32.mrb[0].mxu0
  %v2590 = vpop.f32.mrb[0].mxu0
  %v2591 = vpop.f32.mrb[0].mxu0
  %2592 = vdwg.mxu0
  %v2593 = vadd.f32 %v2545, %v2588
  %v2594 = vxor.u32 %v2593, 2147483648
  %v2595 = vmul.f32 %v2594, 1.442695
  %v2596 = vpow.pop %v2595
  %v2597 = vadd.f32 %v2596, 1.0
  %v2598 = vrcp.pop %v2597
  %v2599 = vmul.f32 1.0, %v2598
  %v2600 = vadd.f32 %v2588, %v1966
  %2602 = vrot.lane.b32.xlu0 %v2600, 64
  %v2603 = vpop.permute.xlu0 %2602
  %v2605 = vmul.f32 %v2599, %v2603
  %2607 = vrot.lane.b32.xlu0 %v2605, 64
  %v2608 = vpop.permute.xlu0 %2607
  %v2610 = vadd.f32 %v2545, %v2608
  %v2611 = vtanh.pop %v2610
  %v2612 = vsub.f32 1.0, %v2599
  %2614 = vrot.lane.b32.xlu0 %v2611, 96
  %v2615 = vpop.permute.xlu0 %2614
  %v2617 = vmul.f32 %v2612, %v2615
  %v2618 = vmul.f32 %v2599, %v2463
  %v2619 = vadd.f32 %v2617, %v2618
  %v2620 = vld [vmem:[#allocation3 + $0x18] sm:$0xff]
  %v2621 = vpack.c.bf16 %v2538, %v2538
  %2623 = vrot.lane.b32.xlu0 %v2621, 96
  %v2624 = vpop.permute.xlu0 %2623
  %v2626 = vsel %vm356, %v2624, 0
  %2628 = vmatprep.subr.bf16.mxu0 0
  %2629 = vmatpush1.bf16.msra.mxu0 %v1997
  %2630 = vmatprep.subr.bf16.mxu0 0
  %2631 = vmatpush1.bf16.msra.mxu0 %v1998
  %2632 = vmatprep.subr.bf16.mxu0 0
  %2633 = vmatpush1.bf16.msra.mxu0 0
  %2634 = vmatprep.subr.bf16.mxu0 0
  %2635 = vmatpush1.bf16.msra.mxu0 0
  %2636 = vmatprep.subr.bf16.mxu0 0
  %2637 = vmatpush1.bf16.msra.mxu0 0
  %2638 = vmatprep.subr.bf16.mxu0 0
  %2639 = vmatpush1.bf16.msra.mxu0 0
  %2640 = vmatprep.subr.bf16.mxu0 0
  %2641 = vmatpush1.bf16.msra.mxu0 0
  %2642 = vmatprep.subr.bf16.mxu0 0
  %2643 = vmatpush1.bf16.msra.mxu0 0
  %2644 = vmatprep.subr.bf16.mxu0 0
  %2645 = vmatpush1.bf16.msra.mxu0 0
  %2646 = vmatprep.subr.bf16.mxu0 0
  %2647 = vmatpush1.bf16.msra.mxu0 0
  %2648 = vmatprep.subr.bf16.mxu0 0
  %2649 = vmatpush1.bf16.msra.mxu0 0
  %2650 = vmatprep.subr.bf16.mxu0 0
  %2651 = vmatpush1.bf16.msra.mxu0 0
  %2652 = vmatprep.subr.bf16.mxu0 0
  %2653 = vmatpush1.bf16.msra.mxu0 0
  %2654 = vmatprep.subr.bf16.mxu0 0
  %2655 = vmatpush1.bf16.msra.mxu0 0
  %2656 = vmatprep.subr.bf16.mxu0 0
  %2657 = vmatpush1.bf16.msra.mxu0 0
  %2658 = vmatprep.subr.bf16.mxu0 0
  %2659 = vmatpush1.bf16.msra.mxu0 0
  %2660 = vmatprep.mubr.bf16.mxu0 0
  %2661 = vmatmul.mubr.bf16.gmra.mrb[0].mxu0 %v2626
  %v2662 = vpop.f32.mrb[0].mxu0
  %v2663 = vadd.f32 0.0, %v2662
  %v2664 = vpop.f32.mrb[0].mxu0
  %v2665 = vpop.f32.mrb[0].mxu0
  %v2666 = vpop.f32.mrb[0].mxu0
  %2667 = vdwg.mxu0
  %v2668 = vadd.f32 %v2620, %v2663
  %v2669 = vxor.u32 %v2668, 2147483648
  %v2670 = vmul.f32 %v2669, 1.442695
  %v2671 = vpow.pop %v2670
  %v2672 = vadd.f32 %v2671, 1.0
  %v2673 = vrcp.pop %v2672
  %v2674 = vmul.f32 1.0, %v2673
  %v2675 = vadd.f32 %v2663, %v2049
  %2677 = vrot.lane.b32.xlu0 %v2675, 64
  %v2678 = vpop.permute.xlu0 %2677
  %v2680 = vmul.f32 %v2674, %v2678
  %2682 = vrot.lane.b32.xlu0 %v2680, 64
  %v2683 = vpop.permute.xlu0 %2682
  %v2685 = vadd.f32 %v2620, %v2683
  %v2686 = vtanh.pop %v2685
  %v2687 = vsub.f32 1.0, %v2674
  %2689 = vrot.lane.b32.xlu0 %v2686, 96
  %v2690 = vpop.permute.xlu0 %2689
  %v2692 = vmul.f32 %v2687, %v2690
  %v2693 = vmul.f32 %v2674, %v2538
  %v2694 = vadd.f32 %v2692, %v2693
  %2696 = vrot.lane.b32.xlu0 %v2619, 96
  %v2697 = vpop.permute.xlu0 %2696
  %2699 = vst.msk [vmem:[#allocation4 + $0x20] sm:$0xff] %vm356, %v2697
  %2700 = vst.msk [vmem:[#allocation4 + $0x18] sm:$0xff] %vm518, %v2694
  %v2701 = vld [vmem:[#allocation2 + $0x28] sm:$0xff]
  %v2702 = vpack.c.bf16 %v2619, %v2619
  %2704 = vrot.lane.b32.xlu0 %v2702, 96
  %v2705 = vpop.permute.xlu0 %2704
  %v2707 = vsel %vm356, %v2705, 0
  %2709 = vmatprep.subr.bf16.mxu0 0
  %2710 = vmatpush1.bf16.msra.mxu0 %v1914
  %2711 = vmatprep.subr.bf16.mxu0 0
  %2712 = vmatpush1.bf16.msra.mxu0 %v1915
  %2713 = vmatprep.subr.bf16.mxu0 0
  %2714 = vmatpush1.bf16.msra.mxu0 0
  %2715 = vmatprep.subr.bf16.mxu0 0
  %2716 = vmatpush1.bf16.msra.mxu0 0
  %2717 = vmatprep.subr.bf16.mxu0 0
  %2718 = vmatpush1.bf16.msra.mxu0 0
  %2719 = vmatprep.subr.bf16.mxu0 0
  %2720 = vmatpush1.bf16.msra.mxu0 0
  %2721 = vmatprep.subr.bf16.mxu0 0
  %2722 = vmatpush1.bf16.msra.mxu0 0
  %2723 = vmatprep.subr.bf16.mxu0 0
  %2724 = vmatpush1.bf16.msra.mxu0 0
  %2725 = vmatprep.subr.bf16.mxu0 0
  %2726 = vmatpush1.bf16.msra.mxu0 0
  %2727 = vmatprep.subr.bf16.mxu0 0
  %2728 = vmatpush1.bf16.msra.mxu0 0
  %2729 = vmatprep.subr.bf16.mxu0 0
  %2730 = vmatpush1.bf16.msra.mxu0 0
  %2731 = vmatprep.subr.bf16.mxu0 0
  %2732 = vmatpush1.bf16.msra.mxu0 0
  %2733 = vmatprep.subr.bf16.mxu0 0
  %2734 = vmatpush1.bf16.msra.mxu0 0
  %2735 = vmatprep.subr.bf16.mxu0 0
  %2736 = vmatpush1.bf16.msra.mxu0 0
  %2737 = vmatprep.subr.bf16.mxu0 0
  %2738 = vmatpush1.bf16.msra.mxu0 0
  %2739 = vmatprep.subr.bf16.mxu0 0
  %2740 = vmatpush1.bf16.msra.mxu0 0
  %2741 = vmatprep.mubr.bf16.mxu0 0
  %2742 = vmatmul.mubr.bf16.gmra.mrb[0].mxu0 %v2707
  %v2743 = vpop.f32.mrb[0].mxu0
  %v2744 = vadd.f32 0.0, %v2743
  %v2745 = vpop.f32.mrb[0].mxu0
  %v2746 = vpop.f32.mrb[0].mxu0
  %v2747 = vpop.f32.mrb[0].mxu0
  %2748 = vdwg.mxu0
  %v2749 = vadd.f32 %v2701, %v2744
  %v2750 = vxor.u32 %v2749, 2147483648
  %v2751 = vmul.f32 %v2750, 1.442695
  %v2752 = vpow.pop %v2751
  %v2753 = vadd.f32 %v2752, 1.0
  %v2754 = vrcp.pop %v2753
  %v2755 = vmul.f32 1.0, %v2754
  %v2756 = vadd.f32 %v2744, %v1966
  %2758 = vrot.lane.b32.xlu0 %v2756, 64
  %v2759 = vpop.permute.xlu0 %2758
  %v2761 = vmul.f32 %v2755, %v2759
  %2763 = vrot.lane.b32.xlu0 %v2761, 64
  %v2764 = vpop.permute.xlu0 %2763
  %v2766 = vadd.f32 %v2701, %v2764
  %v2767 = vtanh.pop %v2766
  %v2768 = vsub.f32 1.0, %v2755
  %2770 = vrot.lane.b32.xlu0 %v2767, 96
  %v2771 = vpop.permute.xlu0 %2770
  %v2773 = vmul.f32 %v2768, %v2771
  %v2774 = vmul.f32 %v2755, %v2619
  %v2775 = vadd.f32 %v2773, %v2774
  %v2776 = vld [vmem:[#allocation3 + $0x10] sm:$0xff]
  %v2777 = vpack.c.bf16 %v2694, %v2694
  %2779 = vrot.lane.b32.xlu0 %v2777, 96
  %v2780 = vpop.permute.xlu0 %2779
  %v2782 = vsel %vm356, %v2780, 0
  %2784 = vmatprep.subr.bf16.mxu0 0
  %2785 = vmatpush1.bf16.msra.mxu0 %v1997
  %2786 = vmatprep.subr.bf16.mxu0 0
  %2787 = vmatpush1.bf16.msra.mxu0 %v1998
  %2788 = vmatprep.subr.bf16.mxu0 0
  %2789 = vmatpush1.bf16.msra.mxu0 0
  %2790 = vmatprep.subr.bf16.mxu0 0
  %2791 = vmatpush1.bf16.msra.mxu0 0
  %2792 = vmatprep.subr.bf16.mxu0 0
  %2793 = vmatpush1.bf16.msra.mxu0 0
  %2794 = vmatprep.subr.bf16.mxu0 0
  %2795 = vmatpush1.bf16.msra.mxu0 0
  %2796 = vmatprep.subr.bf16.mxu0 0
  %2797 = vmatpush1.bf16.msra.mxu0 0
  %2798 = vmatprep.subr.bf16.mxu0 0
  %2799 = vmatpush1.bf16.msra.mxu0 0
  %2800 = vmatprep.subr.bf16.mxu0 0
  %2801 = vmatpush1.bf16.msra.mxu0 0
  %2802 = vmatprep.subr.bf16.mxu0 0
  %2803 = vmatpush1.bf16.msra.mxu0 0
  %2804 = vmatprep.subr.bf16.mxu0 0
  %2805 = vmatpush1.bf16.msra.mxu0 0
  %2806 = vmatprep.subr.bf16.mxu0 0
  %2807 = vmatpush1.bf16.msra.mxu0 0
  %2808 = vmatprep.subr.bf16.mxu0 0
  %2809 = vmatpush1.bf16.msra.mxu0 0
  %2810 = vmatprep.subr.bf16.mxu0 0
  %2811 = vmatpush1.bf16.msra.mxu0 0
  %2812 = vmatprep.subr.bf16.mxu0 0
  %2813 = vmatpush1.bf16.msra.mxu0 0
  %2814 = vmatprep.subr.bf16.mxu0 0
  %2815 = vmatpush1.bf16.msra.mxu0 0
  %2816 = vmatprep.mubr.bf16.mxu0 0
  %2817 = vmatmul.mubr.bf16.gmra.mrb[0].mxu0 %v2782
  %v2818 = vpop.f32.mrb[0].mxu0
  %v2819 = vadd.f32 0.0, %v2818
  %v2820 = vpop.f32.mrb[0].mxu0
  %v2821 = vpop.f32.mrb[0].mxu0
  %v2822 = vpop.f32.mrb[0].mxu0
  %2823 = vdwg.mxu0
  %v2824 = vadd.f32 %v2776, %v2819
  %v2825 = vxor.u32 %v2824, 2147483648
  %v2826 = vmul.f32 %v2825, 1.442695
  %v2827 = vpow.pop %v2826
  %v2828 = vadd.f32 %v2827, 1.0
  %v2829 = vrcp.pop %v2828
  %v2830 = vmul.f32 1.0, %v2829
  %v2831 = vadd.f32 %v2819, %v2049
  %2833 = vrot.lane.b32.xlu0 %v2831, 64
  %v2834 = vpop.permute.xlu0 %2833
  %v2836 = vmul.f32 %v2830, %v2834
  %2838 = vrot.lane.b32.xlu0 %v2836, 64
  %v2839 = vpop.permute.xlu0 %2838
  %v2841 = vadd.f32 %v2776, %v2839
  %v2842 = vtanh.pop %v2841
  %v2843 = vsub.f32 1.0, %v2830
  %2845 = vrot.lane.b32.xlu0 %v2842, 96
  %v2846 = vpop.permute.xlu0 %2845
  %v2848 = vmul.f32 %v2843, %v2846
  %v2849 = vmul.f32 %v2830, %v2694
  %v2850 = vadd.f32 %v2848, %v2849
  %2852 = vrot.lane.b32.xlu0 %v2775, 96
  %v2853 = vpop.permute.xlu0 %2852
  %2855 = vst.msk [vmem:[#allocation4 + $0x28] sm:$0xff] %vm356, %v2853
  %2856 = vst.msk [vmem:[#allocation4 + $0x10] sm:$0xff] %vm518, %v2850
  %v2857 = vld [vmem:[#allocation2 + $0x30] sm:$0xff]
  %v2858 = vpack.c.bf16 %v2775, %v2775
  %2860 = vrot.lane.b32.xlu0 %v2858, 96
  %v2861 = vpop.permute.xlu0 %2860
  %v2863 = vsel %vm356, %v2861, 0
  %2865 = vmatprep.subr.bf16.mxu0 0
  %2866 = vmatpush1.bf16.msra.mxu0 %v1914
  %2867 = vmatprep.subr.bf16.mxu0 0
  %2868 = vmatpush1.bf16.msra.mxu0 %v1915
  %2869 = vmatprep.subr.bf16.mxu0 0
  %2870 = vmatpush1.bf16.msra.mxu0 0
  %2871 = vmatprep.subr.bf16.mxu0 0
  %2872 = vmatpush1.bf16.msra.mxu0 0
  %2873 = vmatprep.subr.bf16.mxu0 0
  %2874 = vmatpush1.bf16.msra.mxu0 0
  %2875 = vmatprep.subr.bf16.mxu0 0
  %2876 = vmatpush1.bf16.msra.mxu0 0
  %2877 = vmatprep.subr.bf16.mxu0 0
  %2878 = vmatpush1.bf16.msra.mxu0 0
  %2879 = vmatprep.subr.bf16.mxu0 0
  %2880 = vmatpush1.bf16.msra.mxu0 0
  %2881 = vmatprep.subr.bf16.mxu0 0
  %2882 = vmatpush1.bf16.msra.mxu0 0
  %2883 = vmatprep.subr.bf16.mxu0 0
  %2884 = vmatpush1.bf16.msra.mxu0 0
  %2885 = vmatprep.subr.bf16.mxu0 0
  %2886 = vmatpush1.bf16.msra.mxu0 0
  %2887 = vmatprep.subr.bf16.mxu0 0
  %2888 = vmatpush1.bf16.msra.mxu0 0
  %2889 = vmatprep.subr.bf16.mxu0 0
  %2890 = vmatpush1.bf16.msra.mxu0 0
  %2891 = vmatprep.subr.bf16.mxu0 0
  %2892 = vmatpush1.bf16.msra.mxu0 0
  %2893 = vmatprep.subr.bf16.mxu0 0
  %2894 = vmatpush1.bf16.msra.mxu0 0
  %2895 = vmatprep.subr.bf16.mxu0 0
  %2896 = vmatpush1.bf16.msra.mxu0 0
  %2897 = vmatprep.mubr.bf16.mxu0 0
  %2898 = vmatmul.mubr.bf16.gmra.mrb[0].mxu0 %v2863
  %v2899 = vpop.f32.mrb[0].mxu0
  %v2900 = vadd.f32 0.0, %v2899
  %v2901 = vpop.f32.mrb[0].mxu0
  %v2902 = vpop.f32.mrb[0].mxu0
  %v2903 = vpop.f32.mrb[0].mxu0
  %2904 = vdwg.mxu0
  %v2905 = vadd.f32 %v2857, %v2900
  %v2906 = vxor.u32 %v2905, 2147483648
  %v2907 = vmul.f32 %v2906, 1.442695
  %v2908 = vpow.pop %v2907
  %v2909 = vadd.f32 %v2908, 1.0
  %v2910 = vrcp.pop %v2909
  %v2911 = vmul.f32 1.0, %v2910
  %v2912 = vadd.f32 %v2900, %v1966
  %2914 = vrot.lane.b32.xlu0 %v2912, 64
  %v2915 = vpop.permute.xlu0 %2914
  %v2917 = vmul.f32 %v2911, %v2915
  %2919 = vrot.lane.b32.xlu0 %v2917, 64
  %v2920 = vpop.permute.xlu0 %2919
  %v2922 = vadd.f32 %v2857, %v2920
  %v2923 = vtanh.pop %v2922
  %v2924 = vsub.f32 1.0, %v2911
  %2926 = vrot.lane.b32.xlu0 %v2923, 96
  %v2927 = vpop.permute.xlu0 %2926
  %v2929 = vmul.f32 %v2924, %v2927
  %v2930 = vmul.f32 %v2911, %v2775
  %v2931 = vadd.f32 %v2929, %v2930
  %v2932 = vld [vmem:[#allocation3 + $0x8] sm:$0xff]
  %v2933 = vpack.c.bf16 %v2850, %v2850
  %2935 = vrot.lane.b32.xlu0 %v2933, 96
  %v2936 = vpop.permute.xlu0 %2935
  %v2938 = vsel %vm356, %v2936, 0
  %2940 = vmatprep.subr.bf16.mxu0 0
  %2941 = vmatpush1.bf16.msra.mxu0 %v1997
  %2942 = vmatprep.subr.bf16.mxu0 0
  %2943 = vmatpush1.bf16.msra.mxu0 %v1998
  %2944 = vmatprep.subr.bf16.mxu0 0
  %2945 = vmatpush1.bf16.msra.mxu0 0
  %2946 = vmatprep.subr.bf16.mxu0 0
  %2947 = vmatpush1.bf16.msra.mxu0 0
  %2948 = vmatprep.subr.bf16.mxu0 0
  %2949 = vmatpush1.bf16.msra.mxu0 0
  %2950 = vmatprep.subr.bf16.mxu0 0
  %2951 = vmatpush1.bf16.msra.mxu0 0
  %2952 = vmatprep.subr.bf16.mxu0 0
  %2953 = vmatpush1.bf16.msra.mxu0 0
  %2954 = vmatprep.subr.bf16.mxu0 0
  %2955 = vmatpush1.bf16.msra.mxu0 0
  %2956 = vmatprep.subr.bf16.mxu0 0
  %2957 = vmatpush1.bf16.msra.mxu0 0
  %2958 = vmatprep.subr.bf16.mxu0 0
  %2959 = vmatpush1.bf16.msra.mxu0 0
  %2960 = vmatprep.subr.bf16.mxu0 0
  %2961 = vmatpush1.bf16.msra.mxu0 0
  %2962 = vmatprep.subr.bf16.mxu0 0
  %2963 = vmatpush1.bf16.msra.mxu0 0
  %2964 = vmatprep.subr.bf16.mxu0 0
  %2965 = vmatpush1.bf16.msra.mxu0 0
  %2966 = vmatprep.subr.bf16.mxu0 0
  %2967 = vmatpush1.bf16.msra.mxu0 0
  %2968 = vmatprep.subr.bf16.mxu0 0
  %2969 = vmatpush1.bf16.msra.mxu0 0
  %2970 = vmatprep.subr.bf16.mxu0 0
  %2971 = vmatpush1.bf16.msra.mxu0 0
  %2972 = vmatprep.mubr.bf16.mxu0 0
  %2973 = vmatmul.mubr.bf16.gmra.mrb[0].mxu0 %v2938
  %v2974 = vpop.f32.mrb[0].mxu0
  %v2975 = vadd.f32 0.0, %v2974
  %v2976 = vpop.f32.mrb[0].mxu0
  %v2977 = vpop.f32.mrb[0].mxu0
  %v2978 = vpop.f32.mrb[0].mxu0
  %2979 = vdwg.mxu0
  %v2980 = vadd.f32 %v2932, %v2975
  %v2981 = vxor.u32 %v2980, 2147483648
  %v2982 = vmul.f32 %v2981, 1.442695
  %v2983 = vpow.pop %v2982
  %v2984 = vadd.f32 %v2983, 1.0
  %v2985 = vrcp.pop %v2984
  %v2986 = vmul.f32 1.0, %v2985
  %v2987 = vadd.f32 %v2975, %v2049
  %2989 = vrot.lane.b32.xlu0 %v2987, 64
  %v2990 = vpop.permute.xlu0 %2989
  %v2992 = vmul.f32 %v2986, %v2990
  %2994 = vrot.lane.b32.xlu0 %v2992, 64
  %v2995 = vpop.permute.xlu0 %2994
  %v2997 = vadd.f32 %v2932, %v2995
  %v2998 = vtanh.pop %v2997
  %v2999 = vsub.f32 1.0, %v2986
  %3001 = vrot.lane.b32.xlu0 %v2998, 96
  %v3002 = vpop.permute.xlu0 %3001
  %v3004 = vmul.f32 %v2999, %v3002
  %v3005 = vmul.f32 %v2986, %v2850
  %v3006 = vadd.f32 %v3004, %v3005
  %3008 = vrot.lane.b32.xlu0 %v2931, 96
  %v3009 = vpop.permute.xlu0 %3008
  %3011 = vst.msk [vmem:[#allocation4 + $0x30] sm:$0xff] %vm356, %v3009
  %3012 = vst.msk [vmem:[#allocation4 + $0x8] sm:$0xff] %vm518, %v3006
  %v3013 = vld [vmem:[#allocation2 + $0x38] sm:$0xff]
  %v3014 = vpack.c.bf16 %v2931, %v2931
  %3016 = vrot.lane.b32.xlu0 %v3014, 96
  %v3017 = vpop.permute.xlu0 %3016
  %v3019 = vsel %vm356, %v3017, 0
  %3021 = vmatprep.subr.bf16.mxu0 0
  %3022 = vmatpush1.bf16.msra.mxu0 %v1914
  %3023 = vmatprep.subr.bf16.mxu0 0
  %3024 = vmatpush1.bf16.msra.mxu0 %v1915
  %3025 = vmatprep.subr.bf16.mxu0 0
  %3026 = vmatpush1.bf16.msra.mxu0 0
  %3027 = vmatprep.subr.bf16.mxu0 0
  %3028 = vmatpush1.bf16.msra.mxu0 0
  %3029 = vmatprep.subr.bf16.mxu0 0
  %3030 = vmatpush1.bf16.msra.mxu0 0
  %3031 = vmatprep.subr.bf16.mxu0 0
  %3032 = vmatpush1.bf16.msra.mxu0 0
  %3033 = vmatprep.subr.bf16.mxu0 0
  %3034 = vmatpush1.bf16.msra.mxu0 0
  %3035 = vmatprep.subr.bf16.mxu0 0
  %3036 = vmatpush1.bf16.msra.mxu0 0
  %3037 = vmatprep.subr.bf16.mxu0 0
  %3038 = vmatpush1.bf16.msra.mxu0 0
  %3039 = vmatprep.subr.bf16.mxu0 0
  %3040 = vmatpush1.bf16.msra.mxu0 0
  %3041 = vmatprep.subr.bf16.mxu0 0
  %3042 = vmatpush1.bf16.msra.mxu0 0
  %3043 = vmatprep.subr.bf16.mxu0 0
  %3044 = vmatpush1.bf16.msra.mxu0 0
  %3045 = vmatprep.subr.bf16.mxu0 0
  %3046 = vmatpush1.bf16.msra.mxu0 0
  %3047 = vmatprep.subr.bf16.mxu0 0
  %3048 = vmatpush1.bf16.msra.mxu0 0
  %3049 = vmatprep.subr.bf16.mxu0 0
  %3050 = vmatpush1.bf16.msra.mxu0 0
  %3051 = vmatprep.subr.bf16.mxu0 0
  %3052 = vmatpush1.bf16.msra.mxu0 0
  %3053 = vmatprep.mubr.bf16.mxu0 0
  %3054 = vmatmul.mubr.bf16.gmra.mrb[0].mxu0 %v3019
  %v3055 = vpop.f32.mrb[0].mxu0
  %v3056 = vadd.f32 0.0, %v3055
  %v3057 = vpop.f32.mrb[0].mxu0
  %v3058 = vpop.f32.mrb[0].mxu0
  %v3059 = vpop.f32.mrb[0].mxu0
  %3060 = vdwg.mxu0
  %v3061 = vadd.f32 %v3013, %v3056
  %v3062 = vxor.u32 %v3061, 2147483648
  %v3063 = vmul.f32 %v3062, 1.442695
  %v3064 = vpow.pop %v3063
  %v3065 = vadd.f32 %v3064, 1.0
  %v3066 = vrcp.pop %v3065
  %v3067 = vmul.f32 1.0, %v3066
  %v3068 = vadd.f32 %v3056, %v1966
  %3070 = vrot.lane.b32.xlu0 %v3068, 64
  %v3071 = vpop.permute.xlu0 %3070
  %v3073 = vmul.f32 %v3067, %v3071
  %3075 = vrot.lane.b32.xlu0 %v3073, 64
  %v3076 = vpop.permute.xlu0 %3075
  %v3078 = vadd.f32 %v3013, %v3076
  %v3079 = vtanh.pop %v3078
  %v3080 = vsub.f32 1.0, %v3067
  %3082 = vrot.lane.b32.xlu0 %v3079, 96
  %v3083 = vpop.permute.xlu0 %3082
  %v3085 = vmul.f32 %v3080, %v3083
  %v3086 = vmul.f32 %v3067, %v2931
  %v3087 = vadd.f32 %v3085, %v3086
  %v3088 = vld [vmem:[#allocation3] sm:$0xff]
  %v3089 = vpack.c.bf16 %v3006, %v3006
  %3091 = vrot.lane.b32.xlu0 %v3089, 96
  %v3092 = vpop.permute.xlu0 %3091
  %v3094 = vsel %vm356, %v3092, 0
  %3096 = vmatprep.subr.bf16.mxu0 0
  %3097 = vmatpush1.bf16.msra.mxu0 %v1997
  %3098 = vmatprep.subr.bf16.mxu0 0
  %3099 = vmatpush1.bf16.msra.mxu0 %v1998
  %3100 = vmatprep.subr.bf16.mxu0 0
  %3101 = vmatpush1.bf16.msra.mxu0 0
  %3102 = vmatprep.subr.bf16.mxu0 0
  %3103 = vmatpush1.bf16.msra.mxu0 0
  %3104 = vmatprep.subr.bf16.mxu0 0
  %3105 = vmatpush1.bf16.msra.mxu0 0
  %3106 = vmatprep.subr.bf16.mxu0 0
  %3107 = vmatpush1.bf16.msra.mxu0 0
  %3108 = vmatprep.subr.bf16.mxu0 0
  %3109 = vmatpush1.bf16.msra.mxu0 0
  %3110 = vmatprep.subr.bf16.mxu0 0
  %3111 = vmatpush1.bf16.msra.mxu0 0
  %3112 = vmatprep.subr.bf16.mxu0 0
  %3113 = vmatpush1.bf16.msra.mxu0 0
  %3114 = vmatprep.subr.bf16.mxu0 0
  %3115 = vmatpush1.bf16.msra.mxu0 0
  %3116 = vmatprep.subr.bf16.mxu0 0
  %3117 = vmatpush1.bf16.msra.mxu0 0
  %3118 = vmatprep.subr.bf16.mxu0 0
  %3119 = vmatpush1.bf16.msra.mxu0 0
  %3120 = vmatprep.subr.bf16.mxu0 0
  %3121 = vmatpush1.bf16.msra.mxu0 0
  %3122 = vmatprep.subr.bf16.mxu0 0
  %3123 = vmatpush1.bf16.msra.mxu0 0
  %3124 = vmatprep.subr.bf16.mxu0 0
  %3125 = vmatpush1.bf16.msra.mxu0 0
  %3126 = vmatprep.subr.bf16.mxu0 0
  %3127 = vmatpush1.bf16.msra.mxu0 0
  %3128 = vmatprep.mubr.bf16.mxu0 0
  %3129 = vmatmul.mubr.bf16.gmra.mrb[0].mxu0 %v3094
  %v3130 = vpop.f32.mrb[0].mxu0
  %v3131 = vadd.f32 0.0, %v3130
  %v3132 = vpop.f32.mrb[0].mxu0
  %v3133 = vpop.f32.mrb[0].mxu0
  %v3134 = vpop.f32.mrb[0].mxu0
  %3135 = vdwg.mxu0
  %v3136 = vadd.f32 %v3088, %v3131
  %v3137 = vxor.u32 %v3136, 2147483648
  %v3138 = vmul.f32 %v3137, 1.442695
  %v3139 = vpow.pop %v3138
  %v3140 = vadd.f32 %v3139, 1.0
  %v3141 = vrcp.pop %v3140
  %v3142 = vmul.f32 1.0, %v3141
  %v3143 = vadd.f32 %v3131, %v2049
  %3145 = vrot.lane.b32.xlu0 %v3143, 64
  %v3146 = vpop.permute.xlu0 %3145
  %v3148 = vmul.f32 %v3142, %v3146
  %3150 = vrot.lane.b32.xlu0 %v3148, 64
  %v3151 = vpop.permute.xlu0 %3150
  %v3153 = vadd.f32 %v3088, %v3151
  %v3154 = vtanh.pop %v3153
  %v3155 = vsub.f32 1.0, %v3142
  %3157 = vrot.lane.b32.xlu0 %v3154, 96
  %v3158 = vpop.permute.xlu0 %3157
  %v3160 = vmul.f32 %v3155, %v3158
  %v3161 = vmul.f32 %v3142, %v3006
  %v3162 = vadd.f32 %v3160, %v3161
  %3164 = vrot.lane.b32.xlu0 %v3087, 96
  %v3165 = vpop.permute.xlu0 %3164
  %3167 = vst.msk [vmem:[#allocation4 + $0x38] sm:$0xff] %vm356, %v3165
  %3168 = vst.msk [vmem:[#allocation4] sm:$0xff] %vm518, %v3162
  %v3169 = vld [vmem:[#allocation4] sm:$0xff]
  %v3170 = vld [vmem:[#allocation4 + $0x8] sm:$0xff]
  %v3171 = vld [vmem:[#allocation4 + $0x10] sm:$0xff]
  %v3172 = vld [vmem:[#allocation4 + $0x18] sm:$0xff]
  %v3173 = vld [vmem:[#allocation4 + $0x20] sm:$0xff]
  %v3174 = vld [vmem:[#allocation4 + $0x28] sm:$0xff]
  %v3175 = vld [vmem:[#allocation4 + $0x30] sm:$0xff]
  %v3176 = vld [vmem:[#allocation4 + $0x38] sm:$0xff]
  %v3177 = vpack.c.bf16 %v3170, %v3169
  %v3178 = vpack.c.bf16 %v3172, %v3171
  %v3179 = vpack.c.bf16 %v3174, %v3173
  %v3180 = vpack.c.bf16 %v3176, %v3175
  %v3181 = vld [vmem:[%s17] sm:$0xf]
  %v3182 = vld [vmem:[%s17 + $0x4] sm:$0xf]
  %v3183 = vld [vmem:[%s17 + $0x8] sm:$0xf]
  %v3184 = vld [vmem:[%s17 + $0xc] sm:$0xf]
  %v3185 = vld [vmem:[%s17 + $0x10] sm:$0xf]
  %v3186 = vld [vmem:[%s17 + $0x14] sm:$0xf]
  %v3187 = vld [vmem:[%s17 + $0x18] sm:$0xf]
  %v3188 = vld [vmem:[%s17 + $0x1c] sm:$0xf]
  %v3189 = vld [vmem:[%s18] sm:$0x1]
  %v3191 = vlaneseq
  %v3192 = vshrl.u32 %v3191, 7
  %v3193 = vsub.s32 0, %v3192
  %v3194 = vrot.slane %v3189, %v3193
  %v3204 = vunpack.c.l.b16 %v3181
  %v3205 = vunpack.c.l.b16 %v3182
  %v3206 = vunpack.c.l.b16 %v3183
  %v3207 = vunpack.c.l.b16 %v3184
  %v3208 = vunpack.c.l.b16 %v3185
  %v3209 = vunpack.c.l.b16 %v3186
  %v3210 = vunpack.c.l.b16 %v3187
  %v3211 = vunpack.c.l.b16 %v3188
  %v3212 = vpack.c.b16 %v3205, %v3204
  %v3213 = vpack.c.b16 %v3207, %v3206
  %v3214 = vpack.c.b16 %v3209, %v3208
  %v3215 = vpack.c.b16 %v3211, %v3210
  %v3221 = vsel %vm1663, %v3177, 0
  %v3224 = vsel %vm1663, %v3178, 0
  %v3227 = vsel %vm1663, %v3179, 0
  %v3230 = vsel %vm1663, %v3180, 0
  %3232 = vmatprep.subr.bf16.mxu0 0
  %3233 = vmatpush1.bf16.msra.mxu0 %v3212
  %3234 = vmatprep.subr.bf16.mxu0 0
  %3235 = vmatpush1.bf16.msra.mxu0 %v3213
  %3236 = vmatprep.subr.bf16.mxu0 0
  %3237 = vmatpush1.bf16.msra.mxu0 %v3214
  %3238 = vmatprep.subr.bf16.mxu0 0
  %3239 = vmatpush1.bf16.msra.mxu0 %v3215
  %3240 = vmatprep.subr.bf16.mxu0 0
  %3241 = vmatpush1.bf16.msra.mxu0 0
  %3242 = vmatprep.subr.bf16.mxu0 0
  %3243 = vmatpush1.bf16.msra.mxu0 0
  %3244 = vmatprep.subr.bf16.mxu0 0
  %3245 = vmatpush1.bf16.msra.mxu0 0
  %3246 = vmatprep.subr.bf16.mxu0 0
  %3247 = vmatpush1.bf16.msra.mxu0 0
  %3248 = vmatprep.subr.bf16.mxu0 0
  %3249 = vmatpush1.bf16.msra.mxu0 0
  %3250 = vmatprep.subr.bf16.mxu0 0
  %3251 = vmatpush1.bf16.msra.mxu0 0
  %3252 = vmatprep.subr.bf16.mxu0 0
  %3253 = vmatpush1.bf16.msra.mxu0 0
  %3254 = vmatprep.subr.bf16.mxu0 0
  %3255 = vmatpush1.bf16.msra.mxu0 0
  %3256 = vmatprep.subr.bf16.mxu0 0
  %3257 = vmatpush1.bf16.msra.mxu0 0
  %3258 = vmatprep.subr.bf16.mxu0 0
  %3259 = vmatpush1.bf16.msra.mxu0 0
  %3260 = vmatprep.subr.bf16.mxu0 0
  %3261 = vmatpush1.bf16.msra.mxu0 0
  %3262 = vmatprep.subr.bf16.mxu0 0
  %3263 = vmatpush1.bf16.msra.mxu0 0
  %3264 = vmatprep.mubr.bf16.mxu0 0
  %3265 = vmatmul.mubr.bf16.gmra.mrb[0].mxu0 %v3221
  %v3266 = vpop.f32.mrb[0].mxu0
  %v3267 = vadd.f32 %v3194, %v3266
  %v3268 = vpop.f32.mrb[0].mxu0
  %v3269 = vpop.f32.mrb[0].mxu0
  %v3270 = vadd.f32 %v3194, %v3269
  %v3271 = vpop.f32.mrb[0].mxu0
  %3272 = vmatprep.mubr.bf16.mxu0 0
  %3273 = vmatmul.mubr.bf16.gmra.mrb[0].mxu0 %v3224
  %v3274 = vpop.f32.mrb[0].mxu0
  %v3275 = vadd.f32 %v3194, %v3274
  %v3276 = vpop.f32.mrb[0].mxu0
  %v3277 = vpop.f32.mrb[0].mxu0
  %v3278 = vadd.f32 %v3194, %v3277
  %v3279 = vpop.f32.mrb[0].mxu0
  %3280 = vmatprep.mubr.bf16.mxu0 0
  %3281 = vmatmul.mubr.bf16.gmra.mrb[0].mxu0 %v3227
  %v3282 = vpop.f32.mrb[0].mxu0
  %v3283 = vadd.f32 %v3194, %v3282
  %v3284 = vpop.f32.mrb[0].mxu0
  %v3285 = vpop.f32.mrb[0].mxu0
  %v3286 = vadd.f32 %v3194, %v3285
  %v3287 = vpop.f32.mrb[0].mxu0
  %3288 = vmatprep.mubr.bf16.mxu0 0
  %3289 = vmatmul.mubr.bf16.gmra.mrb[0].mxu0 %v3230
  %v3290 = vpop.f32.mrb[0].mxu0
  %v3291 = vadd.f32 %v3194, %v3290
  %v3292 = vpop.f32.mrb[0].mxu0
  %v3293 = vpop.f32.mrb[0].mxu0
  %v3294 = vadd.f32 %v3194, %v3293
  %v3295 = vpop.f32.mrb[0].mxu0
  %3296 = vdwg.mxu0
  %v3297 = vpack.c.bf16 %v3270, %v3267
  %v3298 = vpack.c.bf16 %v3278, %v3275
  %v3299 = vpack.c.bf16 %v3286, %v3283
  %v3300 = vpack.c.bf16 %v3294, %v3291
  %v3301 = vld [vmem:[%s19] sm:$0xf]
  %v3302 = vld [vmem:[%s19 + $0x4] sm:$0xf]
  %v3303 = vld [vmem:[%s19 + $0x8] sm:$0xf]
  %v3304 = vld [vmem:[%s19 + $0xc] sm:$0xf]
  %v3305 = vld [vmem:[%s20] sm:$0x1]
  %v3307 = vlaneseq
  %v3308 = vshrl.u32 %v3307, 7
  %v3309 = vsub.s32 0, %v3308
  %v3310 = vrot.slane %v3305, %v3309
  %v3316 = vunpack.c.l.b16 %v3301
  %v3317 = vunpack.c.l.b16 %v3302
  %v3318 = vunpack.c.l.b16 %v3303
  %v3319 = vunpack.c.l.b16 %v3304
  %v3320 = vpack.c.b16 %v3317, %v3316
  %v3321 = vpack.c.b16 %v3319, %v3318
  %v3325 = vsel %vm356, %v3297, 0
  %v3328 = vsel %vm356, %v3298, 0
  %v3331 = vsel %vm356, %v3299, 0
  %v3334 = vsel %vm356, %v3300, 0
  %3336 = vmatprep.subr.bf16.mxu0 0
  %3337 = vmatpush1.bf16.msra.mxu0 %v3320
  %3338 = vmatprep.subr.bf16.mxu0 0
  %3339 = vmatpush1.bf16.msra.mxu0 %v3321
  %3340 = vmatprep.subr.bf16.mxu0 0
  %3341 = vmatpush1.bf16.msra.mxu0 0
  %3342 = vmatprep.subr.bf16.mxu0 0
  %3343 = vmatpush1.bf16.msra.mxu0 0
  %3344 = vmatprep.subr.bf16.mxu0 0
  %3345 = vmatpush1.bf16.msra.mxu0 0
  %3346 = vmatprep.subr.bf16.mxu0 0
  %3347 = vmatpush1.bf16.msra.mxu0 0
  %3348 = vmatprep.subr.bf16.mxu0 0
  %3349 = vmatpush1.bf16.msra.mxu0 0
  %3350 = vmatprep.subr.bf16.mxu0 0
  %3351 = vmatpush1.bf16.msra.mxu0 0
  %3352 = vmatprep.subr.bf16.mxu0 0
  %3353 = vmatpush1.bf16.msra.mxu0 0
  %3354 = vmatprep.subr.bf16.mxu0 0
  %3355 = vmatpush1.bf16.msra.mxu0 0
  %3356 = vmatprep.subr.bf16.mxu0 0
  %3357 = vmatpush1.bf16.msra.mxu0 0
  %3358 = vmatprep.subr.bf16.mxu0 0
  %3359 = vmatpush1.bf16.msra.mxu0 0
  %3360 = vmatprep.subr.bf16.mxu0 0
  %3361 = vmatpush1.bf16.msra.mxu0 0
  %3362 = vmatprep.subr.bf16.mxu0 0
  %3363 = vmatpush1.bf16.msra.mxu0 0
  %3364 = vmatprep.subr.bf16.mxu0 0
  %3365 = vmatpush1.bf16.msra.mxu0 0
  %3366 = vmatprep.subr.bf16.mxu0 0
  %3367 = vmatpush1.bf16.msra.mxu0 0
  %3368 = vmatprep.mubr.bf16.mxu0 0
  %3369 = vmatmul.mubr.bf16.gmra.mrb[0].mxu0 %v3325
  %v3370 = vpop.f32.mrb[0].mxu0
  %v3371 = vadd.f32 %v3310, %v3370
  %v3372 = vpop.f32.mrb[0].mxu0
  %v3373 = vpop.f32.mrb[0].mxu0
  %v3374 = vadd.f32 %v3310, %v3373
  %v3375 = vpop.f32.mrb[0].mxu0
  %3376 = vmatprep.mubr.bf16.mxu0 0
  %3377 = vmatmul.mubr.bf16.gmra.mrb[0].mxu0 %v3328
  %v3378 = vpop.f32.mrb[0].mxu0
  %v3379 = vadd.f32 %v3310, %v3378
  %v3380 = vpop.f32.mrb[0].mxu0
  %v3381 = vpop.f32.mrb[0].mxu0
  %v3382 = vadd.f32 %v3310, %v3381
  %v3383 = vpop.f32.mrb[0].mxu0
  %3384 = vmatprep.mubr.bf16.mxu0 0
  %3385 = vmatmul.mubr.bf16.gmra.mrb[0].mxu0 %v3331
  %v3386 = vpop.f32.mrb[0].mxu0
  %v3387 = vadd.f32 %v3310, %v3386
  %v3388 = vpop.f32.mrb[0].mxu0
  %v3389 = vpop.f32.mrb[0].mxu0
  %v3390 = vadd.f32 %v3310, %v3389
  %v3391 = vpop.f32.mrb[0].mxu0
  %3392 = vmatprep.mubr.bf16.mxu0 0
  %3393 = vmatmul.mubr.bf16.gmra.mrb[0].mxu0 %v3334
  %v3394 = vpop.f32.mrb[0].mxu0
  %v3395 = vadd.f32 %v3310, %v3394
  %v3396 = vpop.f32.mrb[0].mxu0
  %v3397 = vpop.f32.mrb[0].mxu0
  %v3398 = vadd.f32 %v3310, %v3397
  %v3399 = vpop.f32.mrb[0].mxu0
  %3400 = vdwg.mxu0
  %3401 = vst [vmem:[%s21] sm:$0xff] %v3371
  %3402 = vst [vmem:[%s21 + $0x8] sm:$0xff] %v3374
  %3403 = vst [vmem:[%s21 + $0x10] sm:$0xff] %v3379
  %3404 = vst [vmem:[%s21 + $0x18] sm:$0xff] %v3382
  %3405 = vst [vmem:[%s21 + $0x20] sm:$0xff] %v3387
  %3406 = vst [vmem:[%s21 + $0x28] sm:$0xff] %v3390
  %3407 = vst [vmem:[%s21 + $0x30] sm:$0xff] %v3395
  %3408 = vst [vmem:[%s21 + $0x38] sm:$0xff] %v3398
  // Predicated region
  $region86: #{birnn_denoiser_forward.1} parent=0 // pred_check
    _
  $region87: #{birnn_denoiser_forward.1} parent=0 // pred_check_branch
    %3410 = sbr.rel (0) target = $region89
  $region88: #{birnn_denoiser_forward.1} parent=0 // pred_region
    _
  $region89: #{birnn_denoiser_forward.1} parent=0 // pred_fallthru
    _
  // Predicated region
  $region90: #{birnn_denoiser_forward.1} parent=0 // pred_check
    _
  $region91: #{birnn_denoiser_forward.1} parent=0 // pred_check_branch
    %3412 = sbr.rel (0) target = $region93
  $region92: #{birnn_denoiser_forward.1} parent=0 // pred_region
    _
  $region93: #{birnn_denoiser_forward.1} parent=0 // pred_fallthru
    _

</llo_original>
